<compile_context>
chip_gen: v7x
topology: tpu7x:2x2x1
jax: 0.10.0
libtpu: 0.0.40
codegen_flags: <defaults>
</compile_context>

<pallas_src>
import functools

import numpy as np
import jax
import jax.numpy as jnp
from jax import lax
from jax.experimental import pallas as pl
from jax.experimental.pallas import tpu as pltpu


# Sobel kernels (cross-correlation weights, matching F.conv2d semantics).
_DX = np.outer([1.0, 2.0, 1.0], [-1.0, 0.0, 1.0]) / 8.0   # (3, 3)
_DY = _DX.T


def _conv_matrix(kern, H, W):
    """(HW, HW) matrix M such that flat(y) = flat(x) @ M equals the zero-padded
    3x3 cross-correlation of the HxW image x with `kern` (applied per channel,
    row-major (h, w) flattening)."""
    HW = H * W
    M = np.zeros((HW, HW), np.float32)
    for hi in range(H):
        for wi in range(W):
            i = hi * W + wi
            for di in (-1, 0, 1):
                for dj in (-1, 0, 1):
                    hj, wj = hi + di, wi + dj
                    if 0 <= hj < H and 0 <= wj < W:
                        M[hj * W + wj, i] += kern[di + 1, dj + 1]
    return M


def _make_nca_kernel(steps, hw):
    """grid = (B,).  The whole step loop runs in-kernel; the cell state lives
    in vregs/VMEM for all `steps` updates of the current image."""

    def kernel(x0_ref, fire_ref, w0x_ref, w0y1_ref, w0y2_ref, b0_ref, w1t_ref,
               m12_ref, out_ref):
        # Loop-invariant operands, loaded once.
        w0x = w0x_ref[...]      # (HID, C)   fc0 columns acting on the identity branch
        w0y1 = w0y1_ref[...]    # (HID, C)   fc0 columns acting on sobel-x(x)
        w0y2 = w0y2_ref[...]    # (HID, C)   fc0 columns acting on sobel-y(x)
        b0 = b0_ref[...]        # (HID, 1)
        w1t = w1t_ref[...]      # (C, HID)   fc1^T with the channel-freeze mask folded in
        m12 = m12_ref[...]      # (HW, 2HW)  [sobel-x | sobel-y] pixel mixing, bf16

        def step(s, x):
            # Perception on the raw C-row state (x: (C, HW), lane axis = pixels):
            # one MXU call yields sobel-x and sobel-y of every channel.
            # Default MXU precision truncates f32 to bf16 anyway, so the bf16
            # cast / bf16 M12 is numerically free vs. the f32 default path.
            p = jnp.dot(x.astype(jnp.bfloat16), m12,
                        preferred_element_type=jnp.float32)            # (C, 2HW)
            # fc0 on [x, sobel_x(x), sobel_y(x)] as three accumulating K=C dots
            # (avoids a sub-8-sublane concatenate), then ReLU.
            h = (jnp.dot(w0x, x, preferred_element_type=jnp.float32)
                 + jnp.dot(w0y1, p[:, :hw], preferred_element_type=jnp.float32)
                 + jnp.dot(w0y2, p[:, hw:], preferred_element_type=jnp.float32)
                 + b0)
            h = jnp.maximum(h, 0.0)                                     # (HID, HW)
            # fc1 (freeze mask already folded into w1t) + stochastic fire mask
            # + residual update.
            d = jnp.dot(w1t, h, preferred_element_type=jnp.float32)     # (C, HW)
            f = fire_ref[pl.ds(s, 1), :]                                # (1, HW)
            return x + d * f

        out_ref[...] = lax.fori_loop(0, steps, step, x0_ref[...], unroll=True)

    return kernel


@functools.partial(jax.jit, static_argnames=("input_channels",))
def basic_nca_forward(x_nchw, params, fire_masks, input_channels):
    """Equivalent of BasicNCA.forward.

    x_nchw:     (B, C, H, W), same layout as the PyTorch module.
    params:     (w0, b0, w1) with w0: (3C, HID), b0: (HID,), w1: (HID, C).
    fire_masks: (steps, B, H, W, 1) float32, == (rand > fire_rate).float().
    """
    B, C, H, W = x_nchw.shape
    HW = H * W
    # Lane-dense layout assumes the pixel count is a multiple of 128.
    assert HW % 128 == 0, "H*W must be a multiple of 128 for this kernel"
    STEPS = int(fire_masks.shape[0])
    w0, b0, w1 = params
    HID = w0.shape[1]

    # fc0 split into its three per-branch channel-mixing pieces (HID, C),
    # column order matching perceive()'s cat([x, sobel_x, sobel_y]).
    w0x = w0[:C].T.astype(jnp.float32)
    w0y1 = w0[C:2 * C].T.astype(jnp.float32)
    w0y2 = w0[2 * C:].T.astype(jnp.float32)
    b0c = b0.reshape(HID, 1).astype(jnp.float32)

    # Freeze the first `input_channels` channels by zeroing their fc1 rows
    # (h @ (w1 * m) == (h @ w1) * m): frozen channels receive exactly zero
    # delta, which is equivalent to the reference's post-update channel
    # re-concatenation.
    if 0 < input_channels < C:
        cmask = (jnp.arange(C) >= input_channels).astype(jnp.float32)
    else:
        cmask = jnp.ones((C,), jnp.float32)
    w1t = w1.T.astype(jnp.float32) * cmask.reshape(C, 1)               # (C, HID)

    # Depthwise 3x3 sobel (zero padding) as one constant (HW, 2HW) pixel-mixing
    # matrix applied to the raw C-row state.  Entries in {0, +-1/8, +-2/8} are
    # exact in bf16.
    m12 = np.concatenate([_conv_matrix(_DX, H, W), _conv_matrix(_DY, H, W)],
                         axis=1)
    m12 = jnp.asarray(m12, jnp.bfloat16)                               # (HW, 2HW)

    # NCHW already gives the (C, pixels) lane-dense layout via a flat reshape.
    x0 = x_nchw.reshape(B, C, HW).astype(jnp.float32)
    # Fire masks: one (STEPS, HW) slab per image, broadcast over C in-kernel.
    fire = (fire_masks.reshape(STEPS, B, HW)
            .transpose(1, 0, 2)
            .astype(jnp.float32))                                      # (B, STEPS, HW)

    out = pl.pallas_call(
        _make_nca_kernel(STEPS, HW),
        out_shape=jax.ShapeDtypeStruct((B, C, HW), jnp.float32),
        grid_spec=pltpu.PrefetchScalarGridSpec(
            num_scalar_prefetch=0,
            grid=(B,),
            in_specs=[
                pl.BlockSpec((None, C, HW), lambda b: (b, 0, 0)),       # x0
                pl.BlockSpec((None, STEPS, HW), lambda b: (b, 0, 0)),   # fire
                pl.BlockSpec((HID, C), lambda b: (0, 0)),               # w0x
                pl.BlockSpec((HID, C), lambda b: (0, 0)),               # w0y1
                pl.BlockSpec((HID, C), lambda b: (0, 0)),               # w0y2
                pl.BlockSpec((HID, 1), lambda b: (0, 0)),               # b0
                pl.BlockSpec((C, HID), lambda b: (0, 0)),               # fc1^T (masked)
                pl.BlockSpec((HW, 2 * HW), lambda b: (0, 0)),           # [M1|M2]
            ],
            out_specs=pl.BlockSpec((None, C, HW), lambda b: (b, 0, 0)),
        ),
        compiler_params=pltpu.CompilerParams(
            dimension_semantics=("parallel",)),
    )(x0, fire, w0x, w0y1, w0y2, b0c, w1t, m12)
    return out.reshape(B, C, H, W)


def reference_forward(x_nchw, params, fire_masks, input_channels):
    """Pure-JAX reference reproducing the PyTorch forward (same fire masks)."""
    B, C, H, W = x_nchw.shape
    w0, b0, w1 = params
    HIGH = jax.lax.Precision.HIGHEST
    dxk = jnp.asarray(_DX, jnp.float32)
    dyk = jnp.asarray(_DY, jnp.float32)

    def dwconv(x_nhwc, k):
        kern = jnp.broadcast_to(k[:, :, None, None], (3, 3, 1, C))
        return lax.conv_general_dilated(
            x_nhwc, kern, window_strides=(1, 1), padding='SAME',
            dimension_numbers=('NHWC', 'HWIO', 'NHWC'),
            feature_group_count=C, precision=HIGH)

    x = jnp.transpose(x_nchw, (0, 2, 3, 1)).astype(jnp.float32)
    for s in range(fire_masks.shape[0]):
        y = jnp.concatenate([x, dwconv(x, dxk), dwconv(x, dyk)], axis=-1)
        h = jnp.maximum(jnp.matmul(y, w0, precision=HIGH) + b0, 0.0)
        d = jnp.matmul(h, w1, precision=HIGH) * fire_masks[s]
        x2 = x + d
        if 0 < input_channels < C:
            x = jnp.concatenate([x[..., :input_channels], x2[..., input_channels:]],
                                axis=-1)
        else:
            x = x2
    return jnp.transpose(x, (0, 3, 1, 2))


if __name__ == "__main__":
    B, C, H, W = 2, 4, 16, 16       # channel_n = 4
    HID = 32                        # hidden_size
    STEPS = 8
    FIRE_RATE = 0.5
    INPUT_CHANNELS = 1

    key = jax.random.PRNGKey(0)
    kx, kw0, kb0, kw1, kf = jax.random.split(key, 5)

    x = jax.random.normal(kx, (B, C, H, W), jnp.float32)

    # TODO(synk): the reference declares fc0 = nn.Linear(channel_n, hidden) yet
    # feeds it the 3*channel_n perception vector; we use in_features = 3*C,
    # the only shape for which the forward pass is well-defined.
    w0 = 0.1 * jax.random.normal(kw0, (3 * C, HID), jnp.float32)
    b0 = 0.01 * jax.random.normal(kb0, (HID,), jnp.float32)
    # fc1 is zero-initialised in the module ('standard' init); small
    # deterministic random values are used so the kernel exercises a
    # non-trivial update.
    w1 = 0.1 * jax.random.normal(kw1, (HID, C), jnp.float32)
    params = (w0, b0, w1)

    # torch.rand([B,H,W,1]) > fire_rate, drawn once per step (deterministic).
    u = jax.random.uniform(kf, (STEPS, B, H, W, 1), dtype=jnp.float32)
    fire_masks = (u > FIRE_RATE).astype(jnp.float32)

    out = jax.block_until_ready(
        basic_nca_forward(x, params, fire_masks, input_channels=INPUT_CHANNELS))
    ref = jax.block_until_ready(
        reference_forward(x, params, fire_masks, INPUT_CHANNELS))

    assert out.shape == (B, C, H, W)
    # Tolerance covers MXU default-precision (bf16-pass) rounding vs. the
    # HIGHEST-precision reference, compounded over STEPS residual updates.
    np.testing.assert_allclose(np.asarray(out), np.asarray(ref),
                               atol=1e-2, rtol=1e-2)
    print("KERNEL_OK")
</pallas_src>

<mosaic_0001>
module attributes {stable_mosaic.version = 11 : i64} {
  func.func @kernel(%arg0: i32, %arg1: memref<1x4x256xf32, #tpu.memory_space<vmem>>, %arg2: memref<1x8x256xf32, #tpu.memory_space<vmem>>, %arg3: memref<32x4xf32, #tpu.memory_space<vmem>>, %arg4: memref<32x4xf32, #tpu.memory_space<vmem>>, %arg5: memref<32x4xf32, #tpu.memory_space<vmem>>, %arg6: memref<32x1xf32, #tpu.memory_space<vmem>>, %arg7: memref<4x32xf32, #tpu.memory_space<vmem>>, %arg8: memref<256x512xbf16, #tpu.memory_space<vmem>>, %arg9: memref<1x4x256xf32, #tpu.memory_space<vmem>>) attributes {dimension_semantics = [#tpu.dimension_semantics<parallel>], iteration_bounds = array<i64: 2>, scalar_prefetch = 0 : i64, scratch_operands = 0 : i64, tpu.core_type = #tpu.core_type<tc>, window_params = [{transform_indices = @transform_0, window_bounds = array<i64: 1, 4, 256>}, {transform_indices = @transform_1, window_bounds = array<i64: 1, 8, 256>}, {pipeline_mode = #tpu.pipeline_mode<synchronous>, transform_indices = @transform_2, window_bounds = array<i64: 32, 4>}, {pipeline_mode = #tpu.pipeline_mode<synchronous>, transform_indices = @transform_3, window_bounds = array<i64: 32, 4>}, {pipeline_mode = #tpu.pipeline_mode<synchronous>, transform_indices = @transform_4, window_bounds = array<i64: 32, 4>}, {pipeline_mode = #tpu.pipeline_mode<synchronous>, transform_indices = @transform_5, window_bounds = array<i64: 32, 1>}, {pipeline_mode = #tpu.pipeline_mode<synchronous>, transform_indices = @transform_6, window_bounds = array<i64: 4, 32>}, {pipeline_mode = #tpu.pipeline_mode<synchronous>, transform_indices = @transform_7, window_bounds = array<i64: 256, 512>}, {transform_indices = @transform_8, window_bounds = array<i64: 1, 4, 256>}]} {
    %c0 = arith.constant 0 : index
    %c0_0 = arith.constant 0 : index
    %0 = vector.load %arg3[%c0, %c0_0] : memref<32x4xf32, #tpu.memory_space<vmem>>, vector<32x4xf32>
    %c0_1 = arith.constant 0 : index
    %c0_2 = arith.constant 0 : index
    %1 = vector.load %arg4[%c0_1, %c0_2] : memref<32x4xf32, #tpu.memory_space<vmem>>, vector<32x4xf32>
    %c0_3 = arith.constant 0 : index
    %c0_4 = arith.constant 0 : index
    %2 = vector.load %arg5[%c0_3, %c0_4] : memref<32x4xf32, #tpu.memory_space<vmem>>, vector<32x4xf32>
    %c0_5 = arith.constant 0 : index
    %c0_6 = arith.constant 0 : index
    %3 = vector.load %arg6[%c0_5, %c0_6] : memref<32x1xf32, #tpu.memory_space<vmem>>, vector<32x1xf32>
    %c0_7 = arith.constant 0 : index
    %c0_8 = arith.constant 0 : index
    %4 = vector.load %arg7[%c0_7, %c0_8] : memref<4x32xf32, #tpu.memory_space<vmem>>, vector<4x32xf32>
    %c0_9 = arith.constant 0 : index
    %c0_10 = arith.constant 0 : index
    %5 = vector.load %arg8[%c0_9, %c0_10] : memref<256x512xbf16, #tpu.memory_space<vmem>>, vector<256x512xbf16>
    %c0_11 = arith.constant 0 : index
    %c0_12 = arith.constant 0 : index
    %c0_13 = arith.constant 0 : index
    %6 = vector.load %arg1[%c0_11, %c0_12, %c0_13] : memref<1x4x256xf32, #tpu.memory_space<vmem>>, vector<1x4x256xf32>
    %7 = vector.shape_cast %6 : vector<1x4x256xf32> to vector<4x256xf32>
    %c0_i32 = arith.constant 0 : i32
    %8 = arith.truncf %7 : vector<4x256xf32> to vector<4x256xbf16>
    %cst = arith.constant dense<0.000000e+00> : vector<4x512xf32>
    %9 = tpu.matmul %8, %5, %cst {dimension_numbers = #tpu.dot_dimension_numbers<[1], [0], [0], [1], [0, 0, 1, 1], [], []>} : vector<4x256xbf16>, vector<256x512xbf16>, vector<4x512xf32> -> vector<4x512xf32>
    %cst_14 = arith.constant dense<0.000000e+00> : vector<32x256xf32>
    %10 = tpu.matmul %0, %7, %cst_14 {dimension_numbers = #tpu.dot_dimension_numbers<[1], [0], [0], [1], [0, 0, 1, 1], [], []>} : vector<32x4xf32>, vector<4x256xf32>, vector<32x256xf32> -> vector<32x256xf32>
    %11 = vector.extract_strided_slice %9 {offsets = [0, 0], sizes = [4, 256], strides = [1, 1]} : vector<4x512xf32> to vector<4x256xf32>
    %cst_15 = arith.constant dense<0.000000e+00> : vector<32x256xf32>
    %12 = tpu.matmul %1, %11, %cst_15 {dimension_numbers = #tpu.dot_dimension_numbers<[1], [0], [0], [1], [0, 0, 1, 1], [], []>} : vector<32x4xf32>, vector<4x256xf32>, vector<32x256xf32> -> vector<32x256xf32>
    %13 = arith.addf %10, %12 : vector<32x256xf32>
    %14 = vector.extract_strided_slice %9 {offsets = [0, 256], sizes = [4, 256], strides = [1, 1]} : vector<4x512xf32> to vector<4x256xf32>
    %cst_16 = arith.constant dense<0.000000e+00> : vector<32x256xf32>
    %15 = tpu.matmul %2, %14, %cst_16 {dimension_numbers = #tpu.dot_dimension_numbers<[1], [0], [0], [1], [0, 0, 1, 1], [], []>} : vector<32x4xf32>, vector<4x256xf32>, vector<32x256xf32> -> vector<32x256xf32>
    %16 = arith.addf %13, %15 : vector<32x256xf32>
    %17 = vector.broadcast %3 : vector<32x1xf32> to vector<32x256xf32>
    %18 = arith.addf %16, %17 : vector<32x256xf32>
    %cst_17 = arith.constant 0.000000e+00 : f32
    %19 = vector.broadcast %cst_17 : f32 to vector<32x256xf32>
    %20 = arith.maximumf %18, %19 : vector<32x256xf32>
    %cst_18 = arith.constant dense<0.000000e+00> : vector<4x256xf32>
    %21 = tpu.matmul %4, %20, %cst_18 {dimension_numbers = #tpu.dot_dimension_numbers<[1], [0], [0], [1], [0, 0, 1, 1], [], []>} : vector<4x32xf32>, vector<32x256xf32>, vector<4x256xf32> -> vector<4x256xf32>
    %c0_19 = arith.constant 0 : index
    %22 = arith.index_cast %c0_i32 : i32 to index
    %c0_20 = arith.constant 0 : index
    %23 = vector.load %arg2[%c0_19, %22, %c0_20] : memref<1x8x256xf32, #tpu.memory_space<vmem>>, vector<1x1x256xf32>
    %24 = vector.shape_cast %23 : vector<1x1x256xf32> to vector<1x256xf32>
    %25 = vector.broadcast %24 : vector<1x256xf32> to vector<4x256xf32>
    %26 = arith.mulf %21, %25 : vector<4x256xf32>
    %27 = arith.addf %7, %26 : vector<4x256xf32>
    %c1_i32 = arith.constant 1 : i32
    %28 = arith.truncf %27 : vector<4x256xf32> to vector<4x256xbf16>
    %cst_21 = arith.constant dense<0.000000e+00> : vector<4x512xf32>
    %29 = tpu.matmul %28, %5, %cst_21 {dimension_numbers = #tpu.dot_dimension_numbers<[1], [0], [0], [1], [0, 0, 1, 1], [], []>} : vector<4x256xbf16>, vector<256x512xbf16>, vector<4x512xf32> -> vector<4x512xf32>
    %cst_22 = arith.constant dense<0.000000e+00> : vector<32x256xf32>
    %30 = tpu.matmul %0, %27, %cst_22 {dimension_numbers = #tpu.dot_dimension_numbers<[1], [0], [0], [1], [0, 0, 1, 1], [], []>} : vector<32x4xf32>, vector<4x256xf32>, vector<32x256xf32> -> vector<32x256xf32>
    %31 = vector.extract_strided_slice %29 {offsets = [0, 0], sizes = [4, 256], strides = [1, 1]} : vector<4x512xf32> to vector<4x256xf32>
    %cst_23 = arith.constant dense<0.000000e+00> : vector<32x256xf32>
    %32 = tpu.matmul %1, %31, %cst_23 {dimension_numbers = #tpu.dot_dimension_numbers<[1], [0], [0], [1], [0, 0, 1, 1], [], []>} : vector<32x4xf32>, vector<4x256xf32>, vector<32x256xf32> -> vector<32x256xf32>
    %33 = arith.addf %30, %32 : vector<32x256xf32>
    %34 = vector.extract_strided_slice %29 {offsets = [0, 256], sizes = [4, 256], strides = [1, 1]} : vector<4x512xf32> to vector<4x256xf32>
    %cst_24 = arith.constant dense<0.000000e+00> : vector<32x256xf32>
    %35 = tpu.matmul %2, %34, %cst_24 {dimension_numbers = #tpu.dot_dimension_numbers<[1], [0], [0], [1], [0, 0, 1, 1], [], []>} : vector<32x4xf32>, vector<4x256xf32>, vector<32x256xf32> -> vector<32x256xf32>
    %36 = arith.addf %33, %35 : vector<32x256xf32>
    %37 = vector.broadcast %3 : vector<32x1xf32> to vector<32x256xf32>
    %38 = arith.addf %36, %37 : vector<32x256xf32>
    %cst_25 = arith.constant 0.000000e+00 : f32
    %39 = vector.broadcast %cst_25 : f32 to vector<32x256xf32>
    %40 = arith.maximumf %38, %39 : vector<32x256xf32>
    %cst_26 = arith.constant dense<0.000000e+00> : vector<4x256xf32>
    %41 = tpu.matmul %4, %40, %cst_26 {dimension_numbers = #tpu.dot_dimension_numbers<[1], [0], [0], [1], [0, 0, 1, 1], [], []>} : vector<4x32xf32>, vector<32x256xf32>, vector<4x256xf32> -> vector<4x256xf32>
    %c0_27 = arith.constant 0 : index
    %42 = arith.index_cast %c1_i32 : i32 to index
    %c0_28 = arith.constant 0 : index
    %43 = vector.load %arg2[%c0_27, %42, %c0_28] : memref<1x8x256xf32, #tpu.memory_space<vmem>>, vector<1x1x256xf32>
    %44 = vector.shape_cast %43 : vector<1x1x256xf32> to vector<1x256xf32>
    %45 = vector.broadcast %44 : vector<1x256xf32> to vector<4x256xf32>
    %46 = arith.mulf %41, %45 : vector<4x256xf32>
    %47 = arith.addf %27, %46 : vector<4x256xf32>
    %c2_i32 = arith.constant 2 : i32
    %48 = arith.truncf %47 : vector<4x256xf32> to vector<4x256xbf16>
    %cst_29 = arith.constant dense<0.000000e+00> : vector<4x512xf32>
    %49 = tpu.matmul %48, %5, %cst_29 {dimension_numbers = #tpu.dot_dimension_numbers<[1], [0], [0], [1], [0, 0, 1, 1], [], []>} : vector<4x256xbf16>, vector<256x512xbf16>, vector<4x512xf32> -> vector<4x512xf32>
    %cst_30 = arith.constant dense<0.000000e+00> : vector<32x256xf32>
    %50 = tpu.matmul %0, %47, %cst_30 {dimension_numbers = #tpu.dot_dimension_numbers<[1], [0], [0], [1], [0, 0, 1, 1], [], []>} : vector<32x4xf32>, vector<4x256xf32>, vector<32x256xf32> -> vector<32x256xf32>
    %51 = vector.extract_strided_slice %49 {offsets = [0, 0], sizes = [4, 256], strides = [1, 1]} : vector<4x512xf32> to vector<4x256xf32>
    %cst_31 = arith.constant dense<0.000000e+00> : vector<32x256xf32>
    %52 = tpu.matmul %1, %51, %cst_31 {dimension_numbers = #tpu.dot_dimension_numbers<[1], [0], [0], [1], [0, 0, 1, 1], [], []>} : vector<32x4xf32>, vector<4x256xf32>, vector<32x256xf32> -> vector<32x256xf32>
    %53 = arith.addf %50, %52 : vector<32x256xf32>
    %54 = vector.extract_strided_slice %49 {offsets = [0, 256], sizes = [4, 256], strides = [1, 1]} : vector<4x512xf32> to vector<4x256xf32>
    %cst_32 = arith.constant dense<0.000000e+00> : vector<32x256xf32>
    %55 = tpu.matmul %2, %54, %cst_32 {dimension_numbers = #tpu.dot_dimension_numbers<[1], [0], [0], [1], [0, 0, 1, 1], [], []>} : vector<32x4xf32>, vector<4x256xf32>, vector<32x256xf32> -> vector<32x256xf32>
    %56 = arith.addf %53, %55 : vector<32x256xf32>
    %57 = vector.broadcast %3 : vector<32x1xf32> to vector<32x256xf32>
    %58 = arith.addf %56, %57 : vector<32x256xf32>
    %cst_33 = arith.constant 0.000000e+00 : f32
    %59 = vector.broadcast %cst_33 : f32 to vector<32x256xf32>
    %60 = arith.maximumf %58, %59 : vector<32x256xf32>
    %cst_34 = arith.constant dense<0.000000e+00> : vector<4x256xf32>
    %61 = tpu.matmul %4, %60, %cst_34 {dimension_numbers = #tpu.dot_dimension_numbers<[1], [0], [0], [1], [0, 0, 1, 1], [], []>} : vector<4x32xf32>, vector<32x256xf32>, vector<4x256xf32> -> vector<4x256xf32>
    %c0_35 = arith.constant 0 : index
    %62 = arith.index_cast %c2_i32 : i32 to index
    %c0_36 = arith.constant 0 : index
    %63 = vector.load %arg2[%c0_35, %62, %c0_36] : memref<1x8x256xf32, #tpu.memory_space<vmem>>, vector<1x1x256xf32>
    %64 = vector.shape_cast %63 : vector<1x1x256xf32> to vector<1x256xf32>
    %65 = vector.broadcast %64 : vector<1x256xf32> to vector<4x256xf32>
    %66 = arith.mulf %61, %65 : vector<4x256xf32>
    %67 = arith.addf %47, %66 : vector<4x256xf32>
    %c3_i32 = arith.constant 3 : i32
    %68 = arith.truncf %67 : vector<4x256xf32> to vector<4x256xbf16>
    %cst_37 = arith.constant dense<0.000000e+00> : vector<4x512xf32>
    %69 = tpu.matmul %68, %5, %cst_37 {dimension_numbers = #tpu.dot_dimension_numbers<[1], [0], [0], [1], [0, 0, 1, 1], [], []>} : vector<4x256xbf16>, vector<256x512xbf16>, vector<4x512xf32> -> vector<4x512xf32>
    %cst_38 = arith.constant dense<0.000000e+00> : vector<32x256xf32>
    %70 = tpu.matmul %0, %67, %cst_38 {dimension_numbers = #tpu.dot_dimension_numbers<[1], [0], [0], [1], [0, 0, 1, 1], [], []>} : vector<32x4xf32>, vector<4x256xf32>, vector<32x256xf32> -> vector<32x256xf32>
    %71 = vector.extract_strided_slice %69 {offsets = [0, 0], sizes = [4, 256], strides = [1, 1]} : vector<4x512xf32> to vector<4x256xf32>
    %cst_39 = arith.constant dense<0.000000e+00> : vector<32x256xf32>
    %72 = tpu.matmul %1, %71, %cst_39 {dimension_numbers = #tpu.dot_dimension_numbers<[1], [0], [0], [1], [0, 0, 1, 1], [], []>} : vector<32x4xf32>, vector<4x256xf32>, vector<32x256xf32> -> vector<32x256xf32>
    %73 = arith.addf %70, %72 : vector<32x256xf32>
    %74 = vector.extract_strided_slice %69 {offsets = [0, 256], sizes = [4, 256], strides = [1, 1]} : vector<4x512xf32> to vector<4x256xf32>
    %cst_40 = arith.constant dense<0.000000e+00> : vector<32x256xf32>
    %75 = tpu.matmul %2, %74, %cst_40 {dimension_numbers = #tpu.dot_dimension_numbers<[1], [0], [0], [1], [0, 0, 1, 1], [], []>} : vector<32x4xf32>, vector<4x256xf32>, vector<32x256xf32> -> vector<32x256xf32>
    %76 = arith.addf %73, %75 : vector<32x256xf32>
    %77 = vector.broadcast %3 : vector<32x1xf32> to vector<32x256xf32>
    %78 = arith.addf %76, %77 : vector<32x256xf32>
    %cst_41 = arith.constant 0.000000e+00 : f32
    %79 = vector.broadcast %cst_41 : f32 to vector<32x256xf32>
    %80 = arith.maximumf %78, %79 : vector<32x256xf32>
    %cst_42 = arith.constant dense<0.000000e+00> : vector<4x256xf32>
    %81 = tpu.matmul %4, %80, %cst_42 {dimension_numbers = #tpu.dot_dimension_numbers<[1], [0], [0], [1], [0, 0, 1, 1], [], []>} : vector<4x32xf32>, vector<32x256xf32>, vector<4x256xf32> -> vector<4x256xf32>
    %c0_43 = arith.constant 0 : index
    %82 = arith.index_cast %c3_i32 : i32 to index
    %c0_44 = arith.constant 0 : index
    %83 = vector.load %arg2[%c0_43, %82, %c0_44] : memref<1x8x256xf32, #tpu.memory_space<vmem>>, vector<1x1x256xf32>
    %84 = vector.shape_cast %83 : vector<1x1x256xf32> to vector<1x256xf32>
    %85 = vector.broadcast %84 : vector<1x256xf32> to vector<4x256xf32>
    %86 = arith.mulf %81, %85 : vector<4x256xf32>
    %87 = arith.addf %67, %86 : vector<4x256xf32>
    %c4_i32 = arith.constant 4 : i32
    %88 = arith.truncf %87 : vector<4x256xf32> to vector<4x256xbf16>
    %cst_45 = arith.constant dense<0.000000e+00> : vector<4x512xf32>
    %89 = tpu.matmul %88, %5, %cst_45 {dimension_numbers = #tpu.dot_dimension_numbers<[1], [0], [0], [1], [0, 0, 1, 1], [], []>} : vector<4x256xbf16>, vector<256x512xbf16>, vector<4x512xf32> -> vector<4x512xf32>
    %cst_46 = arith.constant dense<0.000000e+00> : vector<32x256xf32>
    %90 = tpu.matmul %0, %87, %cst_46 {dimension_numbers = #tpu.dot_dimension_numbers<[1], [0], [0], [1], [0, 0, 1, 1], [], []>} : vector<32x4xf32>, vector<4x256xf32>, vector<32x256xf32> -> vector<32x256xf32>
    %91 = vector.extract_strided_slice %89 {offsets = [0, 0], sizes = [4, 256], strides = [1, 1]} : vector<4x512xf32> to vector<4x256xf32>
    %cst_47 = arith.constant dense<0.000000e+00> : vector<32x256xf32>
    %92 = tpu.matmul %1, %91, %cst_47 {dimension_numbers = #tpu.dot_dimension_numbers<[1], [0], [0], [1], [0, 0, 1, 1], [], []>} : vector<32x4xf32>, vector<4x256xf32>, vector<32x256xf32> -> vector<32x256xf32>
    %93 = arith.addf %90, %92 : vector<32x256xf32>
    %94 = vector.extract_strided_slice %89 {offsets = [0, 256], sizes = [4, 256], strides = [1, 1]} : vector<4x512xf32> to vector<4x256xf32>
    %cst_48 = arith.constant dense<0.000000e+00> : vector<32x256xf32>
    %95 = tpu.matmul %2, %94, %cst_48 {dimension_numbers = #tpu.dot_dimension_numbers<[1], [0], [0], [1], [0, 0, 1, 1], [], []>} : vector<32x4xf32>, vector<4x256xf32>, vector<32x256xf32> -> vector<32x256xf32>
    %96 = arith.addf %93, %95 : vector<32x256xf32>
    %97 = vector.broadcast %3 : vector<32x1xf32> to vector<32x256xf32>
    %98 = arith.addf %96, %97 : vector<32x256xf32>
    %cst_49 = arith.constant 0.000000e+00 : f32
    %99 = vector.broadcast %cst_49 : f32 to vector<32x256xf32>
    %100 = arith.maximumf %98, %99 : vector<32x256xf32>
    %cst_50 = arith.constant dense<0.000000e+00> : vector<4x256xf32>
    %101 = tpu.matmul %4, %100, %cst_50 {dimension_numbers = #tpu.dot_dimension_numbers<[1], [0], [0], [1], [0, 0, 1, 1], [], []>} : vector<4x32xf32>, vector<32x256xf32>, vector<4x256xf32> -> vector<4x256xf32>
    %c0_51 = arith.constant 0 : index
    %102 = arith.index_cast %c4_i32 : i32 to index
    %c0_52 = arith.constant 0 : index
    %103 = vector.load %arg2[%c0_51, %102, %c0_52] : memref<1x8x256xf32, #tpu.memory_space<vmem>>, vector<1x1x256xf32>
    %104 = vector.shape_cast %103 : vector<1x1x256xf32> to vector<1x256xf32>
    %105 = vector.broadcast %104 : vector<1x256xf32> to vector<4x256xf32>
    %106 = arith.mulf %101, %105 : vector<4x256xf32>
    %107 = arith.addf %87, %106 : vector<4x256xf32>
    %c5_i32 = arith.constant 5 : i32
    %108 = arith.truncf %107 : vector<4x256xf32> to vector<4x256xbf16>
    %cst_53 = arith.constant dense<0.000000e+00> : vector<4x512xf32>
    %109 = tpu.matmul %108, %5, %cst_53 {dimension_numbers = #tpu.dot_dimension_numbers<[1], [0], [0], [1], [0, 0, 1, 1], [], []>} : vector<4x256xbf16>, vector<256x512xbf16>, vector<4x512xf32> -> vector<4x512xf32>
    %cst_54 = arith.constant dense<0.000000e+00> : vector<32x256xf32>
    %110 = tpu.matmul %0, %107, %cst_54 {dimension_numbers = #tpu.dot_dimension_numbers<[1], [0], [0], [1], [0, 0, 1, 1], [], []>} : vector<32x4xf32>, vector<4x256xf32>, vector<32x256xf32> -> vector<32x256xf32>
    %111 = vector.extract_strided_slice %109 {offsets = [0, 0], sizes = [4, 256], strides = [1, 1]} : vector<4x512xf32> to vector<4x256xf32>
    %cst_55 = arith.constant dense<0.000000e+00> : vector<32x256xf32>
    %112 = tpu.matmul %1, %111, %cst_55 {dimension_numbers = #tpu.dot_dimension_numbers<[1], [0], [0], [1], [0, 0, 1, 1], [], []>} : vector<32x4xf32>, vector<4x256xf32>, vector<32x256xf32> -> vector<32x256xf32>
    %113 = arith.addf %110, %112 : vector<32x256xf32>
    %114 = vector.extract_strided_slice %109 {offsets = [0, 256], sizes = [4, 256], strides = [1, 1]} : vector<4x512xf32> to vector<4x256xf32>
    %cst_56 = arith.constant dense<0.000000e+00> : vector<32x256xf32>
    %115 = tpu.matmul %2, %114, %cst_56 {dimension_numbers = #tpu.dot_dimension_numbers<[1], [0], [0], [1], [0, 0, 1, 1], [], []>} : vector<32x4xf32>, vector<4x256xf32>, vector<32x256xf32> -> vector<32x256xf32>
    %116 = arith.addf %113, %115 : vector<32x256xf32>
    %117 = vector.broadcast %3 : vector<32x1xf32> to vector<32x256xf32>
    %118 = arith.addf %116, %117 : vector<32x256xf32>
    %cst_57 = arith.constant 0.000000e+00 : f32
    %119 = vector.broadcast %cst_57 : f32 to vector<32x256xf32>
    %120 = arith.maximumf %118, %119 : vector<32x256xf32>
    %cst_58 = arith.constant dense<0.000000e+00> : vector<4x256xf32>
    %121 = tpu.matmul %4, %120, %cst_58 {dimension_numbers = #tpu.dot_dimension_numbers<[1], [0], [0], [1], [0, 0, 1, 1], [], []>} : vector<4x32xf32>, vector<32x256xf32>, vector<4x256xf32> -> vector<4x256xf32>
    %c0_59 = arith.constant 0 : index
    %122 = arith.index_cast %c5_i32 : i32 to index
    %c0_60 = arith.constant 0 : index
    %123 = vector.load %arg2[%c0_59, %122, %c0_60] : memref<1x8x256xf32, #tpu.memory_space<vmem>>, vector<1x1x256xf32>
    %124 = vector.shape_cast %123 : vector<1x1x256xf32> to vector<1x256xf32>
    %125 = vector.broadcast %124 : vector<1x256xf32> to vector<4x256xf32>
    %126 = arith.mulf %121, %125 : vector<4x256xf32>
    %127 = arith.addf %107, %126 : vector<4x256xf32>
    %c6_i32 = arith.constant 6 : i32
    %128 = arith.truncf %127 : vector<4x256xf32> to vector<4x256xbf16>
    %cst_61 = arith.constant dense<0.000000e+00> : vector<4x512xf32>
    %129 = tpu.matmul %128, %5, %cst_61 {dimension_numbers = #tpu.dot_dimension_numbers<[1], [0], [0], [1], [0, 0, 1, 1], [], []>} : vector<4x256xbf16>, vector<256x512xbf16>, vector<4x512xf32> -> vector<4x512xf32>
    %cst_62 = arith.constant dense<0.000000e+00> : vector<32x256xf32>
    %130 = tpu.matmul %0, %127, %cst_62 {dimension_numbers = #tpu.dot_dimension_numbers<[1], [0], [0], [1], [0, 0, 1, 1], [], []>} : vector<32x4xf32>, vector<4x256xf32>, vector<32x256xf32> -> vector<32x256xf32>
    %131 = vector.extract_strided_slice %129 {offsets = [0, 0], sizes = [4, 256], strides = [1, 1]} : vector<4x512xf32> to vector<4x256xf32>
    %cst_63 = arith.constant dense<0.000000e+00> : vector<32x256xf32>
    %132 = tpu.matmul %1, %131, %cst_63 {dimension_numbers = #tpu.dot_dimension_numbers<[1], [0], [0], [1], [0, 0, 1, 1], [], []>} : vector<32x4xf32>, vector<4x256xf32>, vector<32x256xf32> -> vector<32x256xf32>
    %133 = arith.addf %130, %132 : vector<32x256xf32>
    %134 = vector.extract_strided_slice %129 {offsets = [0, 256], sizes = [4, 256], strides = [1, 1]} : vector<4x512xf32> to vector<4x256xf32>
    %cst_64 = arith.constant dense<0.000000e+00> : vector<32x256xf32>
    %135 = tpu.matmul %2, %134, %cst_64 {dimension_numbers = #tpu.dot_dimension_numbers<[1], [0], [0], [1], [0, 0, 1, 1], [], []>} : vector<32x4xf32>, vector<4x256xf32>, vector<32x256xf32> -> vector<32x256xf32>
    %136 = arith.addf %133, %135 : vector<32x256xf32>
    %137 = vector.broadcast %3 : vector<32x1xf32> to vector<32x256xf32>
    %138 = arith.addf %136, %137 : vector<32x256xf32>
    %cst_65 = arith.constant 0.000000e+00 : f32
    %139 = vector.broadcast %cst_65 : f32 to vector<32x256xf32>
    %140 = arith.maximumf %138, %139 : vector<32x256xf32>
    %cst_66 = arith.constant dense<0.000000e+00> : vector<4x256xf32>
    %141 = tpu.matmul %4, %140, %cst_66 {dimension_numbers = #tpu.dot_dimension_numbers<[1], [0], [0], [1], [0, 0, 1, 1], [], []>} : vector<4x32xf32>, vector<32x256xf32>, vector<4x256xf32> -> vector<4x256xf32>
    %c0_67 = arith.constant 0 : index
    %142 = arith.index_cast %c6_i32 : i32 to index
    %c0_68 = arith.constant 0 : index
    %143 = vector.load %arg2[%c0_67, %142, %c0_68] : memref<1x8x256xf32, #tpu.memory_space<vmem>>, vector<1x1x256xf32>
    %144 = vector.shape_cast %143 : vector<1x1x256xf32> to vector<1x256xf32>
    %145 = vector.broadcast %144 : vector<1x256xf32> to vector<4x256xf32>
    %146 = arith.mulf %141, %145 : vector<4x256xf32>
    %147 = arith.addf %127, %146 : vector<4x256xf32>
    %c7_i32 = arith.constant 7 : i32
    %148 = arith.truncf %147 : vector<4x256xf32> to vector<4x256xbf16>
    %cst_69 = arith.constant dense<0.000000e+00> : vector<4x512xf32>
    %149 = tpu.matmul %148, %5, %cst_69 {dimension_numbers = #tpu.dot_dimension_numbers<[1], [0], [0], [1], [0, 0, 1, 1], [], []>} : vector<4x256xbf16>, vector<256x512xbf16>, vector<4x512xf32> -> vector<4x512xf32>
    %cst_70 = arith.constant dense<0.000000e+00> : vector<32x256xf32>
    %150 = tpu.matmul %0, %147, %cst_70 {dimension_numbers = #tpu.dot_dimension_numbers<[1], [0], [0], [1], [0, 0, 1, 1], [], []>} : vector<32x4xf32>, vector<4x256xf32>, vector<32x256xf32> -> vector<32x256xf32>
    %151 = vector.extract_strided_slice %149 {offsets = [0, 0], sizes = [4, 256], strides = [1, 1]} : vector<4x512xf32> to vector<4x256xf32>
    %cst_71 = arith.constant dense<0.000000e+00> : vector<32x256xf32>
    %152 = tpu.matmul %1, %151, %cst_71 {dimension_numbers = #tpu.dot_dimension_numbers<[1], [0], [0], [1], [0, 0, 1, 1], [], []>} : vector<32x4xf32>, vector<4x256xf32>, vector<32x256xf32> -> vector<32x256xf32>
    %153 = arith.addf %150, %152 : vector<32x256xf32>
    %154 = vector.extract_strided_slice %149 {offsets = [0, 256], sizes = [4, 256], strides = [1, 1]} : vector<4x512xf32> to vector<4x256xf32>
    %cst_72 = arith.constant dense<0.000000e+00> : vector<32x256xf32>
    %155 = tpu.matmul %2, %154, %cst_72 {dimension_numbers = #tpu.dot_dimension_numbers<[1], [0], [0], [1], [0, 0, 1, 1], [], []>} : vector<32x4xf32>, vector<4x256xf32>, vector<32x256xf32> -> vector<32x256xf32>
    %156 = arith.addf %153, %155 : vector<32x256xf32>
    %157 = vector.broadcast %3 : vector<32x1xf32> to vector<32x256xf32>
    %158 = arith.addf %156, %157 : vector<32x256xf32>
    %cst_73 = arith.constant 0.000000e+00 : f32
    %159 = vector.broadcast %cst_73 : f32 to vector<32x256xf32>
    %160 = arith.maximumf %158, %159 : vector<32x256xf32>
    %cst_74 = arith.constant dense<0.000000e+00> : vector<4x256xf32>
    %161 = tpu.matmul %4, %160, %cst_74 {dimension_numbers = #tpu.dot_dimension_numbers<[1], [0], [0], [1], [0, 0, 1, 1], [], []>} : vector<4x32xf32>, vector<32x256xf32>, vector<4x256xf32> -> vector<4x256xf32>
    %c0_75 = arith.constant 0 : index
    %162 = arith.index_cast %c7_i32 : i32 to index
    %c0_76 = arith.constant 0 : index
    %163 = vector.load %arg2[%c0_75, %162, %c0_76] : memref<1x8x256xf32, #tpu.memory_space<vmem>>, vector<1x1x256xf32>
    %164 = vector.shape_cast %163 : vector<1x1x256xf32> to vector<1x256xf32>
    %165 = vector.broadcast %164 : vector<1x256xf32> to vector<4x256xf32>
    %166 = arith.mulf %161, %165 : vector<4x256xf32>
    %167 = arith.addf %147, %166 : vector<4x256xf32>
    %c8_i32 = arith.constant 8 : i32
    %c0_77 = arith.constant 0 : index
    %c0_78 = arith.constant 0 : index
    %c0_79 = arith.constant 0 : index
    %168 = vector.load %arg9[%c0_77, %c0_78, %c0_79] : memref<1x4x256xf32, #tpu.memory_space<vmem>>, vector<1x4x256xf32>
    %169 = vector.shape_cast %168 : vector<1x4x256xf32> to vector<4x256xf32>
    %170 = vector.shape_cast %167 : vector<4x256xf32> to vector<1x4x256xf32>
    tpu.vector_store %arg9[%c0_77, %c0_78, %c0_79], %170 {strides = array<i32>} : memref<1x4x256xf32, #tpu.memory_space<vmem>>, vector<1x4x256xf32>,
    return
  }
  func.func @transform_0(%arg0: i32) -> (i32, i32, i32) {
    %c0_i32 = arith.constant 0 : i32
    %c0_i32_0 = arith.constant 0 : i32
    %c0_i32_1 = arith.constant 0 : i32
    return %arg0, %c0_i32, %c0_i32_0 : i32, i32, i32
  }
  func.func @transform_1(%arg0: i32) -> (i32, i32, i32) {
    %c0_i32 = arith.constant 0 : i32
    %c0_i32_0 = arith.constant 0 : i32
    %c0_i32_1 = arith.constant 0 : i32
    return %arg0, %c0_i32, %c0_i32_0 : i32, i32, i32
  }
  func.func @transform_2(%arg0: i32) -> (i32, i32) {
    %c0_i32 = arith.constant 0 : i32
    %c0_i32_0 = arith.constant 0 : i32
    %c0_i32_1 = arith.constant 0 : i32
    return %c0_i32, %c0_i32_0 : i32, i32
  }
  func.func @transform_3(%arg0: i32) -> (i32, i32) {
    %c0_i32 = arith.constant 0 : i32
    %c0_i32_0 = arith.constant 0 : i32
    %c0_i32_1 = arith.constant 0 : i32
    return %c0_i32, %c0_i32_0 : i32, i32
  }
  func.func @transform_4(%arg0: i32) -> (i32, i32) {
    %c0_i32 = arith.constant 0 : i32
    %c0_i32_0 = arith.constant 0 : i32
    %c0_i32_1 = arith.constant 0 : i32
    return %c0_i32, %c0_i32_0 : i32, i32
  }
  func.func @transform_5(%arg0: i32) -> (i32, i32) {
    %c0_i32 = arith.constant 0 : i32
    %c0_i32_0 = arith.constant 0 : i32
    %c0_i32_1 = arith.constant 0 : i32
    return %c0_i32, %c0_i32_0 : i32, i32
  }
  func.func @transform_6(%arg0: i32) -> (i32, i32) {
    %c0_i32 = arith.constant 0 : i32
    %c0_i32_0 = arith.constant 0 : i32
    %c0_i32_1 = arith.constant 0 : i32
    return %c0_i32, %c0_i32_0 : i32, i32
  }
  func.func @transform_7(%arg0: i32) -> (i32, i32) {
    %c0_i32 = arith.constant 0 : i32
    %c0_i32_0 = arith.constant 0 : i32
    %c0_i32_1 = arith.constant 0 : i32
    return %c0_i32, %c0_i32_0 : i32, i32
  }
  func.func @transform_8(%arg0: i32) -> (i32, i32, i32) {
    %c0_i32 = arith.constant 0 : i32
    %c0_i32_0 = arith.constant 0 : i32
    %c0_i32_1 = arith.constant 0 : i32
    return %arg0, %c0_i32, %c0_i32_0 : i32, i32, i32
  }
}

</mosaic_0001>

<llo_original>
// kernel: basic_nca_forward.1
$region0: #{basic_nca_forward.1}
  #allocation0 [shape = 'u32[]', space=smem, size = 0x4, offset = 0x4, fixed_abs, tag = 'smem constant byte address 0x4 - core index']
  #allocation1 [shape = 'u32[144,128]{1,0:T(1,128)}', space=vmem, size = 0x12000, scoped, tag = 'internal scratch']
  %s0 = inlined_call_operand.vmem [shape: f32[2,4,256], index: 0, kind: input, shape index: {}]
  %s1 = inlined_call_operand.vmem [shape: f32[2,8,256], index: 1, kind: input, shape index: {}]
  %s2 = inlined_call_operand.vmem [shape: f32[32,4], index: 2, kind: input, shape index: {}]
  %s3 = inlined_call_operand.vmem [shape: f32[32,4], index: 3, kind: input, shape index: {}]
  %s4 = inlined_call_operand.vmem [shape: f32[32,4], index: 4, kind: input, shape index: {}]
  %s5 = inlined_call_operand.vmem [shape: f32[32,1], index: 5, kind: input, shape index: {}]
  %s6 = inlined_call_operand.vmem [shape: f32[4,32], index: 6, kind: input, shape index: {}]
  %s7 = inlined_call_operand.vmem [shape: bf16[256,512], index: 7, kind: input, shape index: {}]
  %s8 = inlined_call_operand.vmem [shape: f32[2,4,256], index: 8, kind: output, shape index: {}]
  %s9 = sld [smem:[#allocation0]]
  $region65: #{basic_nca_forward.1} parent=0
    _
  %s11 = ssub.s32 1, %s9
  %s12 = scalar_select 0, %s11, %s9
  loop: start=0, step=1, limit=4
  $region2: #{basic_nca_forward.1} parent=0 // loop_pre_header
    _
  $region3: #{basic_nca_forward.1} parent=0 // loop_header
    %s14 = sphi 0, %s18
    %p15 = scmp.ge.s32.totalorder %s14, 4
    %s24 = sphi 0, %s26
    %s27 = sphi 0, %s24
    %s28 = sphi 0, %s27
    %s44 = sphi 0, %s28
    %s50 = sphi 0, %s52
    %s53 = sphi 0, %s50
    %s54 = sphi 0, %s53
    %s70 = sphi 0, %s54
    %s74 = sphi 0, %s74
    %s76 = sphi 0, %s74
    %s77 = sphi 0, %s76
    %s91 = sphi 0, %s77
    %s95 = sphi 0, %s95
    %s97 = sphi 0, %s95
    %s98 = sphi 0, %s97
    %s112 = sphi 0, %s98
    %s116 = sphi 0, %s116
    %s118 = sphi 0, %s116
    %s119 = sphi 0, %s118
    %s133 = sphi 0, %s119
    %s137 = sphi 0, %s137
    %s139 = sphi 0, %s137
    %s140 = sphi 0, %s139
    %s154 = sphi 0, %s140
    %s158 = sphi 0, %s158
    %s160 = sphi 0, %s158
    %s161 = sphi 0, %s160
    %s175 = sphi 0, %s161
    %s179 = sphi 0, %s179
    %s181 = sphi 0, %s179
    %s182 = sphi 0, %s181
    %s196 = sphi 0, %s182
    %s202 = sphi 0, %s204
    %s205 = sphi 0, %s202
    %s206 = sphi 0, %s205
    %s222 = sphi 0, %s206
  $region4: #{basic_nca_forward.1} parent=0 // loop_header_branch
    %17 = sbr.rel (%p15) target = $region8
  $region5: #{basic_nca_forward.1} parent=0 // loop_body
    %s19 = ssub.s32 %s14, 1
    %s20 = ssub.s32 %s14, 2
    %s21 = sadd.s32 %s14, 1
    %s22 = ssub.s32 %s14, %s21
    %p23 = scmp.eq.s32.totalorder %s22, 0
    %s25 = sadd.s32 %s24, 1
    %s26 = scalar_select %p23, %s24, %s25
    %p29 = pneg %p23
    %p30 = scmp.eq.s32.totalorder %s14, 1
    %p31 = por %p29, %p30
    %p32 = scmp.ne.s32.totalorder %s24, %s27
    %p33 = scmp.eq.s32.totalorder %s14, 0
    %p34 = por %p32, %p33
    %p35 = scmp.ne.s32.totalorder %s24, %s27
    %p36 = scmp.eq.s32.totalorder %s19, 1
    %p37 = por %p35, %p36
    %p38 = scmp.ne.s32.totalorder %s27, %s28
    %p39 = scmp.eq.s32.totalorder %s19, 0
    %p40 = por %p38, %p39
    %p41 = scmp.ne.s32.totalorder %s27, %s28
    %p42 = scmp.eq.s32.totalorder %s20, 1
    %p43 = por %p41, %p42
    %p45 = scmp.ne.s32.totalorder %s28, %s44
    %p46 = scmp.eq.s32.totalorder %s20, 0
    %p47 = por %p45, %p46
    %s48 = ssub.s32 %s14, %s21
    %p49 = scmp.eq.s32.totalorder %s48, 0
    %s51 = sadd.s32 %s50, 1
    %s52 = scalar_select %p49, %s50, %s51
    %p55 = pneg %p49
    %p56 = scmp.eq.s32.totalorder %s14, 1
    %p57 = por %p55, %p56
    %p58 = scmp.ne.s32.totalorder %s50, %s53
    %p59 = scmp.eq.s32.totalorder %s14, 0
    %p60 = por %p58, %p59
    %p61 = scmp.ne.s32.totalorder %s50, %s53
    %p62 = scmp.eq.s32.totalorder %s19, 1
    %p63 = por %p61, %p62
    %p64 = scmp.ne.s32.totalorder %s53, %s54
    %p65 = scmp.eq.s32.totalorder %s19, 0
    %p66 = por %p64, %p65
    %p67 = scmp.ne.s32.totalorder %s53, %s54
    %p68 = scmp.eq.s32.totalorder %s20, 1
    %p69 = por %p67, %p68
    %p71 = scmp.ne.s32.totalorder %s54, %s70
    %p72 = scmp.eq.s32.totalorder %s20, 0
    %p73 = por %p71, %p72
    %s75 = sadd.s32 %s74, 1
    %p78 = scmp.eq.s32.totalorder %s14, 1
    %p79 = scmp.ne.s32.totalorder %s74, %s76
    %p80 = scmp.eq.s32.totalorder %s14, 0
    %p81 = por %p79, %p80
    %p82 = scmp.ne.s32.totalorder %s74, %s76
    %p83 = scmp.eq.s32.totalorder %s19, 1
    %p84 = por %p82, %p83
    %p85 = scmp.ne.s32.totalorder %s76, %s77
    %p86 = scmp.eq.s32.totalorder %s19, 0
    %p87 = por %p85, %p86
    %p88 = scmp.ne.s32.totalorder %s76, %s77
    %p89 = scmp.eq.s32.totalorder %s20, 1
    %p90 = por %p88, %p89
    %p92 = scmp.ne.s32.totalorder %s77, %s91
    %p93 = scmp.eq.s32.totalorder %s20, 0
    %p94 = por %p92, %p93
    %s96 = sadd.s32 %s95, 1
    %p99 = scmp.eq.s32.totalorder %s14, 1
    %p100 = scmp.ne.s32.totalorder %s95, %s97
    %p101 = scmp.eq.s32.totalorder %s14, 0
    %p102 = por %p100, %p101
    %p103 = scmp.ne.s32.totalorder %s95, %s97
    %p104 = scmp.eq.s32.totalorder %s19, 1
    %p105 = por %p103, %p104
    %p106 = scmp.ne.s32.totalorder %s97, %s98
    %p107 = scmp.eq.s32.totalorder %s19, 0
    %p108 = por %p106, %p107
    %p109 = scmp.ne.s32.totalorder %s97, %s98
    %p110 = scmp.eq.s32.totalorder %s20, 1
    %p111 = por %p109, %p110
    %p113 = scmp.ne.s32.totalorder %s98, %s112
    %p114 = scmp.eq.s32.totalorder %s20, 0
    %p115 = por %p113, %p114
    %s117 = sadd.s32 %s116, 1
    %p120 = scmp.eq.s32.totalorder %s14, 1
    %p121 = scmp.ne.s32.totalorder %s116, %s118
    %p122 = scmp.eq.s32.totalorder %s14, 0
    %p123 = por %p121, %p122
    %p124 = scmp.ne.s32.totalorder %s116, %s118
    %p125 = scmp.eq.s32.totalorder %s19, 1
    %p126 = por %p124, %p125
    %p127 = scmp.ne.s32.totalorder %s118, %s119
    %p128 = scmp.eq.s32.totalorder %s19, 0
    %p129 = por %p127, %p128
    %p130 = scmp.ne.s32.totalorder %s118, %s119
    %p131 = scmp.eq.s32.totalorder %s20, 1
    %p132 = por %p130, %p131
    %p134 = scmp.ne.s32.totalorder %s119, %s133
    %p135 = scmp.eq.s32.totalorder %s20, 0
    %p136 = por %p134, %p135
    %s138 = sadd.s32 %s137, 1
    %p141 = scmp.eq.s32.totalorder %s14, 1
    %p142 = scmp.ne.s32.totalorder %s137, %s139
    %p143 = scmp.eq.s32.totalorder %s14, 0
    %p144 = por %p142, %p143
    %p145 = scmp.ne.s32.totalorder %s137, %s139
    %p146 = scmp.eq.s32.totalorder %s19, 1
    %p147 = por %p145, %p146
    %p148 = scmp.ne.s32.totalorder %s139, %s140
    %p149 = scmp.eq.s32.totalorder %s19, 0
    %p150 = por %p148, %p149
    %p151 = scmp.ne.s32.totalorder %s139, %s140
    %p152 = scmp.eq.s32.totalorder %s20, 1
    %p153 = por %p151, %p152
    %p155 = scmp.ne.s32.totalorder %s140, %s154
    %p156 = scmp.eq.s32.totalorder %s20, 0
    %p157 = por %p155, %p156
    %s159 = sadd.s32 %s158, 1
    %p162 = scmp.eq.s32.totalorder %s14, 1
    %p163 = scmp.ne.s32.totalorder %s158, %s160
    %p164 = scmp.eq.s32.totalorder %s14, 0
    %p165 = por %p163, %p164
    %p166 = scmp.ne.s32.totalorder %s158, %s160
    %p167 = scmp.eq.s32.totalorder %s19, 1
    %p168 = por %p166, %p167
    %p169 = scmp.ne.s32.totalorder %s160, %s161
    %p170 = scmp.eq.s32.totalorder %s19, 0
    %p171 = por %p169, %p170
    %p172 = scmp.ne.s32.totalorder %s160, %s161
    %p173 = scmp.eq.s32.totalorder %s20, 1
    %p174 = por %p172, %p173
    %p176 = scmp.ne.s32.totalorder %s161, %s175
    %p177 = scmp.eq.s32.totalorder %s20, 0
    %p178 = por %p176, %p177
    %s180 = sadd.s32 %s179, 1
    %p183 = scmp.eq.s32.totalorder %s14, 1
    %p184 = scmp.ne.s32.totalorder %s179, %s181
    %p185 = scmp.eq.s32.totalorder %s14, 0
    %p186 = por %p184, %p185
    %p187 = scmp.ne.s32.totalorder %s179, %s181
    %p188 = scmp.eq.s32.totalorder %s19, 1
    %p189 = por %p187, %p188
    %p190 = scmp.ne.s32.totalorder %s181, %s182
    %p191 = scmp.eq.s32.totalorder %s19, 0
    %p192 = por %p190, %p191
    %p193 = scmp.ne.s32.totalorder %s181, %s182
    %p194 = scmp.eq.s32.totalorder %s20, 1
    %p195 = por %p193, %p194
    %p197 = scmp.ne.s32.totalorder %s182, %s196
    %p198 = scmp.eq.s32.totalorder %s20, 0
    %p199 = por %p197, %p198
    %s200 = ssub.s32 %s14, %s21
    %p201 = scmp.eq.s32.totalorder %s200, 0
    %s203 = sadd.s32 %s202, 1
    %s204 = scalar_select %p201, %s202, %s203
    %p207 = pneg %p201
    %p208 = scmp.eq.s32.totalorder %s14, 1
    %p209 = por %p207, %p208
    %p210 = scmp.ne.s32.totalorder %s202, %s205
    %p211 = scmp.eq.s32.totalorder %s14, 0
    %p212 = por %p210, %p211
    %p213 = scmp.ne.s32.totalorder %s202, %s205
    %p214 = scmp.eq.s32.totalorder %s19, 1
    %p215 = por %p213, %p214
    %p216 = scmp.ne.s32.totalorder %s205, %s206
    %p217 = scmp.eq.s32.totalorder %s19, 0
    %p218 = por %p216, %p217
    %p219 = scmp.ne.s32.totalorder %s205, %s206
    %p220 = scmp.eq.s32.totalorder %s20, 1
    %p221 = por %p219, %p220
    %p223 = scmp.ne.s32.totalorder %s206, %s222
    %p224 = scmp.eq.s32.totalorder %s20, 0
    %p225 = por %p223, %p224
    %p226 = scmp.le.s32.totalorder 1, %s14
    %p227 = scmp.lt.s32.totalorder %s14, 3
    %p228 = pnand %p226, %p227
    %p229 = pneg %p228
    // Predicated region
    $region9: #{basic_nca_forward.1} parent=5 // pred_check
      _
    $region10: #{basic_nca_forward.1} parent=5 // pred_check_branch
      %231 = sbr.rel (%p228) target = $region12
    $region11: #{basic_nca_forward.1} parent=5 // pred_region
      %s232 = ssub.s32 %s14, 1
      // Predicated region
      $region13: #{basic_nca_forward.1} parent=11 // pred_check
        %p233 = pneg %p87
      $region14: #{basic_nca_forward.1} parent=11 // pred_check_branch
        %235 = sbr.rel (%p233) target = $region16
      $region15: #{basic_nca_forward.1} parent=11 // pred_region
        _
      $region16: #{basic_nca_forward.1} parent=11 // pred_fallthru
        _
      // Predicated region
      $region17: #{basic_nca_forward.1} parent=11 // pred_check
        %p236 = pneg %p108
      $region18: #{basic_nca_forward.1} parent=11 // pred_check_branch
        %238 = sbr.rel (%p236) target = $region20
      $region19: #{basic_nca_forward.1} parent=11 // pred_region
        _
      $region20: #{basic_nca_forward.1} parent=11 // pred_fallthru
        _
      // Predicated region
      $region21: #{basic_nca_forward.1} parent=11 // pred_check
        %p239 = pneg %p129
      $region22: #{basic_nca_forward.1} parent=11 // pred_check_branch
        %241 = sbr.rel (%p239) target = $region24
      $region23: #{basic_nca_forward.1} parent=11 // pred_region
        _
      $region24: #{basic_nca_forward.1} parent=11 // pred_fallthru
        _
      // Predicated region
      $region25: #{basic_nca_forward.1} parent=11 // pred_check
        %p242 = pneg %p150
      $region26: #{basic_nca_forward.1} parent=11 // pred_check_branch
        %244 = sbr.rel (%p242) target = $region28
      $region27: #{basic_nca_forward.1} parent=11 // pred_region
        _
      $region28: #{basic_nca_forward.1} parent=11 // pred_fallthru
        _
      // Predicated region
      $region29: #{basic_nca_forward.1} parent=11 // pred_check
        %p245 = pneg %p171
      $region30: #{basic_nca_forward.1} parent=11 // pred_check_branch
        %247 = sbr.rel (%p245) target = $region32
      $region31: #{basic_nca_forward.1} parent=11 // pred_region
        _
      $region32: #{basic_nca_forward.1} parent=11 // pred_fallthru
        _
      // Predicated region
      $region33: #{basic_nca_forward.1} parent=11 // pred_check
        %p248 = pneg %p192
      $region34: #{basic_nca_forward.1} parent=11 // pred_check_branch
        %250 = sbr.rel (%p248) target = $region36
      $region35: #{basic_nca_forward.1} parent=11 // pred_region
        _
      $region36: #{basic_nca_forward.1} parent=11 // pred_fallthru
        _
    $region12: #{basic_nca_forward.1} parent=5 // pred_fallthru
      _
    %p251 = scmp.lt.s32.totalorder %s14, 2
    // Predicated region
    $region37: #{basic_nca_forward.1} parent=5 // pred_check
      %p252 = pneg %p251
    $region38: #{basic_nca_forward.1} parent=5 // pred_check_branch
      %254 = sbr.rel (%p252) target = $region40
    $region39: #{basic_nca_forward.1} parent=5 // pred_region
      // Predicated region
      $region41: #{basic_nca_forward.1} parent=39 // pred_check
        %p255 = pneg %p34
      $region42: #{basic_nca_forward.1} parent=39 // pred_check_branch
        %257 = sbr.rel (%p255) target = $region44
      $region43: #{basic_nca_forward.1} parent=39 // pred_region
        %p258 = scmp.lt.s32.totalorder %s14, 1
        %s259 = scalar_select %p258, %s14, 1
        %s260 = smul.addr %s259, 2
        %s261 = smul.addr %s260, 4
        %s262 = scalar_lea.vmem %s0, %s261
      $region44: #{basic_nca_forward.1} parent=39 // pred_fallthru
        _
      // Predicated region
      $region45: #{basic_nca_forward.1} parent=39 // pred_check
        %p263 = pneg %p60
      $region46: #{basic_nca_forward.1} parent=39 // pred_check_branch
        %265 = sbr.rel (%p263) target = $region48
      $region47: #{basic_nca_forward.1} parent=39 // pred_region
        %p266 = scmp.lt.s32.totalorder %s14, 1
        %s267 = scalar_select %p266, %s14, 1
        %s268 = smul.addr %s267, 2
        %s269 = smul.addr %s268, 8
        %s270 = scalar_lea.vmem %s1, %s269
      $region48: #{basic_nca_forward.1} parent=39 // pred_fallthru
        _
    $region40: #{basic_nca_forward.1} parent=5 // pred_fallthru
      _
    %p271 = scmp.le.s32.totalorder 1, %s14
    %p272 = scmp.lt.s32.totalorder %s14, 3
    %p273 = pnand %p271, %p272
    %p274 = pneg %p273
    // Predicated region
    $region49: #{basic_nca_forward.1} parent=5 // pred_check
      _
    $region50: #{basic_nca_forward.1} parent=5 // pred_check_branch
      %276 = sbr.rel (%p273) target = $region52
    $region51: #{basic_nca_forward.1} parent=5 // pred_region
      %s277 = ssub.s32 %s14, 1
      %p278 = scmp.lt.s32.totalorder %s19, 1
      %s279 = scalar_select %p278, %s19, 1
      %s280 = smul.addr %s279, 2
      %s281 = smul.addr %s280, 4
      %s282 = scalar_lea.vmem %s0, %s281
      %p283 = pneg %p40
      %p284 = pneg %p37
      %p285 = scmp.lt.s32.totalorder %s19, 1
      %s286 = scalar_select %p285, %s19, 1
      %s287 = smul.addr %s286, 2
      %s288 = smul.addr %s287, 8
      %s289 = scalar_lea.vmem %s1, %s288
      %p290 = pneg %p66
      %p291 = pneg %p63
      %p292 = pneg %p87
      %p293 = pneg %p84
      %p294 = pneg %p108
      %p295 = pneg %p105
      %p296 = pneg %p129
      %p297 = pneg %p126
      %p298 = pneg %p150
      %p299 = pneg %p147
      %p300 = pneg %p171
      %p301 = pneg %p168
      %p302 = pneg %p192
      %p303 = pneg %p189
      %p304 = pneg %p218
      %p305 = pneg %p215
      %p306 = scmp.lt.s32.totalorder %s19, 1
      %s307 = scalar_select %p306, %s19, 1
      %s308 = smul.addr %s307, 2
      %s309 = smul.addr %s308, 4
      %s310 = scalar_lea.vmem %s8, %s309
      %p311 = scmp.lt.s32.totalorder %s19, 1
      %s312 = scalar_select %p311, %s19, 1
      %s313 = smul.addr %s312, 2
      %s314 = smul.addr %s313, 4
      %s315 = scalar_lea.vmem %s0, %s314
      %p316 = scmp.lt.s32.totalorder %s19, 1
      %s317 = scalar_select %p316, %s19, 1
      %s318 = smul.addr %s317, 2
      %s319 = smul.addr %s318, 8
      %s320 = scalar_lea.vmem %s1, %s319
      %p321 = scmp.lt.s32.totalorder %s19, 1
      %s322 = scalar_select %p321, %s19, 1
      %s323 = smul.addr %s322, 2
      %s324 = smul.addr %s323, 4
      %s325 = scalar_lea.vmem %s8, %s324
      %v326 = vld [vmem:[%s2] sm:$0xff]
      %v327 = vld [vmem:[%s2 + $0x8] sm:$0xff]
      %v328 = vld [vmem:[%s2 + $0x10] sm:$0xff]
      %v329 = vld [vmem:[%s2 + $0x18] sm:$0xff]
      %v330 = vld [vmem:[%s3] sm:$0xff]
      %v331 = vld [vmem:[%s3 + $0x8] sm:$0xff]
      %v332 = vld [vmem:[%s3 + $0x10] sm:$0xff]
      %v333 = vld [vmem:[%s3 + $0x18] sm:$0xff]
      %v334 = vld [vmem:[%s4] sm:$0xff]
      %v335 = vld [vmem:[%s4 + $0x8] sm:$0xff]
      %v336 = vld [vmem:[%s4 + $0x10] sm:$0xff]
      %v337 = vld [vmem:[%s4 + $0x18] sm:$0xff]
      %v338 = vld [vmem:[%s5] sm:$0xff]
      %v339 = vld [vmem:[%s5 + $0x8] sm:$0xff]
      %v340 = vld [vmem:[%s5 + $0x10] sm:$0xff]
      %v341 = vld [vmem:[%s5 + $0x18] sm:$0xff]
      %v342 = vld [vmem:[%s6] sm:$0xf]
      %v343 = vld [vmem:[%s7] sm:$0xff]
      %v344 = vld [vmem:[%s7 + $0x8] sm:$0xff]
      %v345 = vld [vmem:[%s7 + $0x10] sm:$0xff]
      %v346 = vld [vmem:[%s7 + $0x18] sm:$0xff]
      %v347 = vld [vmem:[%s7 + $0x20] sm:$0xff]
      %v348 = vld [vmem:[%s7 + $0x28] sm:$0xff]
      %v349 = vld [vmem:[%s7 + $0x30] sm:$0xff]
      %v350 = vld [vmem:[%s7 + $0x38] sm:$0xff]
      %v351 = vld [vmem:[%s7 + $0x40] sm:$0xff]
      %v352 = vld [vmem:[%s7 + $0x48] sm:$0xff]
      %v353 = vld [vmem:[%s7 + $0x50] sm:$0xff]
      %v354 = vld [vmem:[%s7 + $0x58] sm:$0xff]
      %v355 = vld [vmem:[%s7 + $0x60] sm:$0xff]
      %v356 = vld [vmem:[%s7 + $0x68] sm:$0xff]
      %v357 = vld [vmem:[%s7 + $0x70] sm:$0xff]
      %v358 = vld [vmem:[%s7 + $0x78] sm:$0xff]
      %v359 = vld [vmem:[%s7 + $0x80] sm:$0xff]
      %v360 = vld [vmem:[%s7 + $0x88] sm:$0xff]
      %v361 = vld [vmem:[%s7 + $0x90] sm:$0xff]
      %v362 = vld [vmem:[%s7 + $0x98] sm:$0xff]
      %v363 = vld [vmem:[%s7 + $0xa0] sm:$0xff]
      %v364 = vld [vmem:[%s7 + $0xa8] sm:$0xff]
      %v365 = vld [vmem:[%s7 + $0xb0] sm:$0xff]
      %v366 = vld [vmem:[%s7 + $0xb8] sm:$0xff]
      %v367 = vld [vmem:[%s7 + $0xc0] sm:$0xff]
      %v368 = vld [vmem:[%s7 + $0xc8] sm:$0xff]
      %v369 = vld [vmem:[%s7 + $0xd0] sm:$0xff]
      %v370 = vld [vmem:[%s7 + $0xd8] sm:$0xff]
      %v371 = vld [vmem:[%s7 + $0xe0] sm:$0xff]
      %v372 = vld [vmem:[%s7 + $0xe8] sm:$0xff]
      %v373 = vld [vmem:[%s7 + $0xf0] sm:$0xff]
      %v374 = vld [vmem:[%s7 + $0xf8] sm:$0xff]
      %v375 = vld [vmem:[%s7 + $0x100] sm:$0xff]
      %v376 = vld [vmem:[%s7 + $0x108] sm:$0xff]
      %v377 = vld [vmem:[%s7 + $0x110] sm:$0xff]
      %v378 = vld [vmem:[%s7 + $0x118] sm:$0xff]
      %v379 = vld [vmem:[%s7 + $0x120] sm:$0xff]
      %v380 = vld [vmem:[%s7 + $0x128] sm:$0xff]
      %v381 = vld [vmem:[%s7 + $0x130] sm:$0xff]
      %v382 = vld [vmem:[%s7 + $0x138] sm:$0xff]
      %v383 = vld [vmem:[%s7 + $0x140] sm:$0xff]
      %v384 = vld [vmem:[%s7 + $0x148] sm:$0xff]
      %v385 = vld [vmem:[%s7 + $0x150] sm:$0xff]
      %v386 = vld [vmem:[%s7 + $0x158] sm:$0xff]
      %v387 = vld [vmem:[%s7 + $0x160] sm:$0xff]
      %v388 = vld [vmem:[%s7 + $0x168] sm:$0xff]
      %v389 = vld [vmem:[%s7 + $0x170] sm:$0xff]
      %v390 = vld [vmem:[%s7 + $0x178] sm:$0xff]
      %v391 = vld [vmem:[%s7 + $0x180] sm:$0xff]
      %v392 = vld [vmem:[%s7 + $0x188] sm:$0xff]
      %v393 = vld [vmem:[%s7 + $0x190] sm:$0xff]
      %v394 = vld [vmem:[%s7 + $0x198] sm:$0xff]
      %v395 = vld [vmem:[%s7 + $0x1a0] sm:$0xff]
      %v396 = vld [vmem:[%s7 + $0x1a8] sm:$0xff]
      %v397 = vld [vmem:[%s7 + $0x1b0] sm:$0xff]
      %v398 = vld [vmem:[%s7 + $0x1b8] sm:$0xff]
      %v399 = vld [vmem:[%s7 + $0x1c0] sm:$0xff]
      %v400 = vld [vmem:[%s7 + $0x1c8] sm:$0xff]
      %v401 = vld [vmem:[%s7 + $0x1d0] sm:$0xff]
      %v402 = vld [vmem:[%s7 + $0x1d8] sm:$0xff]
      %v403 = vld [vmem:[%s7 + $0x1e0] sm:$0xff]
      %v404 = vld [vmem:[%s7 + $0x1e8] sm:$0xff]
      %v405 = vld [vmem:[%s7 + $0x1f0] sm:$0xff]
      %v406 = vld [vmem:[%s7 + $0x1f8] sm:$0xff]
      %v407 = vld [vmem:[%s315] sm:$0xff]
      %v409 = vcombine.high %v407, %v407
      %v411 = vpack.c.bf16 %v407, %v407
      %v412 = vpack.c.bf16 %v409, %v409
      %v477 = vunpack.c.l.b16 %v343
      %v478 = vunpack.c.h.b16 %v343
      %v479 = vunpack.c.l.b16 %v344
      %v480 = vunpack.c.h.b16 %v344
      %v481 = vunpack.c.l.b16 %v345
      %v482 = vunpack.c.h.b16 %v345
      %v483 = vunpack.c.l.b16 %v346
      %v484 = vunpack.c.h.b16 %v346
      %v485 = vunpack.c.l.b16 %v347
      %v486 = vunpack.c.h.b16 %v347
      %v487 = vunpack.c.l.b16 %v348
      %v488 = vunpack.c.h.b16 %v348
      %v489 = vunpack.c.l.b16 %v349
      %v490 = vunpack.c.h.b16 %v349
      %v491 = vunpack.c.l.b16 %v350
      %v492 = vunpack.c.h.b16 %v350
      %v493 = vunpack.c.l.b16 %v351
      %v494 = vunpack.c.h.b16 %v351
      %v495 = vunpack.c.l.b16 %v352
      %v496 = vunpack.c.h.b16 %v352
      %v497 = vunpack.c.l.b16 %v353
      %v498 = vunpack.c.h.b16 %v353
      %v499 = vunpack.c.l.b16 %v354
      %v500 = vunpack.c.h.b16 %v354
      %v501 = vunpack.c.l.b16 %v355
      %v502 = vunpack.c.h.b16 %v355
      %v503 = vunpack.c.l.b16 %v356
      %v504 = vunpack.c.h.b16 %v356
      %v505 = vunpack.c.l.b16 %v357
      %v506 = vunpack.c.h.b16 %v357
      %v507 = vunpack.c.l.b16 %v358
      %v508 = vunpack.c.h.b16 %v358
      %v509 = vunpack.c.l.b16 %v359
      %v510 = vunpack.c.h.b16 %v359
      %v511 = vunpack.c.l.b16 %v360
      %v512 = vunpack.c.h.b16 %v360
      %v513 = vunpack.c.l.b16 %v361
      %v514 = vunpack.c.h.b16 %v361
      %v515 = vunpack.c.l.b16 %v362
      %v516 = vunpack.c.h.b16 %v362
      %v517 = vunpack.c.l.b16 %v363
      %v518 = vunpack.c.h.b16 %v363
      %v519 = vunpack.c.l.b16 %v364
      %v520 = vunpack.c.h.b16 %v364
      %v521 = vunpack.c.l.b16 %v365
      %v522 = vunpack.c.h.b16 %v365
      %v523 = vunpack.c.l.b16 %v366
      %v524 = vunpack.c.h.b16 %v366
      %v525 = vunpack.c.l.b16 %v367
      %v526 = vunpack.c.h.b16 %v367
      %v527 = vunpack.c.l.b16 %v368
      %v528 = vunpack.c.h.b16 %v368
      %v529 = vunpack.c.l.b16 %v369
      %v530 = vunpack.c.h.b16 %v369
      %v531 = vunpack.c.l.b16 %v370
      %v532 = vunpack.c.h.b16 %v370
      %v533 = vunpack.c.l.b16 %v371
      %v534 = vunpack.c.h.b16 %v371
      %v535 = vunpack.c.l.b16 %v372
      %v536 = vunpack.c.h.b16 %v372
      %v537 = vunpack.c.l.b16 %v373
      %v538 = vunpack.c.h.b16 %v373
      %v539 = vunpack.c.l.b16 %v374
      %v540 = vunpack.c.h.b16 %v374
      %v541 = vunpack.c.l.b16 %v375
      %v542 = vunpack.c.h.b16 %v375
      %v543 = vunpack.c.l.b16 %v376
      %v544 = vunpack.c.h.b16 %v376
      %v545 = vunpack.c.l.b16 %v377
      %v546 = vunpack.c.h.b16 %v377
      %v547 = vunpack.c.l.b16 %v378
      %v548 = vunpack.c.h.b16 %v378
      %v549 = vunpack.c.l.b16 %v379
      %v550 = vunpack.c.h.b16 %v379
      %v551 = vunpack.c.l.b16 %v380
      %v552 = vunpack.c.h.b16 %v380
      %v553 = vunpack.c.l.b16 %v381
      %v554 = vunpack.c.h.b16 %v381
      %v555 = vunpack.c.l.b16 %v382
      %v556 = vunpack.c.h.b16 %v382
      %v557 = vunpack.c.l.b16 %v383
      %v558 = vunpack.c.h.b16 %v383
      %v559 = vunpack.c.l.b16 %v384
      %v560 = vunpack.c.h.b16 %v384
      %v561 = vunpack.c.l.b16 %v385
      %v562 = vunpack.c.h.b16 %v385
      %v563 = vunpack.c.l.b16 %v386
      %v564 = vunpack.c.h.b16 %v386
      %v565 = vunpack.c.l.b16 %v387
      %v566 = vunpack.c.h.b16 %v387
      %v567 = vunpack.c.l.b16 %v388
      %v568 = vunpack.c.h.b16 %v388
      %v569 = vunpack.c.l.b16 %v389
      %v570 = vunpack.c.h.b16 %v389
      %v571 = vunpack.c.l.b16 %v390
      %v572 = vunpack.c.h.b16 %v390
      %v573 = vunpack.c.l.b16 %v391
      %v574 = vunpack.c.h.b16 %v391
      %v575 = vunpack.c.l.b16 %v392
      %v576 = vunpack.c.h.b16 %v392
      %v577 = vunpack.c.l.b16 %v393
      %v578 = vunpack.c.h.b16 %v393
      %v579 = vunpack.c.l.b16 %v394
      %v580 = vunpack.c.h.b16 %v394
      %v581 = vunpack.c.l.b16 %v395
      %v582 = vunpack.c.h.b16 %v395
      %v583 = vunpack.c.l.b16 %v396
      %v584 = vunpack.c.h.b16 %v396
      %v585 = vunpack.c.l.b16 %v397
      %v586 = vunpack.c.h.b16 %v397
      %v587 = vunpack.c.l.b16 %v398
      %v588 = vunpack.c.h.b16 %v398
      %v589 = vunpack.c.l.b16 %v399
      %v590 = vunpack.c.h.b16 %v399
      %v591 = vunpack.c.l.b16 %v400
      %v592 = vunpack.c.h.b16 %v400
      %v593 = vunpack.c.l.b16 %v401
      %v594 = vunpack.c.h.b16 %v401
      %v595 = vunpack.c.l.b16 %v402
      %v596 = vunpack.c.h.b16 %v402
      %v597 = vunpack.c.l.b16 %v403
      %v598 = vunpack.c.h.b16 %v403
      %v599 = vunpack.c.l.b16 %v404
      %v600 = vunpack.c.h.b16 %v404
      %v601 = vunpack.c.l.b16 %v405
      %v602 = vunpack.c.h.b16 %v405
      %v603 = vunpack.c.l.b16 %v406
      %v604 = vunpack.c.h.b16 %v406
      %v605 = vpack.c.b16 %v481, %v477
      %v606 = vpack.c.b16 %v482, %v478
      %v607 = vpack.c.b16 %v483, %v479
      %v608 = vpack.c.b16 %v484, %v480
      %v609 = vpack.c.b16 %v489, %v485
      %v610 = vpack.c.b16 %v490, %v486
      %v611 = vpack.c.b16 %v491, %v487
      %v612 = vpack.c.b16 %v492, %v488
      %v613 = vpack.c.b16 %v497, %v493
      %v614 = vpack.c.b16 %v498, %v494
      %v615 = vpack.c.b16 %v499, %v495
      %v616 = vpack.c.b16 %v500, %v496
      %v617 = vpack.c.b16 %v505, %v501
      %v618 = vpack.c.b16 %v506, %v502
      %v619 = vpack.c.b16 %v507, %v503
      %v620 = vpack.c.b16 %v508, %v504
      %v621 = vpack.c.b16 %v513, %v509
      %v622 = vpack.c.b16 %v514, %v510
      %v623 = vpack.c.b16 %v515, %v511
      %v624 = vpack.c.b16 %v516, %v512
      %v625 = vpack.c.b16 %v521, %v517
      %v626 = vpack.c.b16 %v522, %v518
      %v627 = vpack.c.b16 %v523, %v519
      %v628 = vpack.c.b16 %v524, %v520
      %v629 = vpack.c.b16 %v529, %v525
      %v630 = vpack.c.b16 %v530, %v526
      %v631 = vpack.c.b16 %v531, %v527
      %v632 = vpack.c.b16 %v532, %v528
      %v633 = vpack.c.b16 %v537, %v533
      %v634 = vpack.c.b16 %v538, %v534
      %v635 = vpack.c.b16 %v539, %v535
      %v636 = vpack.c.b16 %v540, %v536
      %v637 = vpack.c.b16 %v545, %v541
      %v638 = vpack.c.b16 %v546, %v542
      %v639 = vpack.c.b16 %v547, %v543
      %v640 = vpack.c.b16 %v548, %v544
      %v641 = vpack.c.b16 %v553, %v549
      %v642 = vpack.c.b16 %v554, %v550
      %v643 = vpack.c.b16 %v555, %v551
      %v644 = vpack.c.b16 %v556, %v552
      %v645 = vpack.c.b16 %v561, %v557
      %v646 = vpack.c.b16 %v562, %v558
      %v647 = vpack.c.b16 %v563, %v559
      %v648 = vpack.c.b16 %v564, %v560
      %v649 = vpack.c.b16 %v569, %v565
      %v650 = vpack.c.b16 %v570, %v566
      %v651 = vpack.c.b16 %v571, %v567
      %v652 = vpack.c.b16 %v572, %v568
      %v653 = vpack.c.b16 %v577, %v573
      %v654 = vpack.c.b16 %v578, %v574
      %v655 = vpack.c.b16 %v579, %v575
      %v656 = vpack.c.b16 %v580, %v576
      %v657 = vpack.c.b16 %v585, %v581
      %v658 = vpack.c.b16 %v586, %v582
      %v659 = vpack.c.b16 %v587, %v583
      %v660 = vpack.c.b16 %v588, %v584
      %v661 = vpack.c.b16 %v593, %v589
      %v662 = vpack.c.b16 %v594, %v590
      %v663 = vpack.c.b16 %v595, %v591
      %v664 = vpack.c.b16 %v596, %v592
      %v665 = vpack.c.b16 %v601, %v597
      %v666 = vpack.c.b16 %v602, %v598
      %v667 = vpack.c.b16 %v603, %v599
      %v668 = vpack.c.b16 %v604, %v600
      %733 = vmatprep.subr.bf16.mxu0 %v606
      %734 = vmatpush1.bf16.msra.mxu0 %v605
      %735 = vmatprep.subr.bf16.mxu0 %v610
      %736 = vmatpush1.bf16.msra.mxu0 %v609
      %737 = vmatprep.subr.bf16.mxu0 %v614
      %738 = vmatpush1.bf16.msra.mxu0 %v613
      %739 = vmatprep.subr.bf16.mxu0 %v618
      %740 = vmatpush1.bf16.msra.mxu0 %v617
      %741 = vmatprep.subr.bf16.mxu0 %v622
      %742 = vmatpush1.bf16.msra.mxu0 %v621
      %743 = vmatprep.subr.bf16.mxu0 %v626
      %744 = vmatpush1.bf16.msra.mxu0 %v625
      %745 = vmatprep.subr.bf16.mxu0 %v630
      %746 = vmatpush1.bf16.msra.mxu0 %v629
      %747 = vmatprep.subr.bf16.mxu0 %v634
      %748 = vmatpush1.bf16.msra.mxu0 %v633
      %749 = vmatprep.subr.bf16.mxu0 %v638
      %750 = vmatpush1.bf16.msra.mxu0 %v637
      %751 = vmatprep.subr.bf16.mxu0 %v642
      %752 = vmatpush1.bf16.msra.mxu0 %v641
      %753 = vmatprep.subr.bf16.mxu0 %v646
      %754 = vmatpush1.bf16.msra.mxu0 %v645
      %755 = vmatprep.subr.bf16.mxu0 %v650
      %756 = vmatpush1.bf16.msra.mxu0 %v649
      %757 = vmatprep.subr.bf16.mxu0 %v654
      %758 = vmatpush1.bf16.msra.mxu0 %v653
      %759 = vmatprep.subr.bf16.mxu0 %v658
      %760 = vmatpush1.bf16.msra.mxu0 %v657
      %761 = vmatprep.subr.bf16.mxu0 %v662
      %762 = vmatpush1.bf16.msra.mxu0 %v661
      %763 = vmatprep.subr.bf16.mxu0 %v666
      %764 = vmatpush1.bf16.msra.mxu0 %v665
      %765 = vmatprep.mubr.bf16.mxu0 %v412
      %766 = vmatmul.mubr.bf16.gmra.mrb[0].mxu0 %v411
      %v767 = vpop.f32.mrb[0].mxu0
      %v768 = vadd.f32 0.0, %v767
      %v769 = vpop.f32.mrb[0].mxu0
      %v770 = vadd.f32 0.0, %v769
      %v771 = vpop.f32.mrb[0].mxu0
      %v772 = vpop.f32.mrb[0].mxu0
      %773 = vdwg.mxu0
      %774 = vmatprep.subr.bf16.mxu0 %v608
      %775 = vmatpush1.bf16.msra.mxu0 %v607
      %776 = vmatprep.subr.bf16.mxu0 %v612
      %777 = vmatpush1.bf16.msra.mxu0 %v611
      %778 = vmatprep.subr.bf16.mxu0 %v616
      %779 = vmatpush1.bf16.msra.mxu0 %v615
      %780 = vmatprep.subr.bf16.mxu0 %v620
      %781 = vmatpush1.bf16.msra.mxu0 %v619
      %782 = vmatprep.subr.bf16.mxu0 %v624
      %783 = vmatpush1.bf16.msra.mxu0 %v623
      %784 = vmatprep.subr.bf16.mxu0 %v628
      %785 = vmatpush1.bf16.msra.mxu0 %v627
      %786 = vmatprep.subr.bf16.mxu0 %v632
      %787 = vmatpush1.bf16.msra.mxu0 %v631
      %788 = vmatprep.subr.bf16.mxu0 %v636
      %789 = vmatpush1.bf16.msra.mxu0 %v635
      %790 = vmatprep.subr.bf16.mxu0 %v640
      %791 = vmatpush1.bf16.msra.mxu0 %v639
      %792 = vmatprep.subr.bf16.mxu0 %v644
      %793 = vmatpush1.bf16.msra.mxu0 %v643
      %794 = vmatprep.subr.bf16.mxu0 %v648
      %795 = vmatpush1.bf16.msra.mxu0 %v647
      %796 = vmatprep.subr.bf16.mxu0 %v652
      %797 = vmatpush1.bf16.msra.mxu0 %v651
      %798 = vmatprep.subr.bf16.mxu0 %v656
      %799 = vmatpush1.bf16.msra.mxu0 %v655
      %800 = vmatprep.subr.bf16.mxu0 %v660
      %801 = vmatpush1.bf16.msra.mxu0 %v659
      %802 = vmatprep.subr.bf16.mxu0 %v664
      %803 = vmatpush1.bf16.msra.mxu0 %v663
      %804 = vmatprep.subr.bf16.mxu0 %v668
      %805 = vmatpush1.bf16.msra.mxu0 %v667
      %806 = vmatprep.mubr.bf16.mxu0 %v412
      %807 = vmatmul.mubr.bf16.gmra.mrb[0].mxu0 %v411
      %v808 = vpop.f32.mrb[0].mxu0
      %v809 = vadd.f32 0.0, %v808
      %v810 = vpop.f32.mrb[0].mxu0
      %v811 = vadd.f32 0.0, %v810
      %v812 = vpop.f32.mrb[0].mxu0
      %v813 = vpop.f32.mrb[0].mxu0
      %814 = vdwg.mxu0
      %vm815 = vcmask 31744
      %v817 = vsel %vm815, %v330, 0
      %v820 = vsel %vm815, %v331, 0
      %v823 = vsel %vm815, %v332, 0
      %v826 = vsel %vm815, %v333, 0
      %vm828 = vcmask 1043456
      %v830 = vsel %vm828, %v768, 0
      %v833 = vsel %vm828, %v770, 0
      %835 = vmatprep.subr.mxu0 %v833
      %836 = vmatpush1.msra.mxu0 %v830
      %837 = vmatprep.subr.mxu0 0.0
      %838 = vmatpush1.msra.mxu0 0.0
      %839 = vmatprep.subr.mxu0 0.0
      %840 = vmatpush1.msra.mxu0 0.0
      %841 = vmatprep.subr.mxu0 0.0
      %842 = vmatpush1.msra.mxu0 0.0
      %843 = vmatprep.subr.mxu0 0.0
      %844 = vmatpush1.msra.mxu0 0.0
      %845 = vmatprep.subr.mxu0 0.0
      %846 = vmatpush1.msra.mxu0 0.0
      %847 = vmatprep.subr.mxu0 0.0
      %848 = vmatpush1.msra.mxu0 0.0
      %849 = vmatprep.subr.mxu0 0.0
      %850 = vmatpush1.msra.mxu0 0.0
      %851 = vmatprep.subr.mxu0 0.0
      %852 = vmatpush1.msra.mxu0 0.0
      %853 = vmatprep.subr.mxu0 0.0
      %854 = vmatpush1.msra.mxu0 0.0
      %855 = vmatprep.subr.mxu0 0.0
      %856 = vmatpush1.msra.mxu0 0.0
      %857 = vmatprep.subr.mxu0 0.0
      %858 = vmatpush1.msra.mxu0 0.0
      %859 = vmatprep.subr.mxu0 0.0
      %860 = vmatpush1.msra.mxu0 0.0
      %861 = vmatprep.subr.mxu0 0.0
      %862 = vmatpush1.msra.mxu0 0.0
      %863 = vmatprep.subr.mxu0 0.0
      %864 = vmatpush1.msra.mxu0 0.0
      %865 = vmatprep.subr.mxu0 0.0
      %866 = vmatpush1.msra.mxu0 0.0
      %867 = vmatprep.subr.mxu0 0.0
      %868 = vmatpush1.msra.mxu0 0.0
      %869 = vmatprep.subr.mxu0 0.0
      %870 = vmatpush1.msra.mxu0 0.0
      %871 = vmatprep.subr.mxu0 0.0
      %872 = vmatpush1.msra.mxu0 0.0
      %873 = vmatprep.subr.mxu0 0.0
      %874 = vmatpush1.msra.mxu0 0.0
      %875 = vmatprep.subr.mxu0 0.0
      %876 = vmatpush1.msra.mxu0 0.0
      %877 = vmatprep.subr.mxu0 0.0
      %878 = vmatpush1.msra.mxu0 0.0
      %879 = vmatprep.subr.mxu0 0.0
      %880 = vmatpush1.msra.mxu0 0.0
      %881 = vmatprep.subr.mxu0 0.0
      %882 = vmatpush1.msra.mxu0 0.0
      %883 = vmatprep.subr.mxu0 0.0
      %884 = vmatpush1.msra.mxu0 0.0
      %885 = vmatprep.subr.mxu0 0.0
      %886 = vmatpush1.msra.mxu0 0.0
      %887 = vmatprep.subr.mxu0 0.0
      %888 = vmatpush1.msra.mxu0 0.0
      %889 = vmatprep.subr.mxu0 0.0
      %890 = vmatpush1.msra.mxu0 0.0
      %891 = vmatprep.subr.mxu0 0.0
      %892 = vmatpush1.msra.mxu0 0.0
      %893 = vmatprep.subr.mxu0 0.0
      %894 = vmatpush1.msra.mxu0 0.0
      %895 = vmatprep.subr.mxu0 0.0
      %896 = vmatpush1.msra.mxu0 0.0
      %897 = vmatprep.subr.mxu0 0.0
      %898 = vmatpush1.msra.mxu0 0.0
      %899 = vmatprep.mubr.f32.mxu0 0.0
      %900 = vmatmul.mubr.f32.gmra.mrb[0].mxu0 %v817
      %v901 = vpop.f32.mrb[0].mxu0
      %v902 = vadd.f32 0.0, %v901
      %v903 = vpop.f32.mrb[0].mxu0
      %v904 = vadd.f32 0.0, %v903
      %905 = vmatprep.mubr.f32.mxu0 0.0
      %906 = vmatmul.mubr.f32.gmra.mrb[0].mxu0 %v820
      %v907 = vpop.f32.mrb[0].mxu0
      %v908 = vadd.f32 0.0, %v907
      %v909 = vpop.f32.mrb[0].mxu0
      %v910 = vadd.f32 0.0, %v909
      %911 = vmatprep.mubr.f32.mxu0 0.0
      %912 = vmatmul.mubr.f32.gmra.mrb[0].mxu0 %v823
      %v913 = vpop.f32.mrb[0].mxu0
      %v914 = vadd.f32 0.0, %v913
      %v915 = vpop.f32.mrb[0].mxu0
      %v916 = vadd.f32 0.0, %v915
      %917 = vmatprep.mubr.f32.mxu0 0.0
      %918 = vmatmul.mubr.f32.gmra.mrb[0].mxu0 %v826
      %v919 = vpop.f32.mrb[0].mxu0
      %v920 = vadd.f32 0.0, %v919
      %v921 = vpop.f32.mrb[0].mxu0
      %v922 = vadd.f32 0.0, %v921
      %923 = vdwg.mxu0
      %v925 = vsel %vm815, %v326, 0
      %v928 = vsel %vm815, %v327, 0
      %v931 = vsel %vm815, %v328, 0
      %v934 = vsel %vm815, %v329, 0
      %v936 = vsel %vm828, %v407, 0
      %v938 = vsel %vm828, %v409, 0
      %940 = vmatprep.subr.mxu0 %v938
      %941 = vmatpush1.msra.mxu0 %v936
      %942 = vmatprep.subr.mxu0 0.0
      %943 = vmatpush1.msra.mxu0 0.0
      %944 = vmatprep.subr.mxu0 0.0
      %945 = vmatpush1.msra.mxu0 0.0
      %946 = vmatprep.subr.mxu0 0.0
      %947 = vmatpush1.msra.mxu0 0.0
      %948 = vmatprep.subr.mxu0 0.0
      %949 = vmatpush1.msra.mxu0 0.0
      %950 = vmatprep.subr.mxu0 0.0
      %951 = vmatpush1.msra.mxu0 0.0
      %952 = vmatprep.subr.mxu0 0.0
      %953 = vmatpush1.msra.mxu0 0.0
      %954 = vmatprep.subr.mxu0 0.0
      %955 = vmatpush1.msra.mxu0 0.0
      %956 = vmatprep.subr.mxu0 0.0
      %957 = vmatpush1.msra.mxu0 0.0
      %958 = vmatprep.subr.mxu0 0.0
      %959 = vmatpush1.msra.mxu0 0.0
      %960 = vmatprep.subr.mxu0 0.0
      %961 = vmatpush1.msra.mxu0 0.0
      %962 = vmatprep.subr.mxu0 0.0
      %963 = vmatpush1.msra.mxu0 0.0
      %964 = vmatprep.subr.mxu0 0.0
      %965 = vmatpush1.msra.mxu0 0.0
      %966 = vmatprep.subr.mxu0 0.0
      %967 = vmatpush1.msra.mxu0 0.0
      %968 = vmatprep.subr.mxu0 0.0
      %969 = vmatpush1.msra.mxu0 0.0
      %970 = vmatprep.subr.mxu0 0.0
      %971 = vmatpush1.msra.mxu0 0.0
      %972 = vmatprep.subr.mxu0 0.0
      %973 = vmatpush1.msra.mxu0 0.0
      %974 = vmatprep.subr.mxu0 0.0
      %975 = vmatpush1.msra.mxu0 0.0
      %976 = vmatprep.subr.mxu0 0.0
      %977 = vmatpush1.msra.mxu0 0.0
      %978 = vmatprep.subr.mxu0 0.0
      %979 = vmatpush1.msra.mxu0 0.0
      %980 = vmatprep.subr.mxu0 0.0
      %981 = vmatpush1.msra.mxu0 0.0
      %982 = vmatprep.subr.mxu0 0.0
      %983 = vmatpush1.msra.mxu0 0.0
      %984 = vmatprep.subr.mxu0 0.0
      %985 = vmatpush1.msra.mxu0 0.0
      %986 = vmatprep.subr.mxu0 0.0
      %987 = vmatpush1.msra.mxu0 0.0
      %988 = vmatprep.subr.mxu0 0.0
      %989 = vmatpush1.msra.mxu0 0.0
      %990 = vmatprep.subr.mxu0 0.0
      %991 = vmatpush1.msra.mxu0 0.0
      %992 = vmatprep.subr.mxu0 0.0
      %993 = vmatpush1.msra.mxu0 0.0
      %994 = vmatprep.subr.mxu0 0.0
      %995 = vmatpush1.msra.mxu0 0.0
      %996 = vmatprep.subr.mxu0 0.0
      %997 = vmatpush1.msra.mxu0 0.0
      %998 = vmatprep.subr.mxu0 0.0
      %999 = vmatpush1.msra.mxu0 0.0
      %1000 = vmatprep.subr.mxu0 0.0
      %1001 = vmatpush1.msra.mxu0 0.0
      %1002 = vmatprep.subr.mxu0 0.0
      %1003 = vmatpush1.msra.mxu0 0.0
      %1004 = vmatprep.mubr.f32.mxu0 0.0
      %1005 = vmatmul.mubr.f32.gmra.mrb[0].mxu0 %v925
      %v1006 = vpop.f32.mrb[0].mxu0
      %v1007 = vadd.f32 %v902, %v1006
      %v1008 = vpop.f32.mrb[0].mxu0
      %v1009 = vadd.f32 %v904, %v1008
      %1010 = vmatprep.mubr.f32.mxu0 0.0
      %1011 = vmatmul.mubr.f32.gmra.mrb[0].mxu0 %v928
      %v1012 = vpop.f32.mrb[0].mxu0
      %v1013 = vadd.f32 %v908, %v1012
      %v1014 = vpop.f32.mrb[0].mxu0
      %v1015 = vadd.f32 %v910, %v1014
      %1016 = vmatprep.mubr.f32.mxu0 0.0
      %1017 = vmatmul.mubr.f32.gmra.mrb[0].mxu0 %v931
      %v1018 = vpop.f32.mrb[0].mxu0
      %v1019 = vadd.f32 %v914, %v1018
      %v1020 = vpop.f32.mrb[0].mxu0
      %v1021 = vadd.f32 %v916, %v1020
      %1022 = vmatprep.mubr.f32.mxu0 0.0
      %1023 = vmatmul.mubr.f32.gmra.mrb[0].mxu0 %v934
      %v1024 = vpop.f32.mrb[0].mxu0
      %v1025 = vadd.f32 %v920, %v1024
      %v1026 = vpop.f32.mrb[0].mxu0
      %v1027 = vadd.f32 %v922, %v1026
      %1028 = vdwg.mxu0
      %v1030 = vsel %vm815, %v334, 0
      %v1033 = vsel %vm815, %v335, 0
      %v1036 = vsel %vm815, %v336, 0
      %v1039 = vsel %vm815, %v337, 0
      %v1042 = vsel %vm828, %v809, 0
      %v1045 = vsel %vm828, %v811, 0
      %1047 = vmatprep.subr.mxu0 %v1045
      %1048 = vmatpush1.msra.mxu0 %v1042
      %1049 = vmatprep.subr.mxu0 0.0
      %1050 = vmatpush1.msra.mxu0 0.0
      %1051 = vmatprep.subr.mxu0 0.0
      %1052 = vmatpush1.msra.mxu0 0.0
      %1053 = vmatprep.subr.mxu0 0.0
      %1054 = vmatpush1.msra.mxu0 0.0
      %1055 = vmatprep.subr.mxu0 0.0
      %1056 = vmatpush1.msra.mxu0 0.0
      %1057 = vmatprep.subr.mxu0 0.0
      %1058 = vmatpush1.msra.mxu0 0.0
      %1059 = vmatprep.subr.mxu0 0.0
      %1060 = vmatpush1.msra.mxu0 0.0
      %1061 = vmatprep.subr.mxu0 0.0
      %1062 = vmatpush1.msra.mxu0 0.0
      %1063 = vmatprep.subr.mxu0 0.0
      %1064 = vmatpush1.msra.mxu0 0.0
      %1065 = vmatprep.subr.mxu0 0.0
      %1066 = vmatpush1.msra.mxu0 0.0
      %1067 = vmatprep.subr.mxu0 0.0
      %1068 = vmatpush1.msra.mxu0 0.0
      %1069 = vmatprep.subr.mxu0 0.0
      %1070 = vmatpush1.msra.mxu0 0.0
      %1071 = vmatprep.subr.mxu0 0.0
      %1072 = vmatpush1.msra.mxu0 0.0
      %1073 = vmatprep.subr.mxu0 0.0
      %1074 = vmatpush1.msra.mxu0 0.0
      %1075 = vmatprep.subr.mxu0 0.0
      %1076 = vmatpush1.msra.mxu0 0.0
      %1077 = vmatprep.subr.mxu0 0.0
      %1078 = vmatpush1.msra.mxu0 0.0
      %1079 = vmatprep.subr.mxu0 0.0
      %1080 = vmatpush1.msra.mxu0 0.0
      %1081 = vmatprep.subr.mxu0 0.0
      %1082 = vmatpush1.msra.mxu0 0.0
      %1083 = vmatprep.subr.mxu0 0.0
      %1084 = vmatpush1.msra.mxu0 0.0
      %1085 = vmatprep.subr.mxu0 0.0
      %1086 = vmatpush1.msra.mxu0 0.0
      %1087 = vmatprep.subr.mxu0 0.0
      %1088 = vmatpush1.msra.mxu0 0.0
      %1089 = vmatprep.subr.mxu0 0.0
      %1090 = vmatpush1.msra.mxu0 0.0
      %1091 = vmatprep.subr.mxu0 0.0
      %1092 = vmatpush1.msra.mxu0 0.0
      %1093 = vmatprep.subr.mxu0 0.0
      %1094 = vmatpush1.msra.mxu0 0.0
      %1095 = vmatprep.subr.mxu0 0.0
      %1096 = vmatpush1.msra.mxu0 0.0
      %1097 = vmatprep.subr.mxu0 0.0
      %1098 = vmatpush1.msra.mxu0 0.0
      %1099 = vmatprep.subr.mxu0 0.0
      %1100 = vmatpush1.msra.mxu0 0.0
      %1101 = vmatprep.subr.mxu0 0.0
      %1102 = vmatpush1.msra.mxu0 0.0
      %1103 = vmatprep.subr.mxu0 0.0
      %1104 = vmatpush1.msra.mxu0 0.0
      %1105 = vmatprep.subr.mxu0 0.0
      %1106 = vmatpush1.msra.mxu0 0.0
      %1107 = vmatprep.subr.mxu0 0.0
      %1108 = vmatpush1.msra.mxu0 0.0
      %1109 = vmatprep.subr.mxu0 0.0
      %1110 = vmatpush1.msra.mxu0 0.0
      %1111 = vmatprep.mubr.f32.mxu0 0.0
      %1112 = vmatmul.mubr.f32.gmra.mrb[0].mxu0 %v1030
      %v1113 = vpop.f32.mrb[0].mxu0
      %v1114 = vadd.f32 0.0, %v1113
      %v1115 = vpop.f32.mrb[0].mxu0
      %v1116 = vadd.f32 0.0, %v1115
      %1117 = vmatprep.mubr.f32.mxu0 0.0
      %1118 = vmatmul.mubr.f32.gmra.mrb[0].mxu0 %v1033
      %v1119 = vpop.f32.mrb[0].mxu0
      %v1120 = vadd.f32 0.0, %v1119
      %v1121 = vpop.f32.mrb[0].mxu0
      %v1122 = vadd.f32 0.0, %v1121
      %1123 = vmatprep.mubr.f32.mxu0 0.0
      %1124 = vmatmul.mubr.f32.gmra.mrb[0].mxu0 %v1036
      %v1125 = vpop.f32.mrb[0].mxu0
      %v1126 = vadd.f32 0.0, %v1125
      %v1127 = vpop.f32.mrb[0].mxu0
      %v1128 = vadd.f32 0.0, %v1127
      %1129 = vmatprep.mubr.f32.mxu0 0.0
      %1130 = vmatmul.mubr.f32.gmra.mrb[0].mxu0 %v1039
      %v1131 = vpop.f32.mrb[0].mxu0
      %v1132 = vadd.f32 0.0, %v1131
      %v1133 = vpop.f32.mrb[0].mxu0
      %v1134 = vadd.f32 0.0, %v1133
      %1135 = vdwg.mxu0
      %v1136 = vadd.f32 %v1007, %v1114
      %v1137 = vadd.f32 %v1009, %v1116
      %v1138 = vadd.f32 %v1013, %v1120
      %v1139 = vadd.f32 %v1015, %v1122
      %v1140 = vadd.f32 %v1019, %v1126
      %v1141 = vadd.f32 %v1021, %v1128
      %v1142 = vadd.f32 %v1025, %v1132
      %v1143 = vadd.f32 %v1027, %v1134
      %1145 = vset.pattern.permute.xlu0 0
      %1146 = vperm.xlu0 %1145, %v338
      %v1147 = vpop.permute.xlu0 %1146
      %1150 = vset.pattern.permute.xlu0 0
      %1151 = vperm.xlu0 %1150, %v339
      %v1152 = vpop.permute.xlu0 %1151
      %1155 = vset.pattern.permute.xlu0 0
      %1156 = vperm.xlu0 %1155, %v340
      %v1157 = vpop.permute.xlu0 %1156
      %1160 = vset.pattern.permute.xlu0 0
      %1161 = vperm.xlu0 %1160, %v341
      %v1162 = vpop.permute.xlu0 %1161
      %v1164 = vadd.f32 %v1136, %v1147
      %v1165 = vadd.f32 %v1137, %v1147
      %v1166 = vadd.f32 %v1138, %v1152
      %v1167 = vadd.f32 %v1139, %v1152
      %v1168 = vadd.f32 %v1140, %v1157
      %v1169 = vadd.f32 %v1141, %v1157
      %v1170 = vadd.f32 %v1142, %v1162
      %v1171 = vadd.f32 %v1143, %v1162
      %v1172 = vmax.f32 %v1164, 0.0
      %v1173 = vmax.f32 %v1165, 0.0
      %v1174 = vmax.f32 %v1166, 0.0
      %v1175 = vmax.f32 %v1167, 0.0
      %v1176 = vmax.f32 %v1168, 0.0
      %v1177 = vmax.f32 %v1169, 0.0
      %v1178 = vmax.f32 %v1170, 0.0
      %v1179 = vmax.f32 %v1171, 0.0
      %vm1180 = vcmask 261120
      %v1182 = vsel %vm1180, %v342, 0
      %1184 = vmatprep.subr.mxu0 %v1173
      %1185 = vmatpush1.msra.mxu0 %v1172
      %1186 = vmatprep.subr.mxu0 %v1175
      %1187 = vmatpush1.msra.mxu0 %v1174
      %1188 = vmatprep.subr.mxu0 %v1177
      %1189 = vmatpush1.msra.mxu0 %v1176
      %1190 = vmatprep.subr.mxu0 %v1179
      %1191 = vmatpush1.msra.mxu0 %v1178
      %1192 = vmatprep.subr.mxu0 0.0
      %1193 = vmatpush1.msra.mxu0 0.0
      %1194 = vmatprep.subr.mxu0 0.0
      %1195 = vmatpush1.msra.mxu0 0.0
      %1196 = vmatprep.subr.mxu0 0.0
      %1197 = vmatpush1.msra.mxu0 0.0
      %1198 = vmatprep.subr.mxu0 0.0
      %1199 = vmatpush1.msra.mxu0 0.0
      %1200 = vmatprep.subr.mxu0 0.0
      %1201 = vmatpush1.msra.mxu0 0.0
      %1202 = vmatprep.subr.mxu0 0.0
      %1203 = vmatpush1.msra.mxu0 0.0
      %1204 = vmatprep.subr.mxu0 0.0
      %1205 = vmatpush1.msra.mxu0 0.0
      %1206 = vmatprep.subr.mxu0 0.0
      %1207 = vmatpush1.msra.mxu0 0.0
      %1208 = vmatprep.subr.mxu0 0.0
      %1209 = vmatpush1.msra.mxu0 0.0
      %1210 = vmatprep.subr.mxu0 0.0
      %1211 = vmatpush1.msra.mxu0 0.0
      %1212 = vmatprep.subr.mxu0 0.0
      %1213 = vmatpush1.msra.mxu0 0.0
      %1214 = vmatprep.subr.mxu0 0.0
      %1215 = vmatpush1.msra.mxu0 0.0
      %1216 = vmatprep.subr.mxu0 0.0
      %1217 = vmatpush1.msra.mxu0 0.0
      %1218 = vmatprep.subr.mxu0 0.0
      %1219 = vmatpush1.msra.mxu0 0.0
      %1220 = vmatprep.subr.mxu0 0.0
      %1221 = vmatpush1.msra.mxu0 0.0
      %1222 = vmatprep.subr.mxu0 0.0
      %1223 = vmatpush1.msra.mxu0 0.0
      %1224 = vmatprep.subr.mxu0 0.0
      %1225 = vmatpush1.msra.mxu0 0.0
      %1226 = vmatprep.subr.mxu0 0.0
      %1227 = vmatpush1.msra.mxu0 0.0
      %1228 = vmatprep.subr.mxu0 0.0
      %1229 = vmatpush1.msra.mxu0 0.0
      %1230 = vmatprep.subr.mxu0 0.0
      %1231 = vmatpush1.msra.mxu0 0.0
      %1232 = vmatprep.subr.mxu0 0.0
      %1233 = vmatpush1.msra.mxu0 0.0
      %1234 = vmatprep.subr.mxu0 0.0
      %1235 = vmatpush1.msra.mxu0 0.0
      %1236 = vmatprep.subr.mxu0 0.0
      %1237 = vmatpush1.msra.mxu0 0.0
      %1238 = vmatprep.subr.mxu0 0.0
      %1239 = vmatpush1.msra.mxu0 0.0
      %1240 = vmatprep.subr.mxu0 0.0
      %1241 = vmatpush1.msra.mxu0 0.0
      %1242 = vmatprep.subr.mxu0 0.0
      %1243 = vmatpush1.msra.mxu0 0.0
      %1244 = vmatprep.subr.mxu0 0.0
      %1245 = vmatpush1.msra.mxu0 0.0
      %1246 = vmatprep.subr.mxu0 0.0
      %1247 = vmatpush1.msra.mxu0 0.0
      %1248 = vmatprep.mubr.f32.mxu0 0.0
      %1249 = vmatmul.mubr.f32.gmra.mrb[0].mxu0 %v1182
      %v1250 = vpop.f32.mrb[0].mxu0
      %v1251 = vadd.f32 0.0, %v1250
      %v1252 = vpop.f32.mrb[0].mxu0
      %v1253 = vadd.f32 0.0, %v1252
      %1254 = vdwg.mxu0
      %v1255 = vld [vmem:[%s320] ss:$8 sm:$0x3]
      %v1257 = vlaneseq
      %v1258 = vshrl.u32 %v1257, 7
      %v1259 = vsub.s32 0, %v1258
      %v1260 = vrot.slane %v1255, %v1259
      %v1261 = vlaneseq
      %v1262 = vshrl.u32 %v1261, 7
      %v1263 = vsub.s32 1, %v1262
      %v1264 = vrot.slane %v1255, %v1263
      %v1267 = vmul.f32 %v1251, %v1260
      %v1268 = vmul.f32 %v1253, %v1264
      %v1271 = vcombine.low %v1267, %v1268
      %v1273 = vadd.f32 %v407, %v1271
      %v1275 = vcombine.high %v1273, %v1273
      %v1277 = vpack.c.bf16 %v1273, %v1273
      %v1278 = vpack.c.bf16 %v1275, %v1275
      %1279 = vmatprep.subr.bf16.mxu0 %v606
      %1280 = vmatpush1.bf16.msra.mxu0 %v605
      %1281 = vmatprep.subr.bf16.mxu0 %v610
      %1282 = vmatpush1.bf16.msra.mxu0 %v609
      %1283 = vmatprep.subr.bf16.mxu0 %v614
      %1284 = vmatpush1.bf16.msra.mxu0 %v613
      %1285 = vmatprep.subr.bf16.mxu0 %v618
      %1286 = vmatpush1.bf16.msra.mxu0 %v617
      %1287 = vmatprep.subr.bf16.mxu0 %v622
      %1288 = vmatpush1.bf16.msra.mxu0 %v621
      %1289 = vmatprep.subr.bf16.mxu0 %v626
      %1290 = vmatpush1.bf16.msra.mxu0 %v625
      %1291 = vmatprep.subr.bf16.mxu0 %v630
      %1292 = vmatpush1.bf16.msra.mxu0 %v629
      %1293 = vmatprep.subr.bf16.mxu0 %v634
      %1294 = vmatpush1.bf16.msra.mxu0 %v633
      %1295 = vmatprep.subr.bf16.mxu0 %v638
      %1296 = vmatpush1.bf16.msra.mxu0 %v637
      %1297 = vmatprep.subr.bf16.mxu0 %v642
      %1298 = vmatpush1.bf16.msra.mxu0 %v641
      %1299 = vmatprep.subr.bf16.mxu0 %v646
      %1300 = vmatpush1.bf16.msra.mxu0 %v645
      %1301 = vmatprep.subr.bf16.mxu0 %v650
      %1302 = vmatpush1.bf16.msra.mxu0 %v649
      %1303 = vmatprep.subr.bf16.mxu0 %v654
      %1304 = vmatpush1.bf16.msra.mxu0 %v653
      %1305 = vmatprep.subr.bf16.mxu0 %v658
      %1306 = vmatpush1.bf16.msra.mxu0 %v657
      %1307 = vmatprep.subr.bf16.mxu0 %v662
      %1308 = vmatpush1.bf16.msra.mxu0 %v661
      %1309 = vmatprep.subr.bf16.mxu0 %v666
      %1310 = vmatpush1.bf16.msra.mxu0 %v665
      %1311 = vmatprep.mubr.bf16.mxu0 %v1278
      %1312 = vmatmul.mubr.bf16.gmra.mrb[0].mxu0 %v1277
      %v1313 = vpop.f32.mrb[0].mxu0
      %v1314 = vadd.f32 0.0, %v1313
      %v1315 = vpop.f32.mrb[0].mxu0
      %v1316 = vadd.f32 0.0, %v1315
      %v1317 = vpop.f32.mrb[0].mxu0
      %v1318 = vpop.f32.mrb[0].mxu0
      %1319 = vdwg.mxu0
      %1320 = vmatprep.subr.bf16.mxu0 %v608
      %1321 = vmatpush1.bf16.msra.mxu0 %v607
      %1322 = vmatprep.subr.bf16.mxu0 %v612
      %1323 = vmatpush1.bf16.msra.mxu0 %v611
      %1324 = vmatprep.subr.bf16.mxu0 %v616
      %1325 = vmatpush1.bf16.msra.mxu0 %v615
      %1326 = vmatprep.subr.bf16.mxu0 %v620
      %1327 = vmatpush1.bf16.msra.mxu0 %v619
      %1328 = vmatprep.subr.bf16.mxu0 %v624
      %1329 = vmatpush1.bf16.msra.mxu0 %v623
      %1330 = vmatprep.subr.bf16.mxu0 %v628
      %1331 = vmatpush1.bf16.msra.mxu0 %v627
      %1332 = vmatprep.subr.bf16.mxu0 %v632
      %1333 = vmatpush1.bf16.msra.mxu0 %v631
      %1334 = vmatprep.subr.bf16.mxu0 %v636
      %1335 = vmatpush1.bf16.msra.mxu0 %v635
      %1336 = vmatprep.subr.bf16.mxu0 %v640
      %1337 = vmatpush1.bf16.msra.mxu0 %v639
      %1338 = vmatprep.subr.bf16.mxu0 %v644
      %1339 = vmatpush1.bf16.msra.mxu0 %v643
      %1340 = vmatprep.subr.bf16.mxu0 %v648
      %1341 = vmatpush1.bf16.msra.mxu0 %v647
      %1342 = vmatprep.subr.bf16.mxu0 %v652
      %1343 = vmatpush1.bf16.msra.mxu0 %v651
      %1344 = vmatprep.subr.bf16.mxu0 %v656
      %1345 = vmatpush1.bf16.msra.mxu0 %v655
      %1346 = vmatprep.subr.bf16.mxu0 %v660
      %1347 = vmatpush1.bf16.msra.mxu0 %v659
      %1348 = vmatprep.subr.bf16.mxu0 %v664
      %1349 = vmatpush1.bf16.msra.mxu0 %v663
      %1350 = vmatprep.subr.bf16.mxu0 %v668
      %1351 = vmatpush1.bf16.msra.mxu0 %v667
      %1352 = vmatprep.mubr.bf16.mxu0 %v1278
      %1353 = vmatmul.mubr.bf16.gmra.mrb[0].mxu0 %v1277
      %v1354 = vpop.f32.mrb[0].mxu0
      %v1355 = vadd.f32 0.0, %v1354
      %v1356 = vpop.f32.mrb[0].mxu0
      %v1357 = vadd.f32 0.0, %v1356
      %v1358 = vpop.f32.mrb[0].mxu0
      %v1359 = vpop.f32.mrb[0].mxu0
      %1360 = vdwg.mxu0
      %v1362 = vsel %vm828, %v1314, 0
      %v1365 = vsel %vm828, %v1316, 0
      %1367 = vmatprep.subr.mxu0 %v1365
      %1368 = vmatpush1.msra.mxu0 %v1362
      %1369 = vmatprep.subr.mxu0 0.0
      %1370 = vmatpush1.msra.mxu0 0.0
      %1371 = vmatprep.subr.mxu0 0.0
      %1372 = vmatpush1.msra.mxu0 0.0
      %1373 = vmatprep.subr.mxu0 0.0
      %1374 = vmatpush1.msra.mxu0 0.0
      %1375 = vmatprep.subr.mxu0 0.0
      %1376 = vmatpush1.msra.mxu0 0.0
      %1377 = vmatprep.subr.mxu0 0.0
      %1378 = vmatpush1.msra.mxu0 0.0
      %1379 = vmatprep.subr.mxu0 0.0
      %1380 = vmatpush1.msra.mxu0 0.0
      %1381 = vmatprep.subr.mxu0 0.0
      %1382 = vmatpush1.msra.mxu0 0.0
      %1383 = vmatprep.subr.mxu0 0.0
      %1384 = vmatpush1.msra.mxu0 0.0
      %1385 = vmatprep.subr.mxu0 0.0
      %1386 = vmatpush1.msra.mxu0 0.0
      %1387 = vmatprep.subr.mxu0 0.0
      %1388 = vmatpush1.msra.mxu0 0.0
      %1389 = vmatprep.subr.mxu0 0.0
      %1390 = vmatpush1.msra.mxu0 0.0
      %1391 = vmatprep.subr.mxu0 0.0
      %1392 = vmatpush1.msra.mxu0 0.0
      %1393 = vmatprep.subr.mxu0 0.0
      %1394 = vmatpush1.msra.mxu0 0.0
      %1395 = vmatprep.subr.mxu0 0.0
      %1396 = vmatpush1.msra.mxu0 0.0
      %1397 = vmatprep.subr.mxu0 0.0
      %1398 = vmatpush1.msra.mxu0 0.0
      %1399 = vmatprep.subr.mxu0 0.0
      %1400 = vmatpush1.msra.mxu0 0.0
      %1401 = vmatprep.subr.mxu0 0.0
      %1402 = vmatpush1.msra.mxu0 0.0
      %1403 = vmatprep.subr.mxu0 0.0
      %1404 = vmatpush1.msra.mxu0 0.0
      %1405 = vmatprep.subr.mxu0 0.0
      %1406 = vmatpush1.msra.mxu0 0.0
      %1407 = vmatprep.subr.mxu0 0.0
      %1408 = vmatpush1.msra.mxu0 0.0
      %1409 = vmatprep.subr.mxu0 0.0
      %1410 = vmatpush1.msra.mxu0 0.0
      %1411 = vmatprep.subr.mxu0 0.0
      %1412 = vmatpush1.msra.mxu0 0.0
      %1413 = vmatprep.subr.mxu0 0.0
      %1414 = vmatpush1.msra.mxu0 0.0
      %1415 = vmatprep.subr.mxu0 0.0
      %1416 = vmatpush1.msra.mxu0 0.0
      %1417 = vmatprep.subr.mxu0 0.0
      %1418 = vmatpush1.msra.mxu0 0.0
      %1419 = vmatprep.subr.mxu0 0.0
      %1420 = vmatpush1.msra.mxu0 0.0
      %1421 = vmatprep.subr.mxu0 0.0
      %1422 = vmatpush1.msra.mxu0 0.0
      %1423 = vmatprep.subr.mxu0 0.0
      %1424 = vmatpush1.msra.mxu0 0.0
      %1425 = vmatprep.subr.mxu0 0.0
      %1426 = vmatpush1.msra.mxu0 0.0
      %1427 = vmatprep.subr.mxu0 0.0
      %1428 = vmatpush1.msra.mxu0 0.0
      %1429 = vmatprep.subr.mxu0 0.0
      %1430 = vmatpush1.msra.mxu0 0.0
      %1431 = vmatprep.mubr.f32.mxu0 0.0
      %1432 = vmatmul.mubr.f32.gmra.mrb[0].mxu0 %v817
      %v1433 = vpop.f32.mrb[0].mxu0
      %v1434 = vadd.f32 0.0, %v1433
      %v1435 = vpop.f32.mrb[0].mxu0
      %v1436 = vadd.f32 0.0, %v1435
      %1437 = vmatprep.mubr.f32.mxu0 0.0
      %1438 = vmatmul.mubr.f32.gmra.mrb[0].mxu0 %v820
      %v1439 = vpop.f32.mrb[0].mxu0
      %v1440 = vadd.f32 0.0, %v1439
      %v1441 = vpop.f32.mrb[0].mxu0
      %v1442 = vadd.f32 0.0, %v1441
      %1443 = vmatprep.mubr.f32.mxu0 0.0
      %1444 = vmatmul.mubr.f32.gmra.mrb[0].mxu0 %v823
      %v1445 = vpop.f32.mrb[0].mxu0
      %v1446 = vadd.f32 0.0, %v1445
      %v1447 = vpop.f32.mrb[0].mxu0
      %v1448 = vadd.f32 0.0, %v1447
      %1449 = vmatprep.mubr.f32.mxu0 0.0
      %1450 = vmatmul.mubr.f32.gmra.mrb[0].mxu0 %v826
      %v1451 = vpop.f32.mrb[0].mxu0
      %v1452 = vadd.f32 0.0, %v1451
      %v1453 = vpop.f32.mrb[0].mxu0
      %v1454 = vadd.f32 0.0, %v1453
      %1455 = vdwg.mxu0
      %v1456 = vsel %vm828, %v1273, 0
      %v1458 = vsel %vm828, %v1275, 0
      %1460 = vmatprep.subr.mxu0 %v1458
      %1461 = vmatpush1.msra.mxu0 %v1456
      %1462 = vmatprep.subr.mxu0 0.0
      %1463 = vmatpush1.msra.mxu0 0.0
      %1464 = vmatprep.subr.mxu0 0.0
      %1465 = vmatpush1.msra.mxu0 0.0
      %1466 = vmatprep.subr.mxu0 0.0
      %1467 = vmatpush1.msra.mxu0 0.0
      %1468 = vmatprep.subr.mxu0 0.0
      %1469 = vmatpush1.msra.mxu0 0.0
      %1470 = vmatprep.subr.mxu0 0.0
      %1471 = vmatpush1.msra.mxu0 0.0
      %1472 = vmatprep.subr.mxu0 0.0
      %1473 = vmatpush1.msra.mxu0 0.0
      %1474 = vmatprep.subr.mxu0 0.0
      %1475 = vmatpush1.msra.mxu0 0.0
      %1476 = vmatprep.subr.mxu0 0.0
      %1477 = vmatpush1.msra.mxu0 0.0
      %1478 = vmatprep.subr.mxu0 0.0
      %1479 = vmatpush1.msra.mxu0 0.0
      %1480 = vmatprep.subr.mxu0 0.0
      %1481 = vmatpush1.msra.mxu0 0.0
      %1482 = vmatprep.subr.mxu0 0.0
      %1483 = vmatpush1.msra.mxu0 0.0
      %1484 = vmatprep.subr.mxu0 0.0
      %1485 = vmatpush1.msra.mxu0 0.0
      %1486 = vmatprep.subr.mxu0 0.0
      %1487 = vmatpush1.msra.mxu0 0.0
      %1488 = vmatprep.subr.mxu0 0.0
      %1489 = vmatpush1.msra.mxu0 0.0
      %1490 = vmatprep.subr.mxu0 0.0
      %1491 = vmatpush1.msra.mxu0 0.0
      %1492 = vmatprep.subr.mxu0 0.0
      %1493 = vmatpush1.msra.mxu0 0.0
      %1494 = vmatprep.subr.mxu0 0.0
      %1495 = vmatpush1.msra.mxu0 0.0
      %1496 = vmatprep.subr.mxu0 0.0
      %1497 = vmatpush1.msra.mxu0 0.0
      %1498 = vmatprep.subr.mxu0 0.0
      %1499 = vmatpush1.msra.mxu0 0.0
      %1500 = vmatprep.subr.mxu0 0.0
      %1501 = vmatpush1.msra.mxu0 0.0
      %1502 = vmatprep.subr.mxu0 0.0
      %1503 = vmatpush1.msra.mxu0 0.0
      %1504 = vmatprep.subr.mxu0 0.0
      %1505 = vmatpush1.msra.mxu0 0.0
      %1506 = vmatprep.subr.mxu0 0.0
      %1507 = vmatpush1.msra.mxu0 0.0
      %1508 = vmatprep.subr.mxu0 0.0
      %1509 = vmatpush1.msra.mxu0 0.0
      %1510 = vmatprep.subr.mxu0 0.0
      %1511 = vmatpush1.msra.mxu0 0.0
      %1512 = vmatprep.subr.mxu0 0.0
      %1513 = vmatpush1.msra.mxu0 0.0
      %1514 = vmatprep.subr.mxu0 0.0
      %1515 = vmatpush1.msra.mxu0 0.0
      %1516 = vmatprep.subr.mxu0 0.0
      %1517 = vmatpush1.msra.mxu0 0.0
      %1518 = vmatprep.subr.mxu0 0.0
      %1519 = vmatpush1.msra.mxu0 0.0
      %1520 = vmatprep.subr.mxu0 0.0
      %1521 = vmatpush1.msra.mxu0 0.0
      %1522 = vmatprep.subr.mxu0 0.0
      %1523 = vmatpush1.msra.mxu0 0.0
      %1524 = vmatprep.mubr.f32.mxu0 0.0
      %1525 = vmatmul.mubr.f32.gmra.mrb[0].mxu0 %v925
      %v1526 = vpop.f32.mrb[0].mxu0
      %v1527 = vadd.f32 %v1434, %v1526
      %v1528 = vpop.f32.mrb[0].mxu0
      %v1529 = vadd.f32 %v1436, %v1528
      %1530 = vmatprep.mubr.f32.mxu0 0.0
      %1531 = vmatmul.mubr.f32.gmra.mrb[0].mxu0 %v928
      %v1532 = vpop.f32.mrb[0].mxu0
      %v1533 = vadd.f32 %v1440, %v1532
      %v1534 = vpop.f32.mrb[0].mxu0
      %v1535 = vadd.f32 %v1442, %v1534
      %1536 = vmatprep.mubr.f32.mxu0 0.0
      %1537 = vmatmul.mubr.f32.gmra.mrb[0].mxu0 %v931
      %v1538 = vpop.f32.mrb[0].mxu0
      %v1539 = vadd.f32 %v1446, %v1538
      %v1540 = vpop.f32.mrb[0].mxu0
      %v1541 = vadd.f32 %v1448, %v1540
      %1542 = vmatprep.mubr.f32.mxu0 0.0
      %1543 = vmatmul.mubr.f32.gmra.mrb[0].mxu0 %v934
      %v1544 = vpop.f32.mrb[0].mxu0
      %v1545 = vadd.f32 %v1452, %v1544
      %v1546 = vpop.f32.mrb[0].mxu0
      %v1547 = vadd.f32 %v1454, %v1546
      %1548 = vdwg.mxu0
      %v1550 = vsel %vm828, %v1355, 0
      %v1553 = vsel %vm828, %v1357, 0
      %1555 = vmatprep.subr.mxu0 %v1553
      %1556 = vmatpush1.msra.mxu0 %v1550
      %1557 = vmatprep.subr.mxu0 0.0
      %1558 = vmatpush1.msra.mxu0 0.0
      %1559 = vmatprep.subr.mxu0 0.0
      %1560 = vmatpush1.msra.mxu0 0.0
      %1561 = vmatprep.subr.mxu0 0.0
      %1562 = vmatpush1.msra.mxu0 0.0
      %1563 = vmatprep.subr.mxu0 0.0
      %1564 = vmatpush1.msra.mxu0 0.0
      %1565 = vmatprep.subr.mxu0 0.0
      %1566 = vmatpush1.msra.mxu0 0.0
      %1567 = vmatprep.subr.mxu0 0.0
      %1568 = vmatpush1.msra.mxu0 0.0
      %1569 = vmatprep.subr.mxu0 0.0
      %1570 = vmatpush1.msra.mxu0 0.0
      %1571 = vmatprep.subr.mxu0 0.0
      %1572 = vmatpush1.msra.mxu0 0.0
      %1573 = vmatprep.subr.mxu0 0.0
      %1574 = vmatpush1.msra.mxu0 0.0
      %1575 = vmatprep.subr.mxu0 0.0
      %1576 = vmatpush1.msra.mxu0 0.0
      %1577 = vmatprep.subr.mxu0 0.0
      %1578 = vmatpush1.msra.mxu0 0.0
      %1579 = vmatprep.subr.mxu0 0.0
      %1580 = vmatpush1.msra.mxu0 0.0
      %1581 = vmatprep.subr.mxu0 0.0
      %1582 = vmatpush1.msra.mxu0 0.0
      %1583 = vmatprep.subr.mxu0 0.0
      %1584 = vmatpush1.msra.mxu0 0.0
      %1585 = vmatprep.subr.mxu0 0.0
      %1586 = vmatpush1.msra.mxu0 0.0
      %1587 = vmatprep.subr.mxu0 0.0
      %1588 = vmatpush1.msra.mxu0 0.0
      %1589 = vmatprep.subr.mxu0 0.0
      %1590 = vmatpush1.msra.mxu0 0.0
      %1591 = vmatprep.subr.mxu0 0.0
      %1592 = vmatpush1.msra.mxu0 0.0
      %1593 = vmatprep.subr.mxu0 0.0
      %1594 = vmatpush1.msra.mxu0 0.0
      %1595 = vmatprep.subr.mxu0 0.0
      %1596 = vmatpush1.msra.mxu0 0.0
      %1597 = vmatprep.subr.mxu0 0.0
      %1598 = vmatpush1.msra.mxu0 0.0
      %1599 = vmatprep.subr.mxu0 0.0
      %1600 = vmatpush1.msra.mxu0 0.0
      %1601 = vmatprep.subr.mxu0 0.0
      %1602 = vmatpush1.msra.mxu0 0.0
      %1603 = vmatprep.subr.mxu0 0.0
      %1604 = vmatpush1.msra.mxu0 0.0
      %1605 = vmatprep.subr.mxu0 0.0
      %1606 = vmatpush1.msra.mxu0 0.0
      %1607 = vmatprep.subr.mxu0 0.0
      %1608 = vmatpush1.msra.mxu0 0.0
      %1609 = vmatprep.subr.mxu0 0.0
      %1610 = vmatpush1.msra.mxu0 0.0
      %1611 = vmatprep.subr.mxu0 0.0
      %1612 = vmatpush1.msra.mxu0 0.0
      %1613 = vmatprep.subr.mxu0 0.0
      %1614 = vmatpush1.msra.mxu0 0.0
      %1615 = vmatprep.subr.mxu0 0.0
      %1616 = vmatpush1.msra.mxu0 0.0
      %1617 = vmatprep.subr.mxu0 0.0
      %1618 = vmatpush1.msra.mxu0 0.0
      %1619 = vmatprep.mubr.f32.mxu0 0.0
      %1620 = vmatmul.mubr.f32.gmra.mrb[0].mxu0 %v1030
      %v1621 = vpop.f32.mrb[0].mxu0
      %v1622 = vadd.f32 0.0, %v1621
      %v1623 = vpop.f32.mrb[0].mxu0
      %v1624 = vadd.f32 0.0, %v1623
      %1625 = vmatprep.mubr.f32.mxu0 0.0
      %1626 = vmatmul.mubr.f32.gmra.mrb[0].mxu0 %v1033
      %v1627 = vpop.f32.mrb[0].mxu0
      %v1628 = vadd.f32 0.0, %v1627
      %v1629 = vpop.f32.mrb[0].mxu0
      %v1630 = vadd.f32 0.0, %v1629
      %1631 = vmatprep.mubr.f32.mxu0 0.0
      %1632 = vmatmul.mubr.f32.gmra.mrb[0].mxu0 %v1036
      %v1633 = vpop.f32.mrb[0].mxu0
      %v1634 = vadd.f32 0.0, %v1633
      %v1635 = vpop.f32.mrb[0].mxu0
      %v1636 = vadd.f32 0.0, %v1635
      %1637 = vmatprep.mubr.f32.mxu0 0.0
      %1638 = vmatmul.mubr.f32.gmra.mrb[0].mxu0 %v1039
      %v1639 = vpop.f32.mrb[0].mxu0
      %v1640 = vadd.f32 0.0, %v1639
      %v1641 = vpop.f32.mrb[0].mxu0
      %v1642 = vadd.f32 0.0, %v1641
      %1643 = vdwg.mxu0
      %v1644 = vadd.f32 %v1527, %v1622
      %v1645 = vadd.f32 %v1529, %v1624
      %v1646 = vadd.f32 %v1533, %v1628
      %v1647 = vadd.f32 %v1535, %v1630
      %v1648 = vadd.f32 %v1539, %v1634
      %v1649 = vadd.f32 %v1541, %v1636
      %v1650 = vadd.f32 %v1545, %v1640
      %v1651 = vadd.f32 %v1547, %v1642
      %v1652 = vadd.f32 %v1644, %v1147
      %v1653 = vadd.f32 %v1645, %v1147
      %v1654 = vadd.f32 %v1646, %v1152
      %v1655 = vadd.f32 %v1647, %v1152
      %v1656 = vadd.f32 %v1648, %v1157
      %v1657 = vadd.f32 %v1649, %v1157
      %v1658 = vadd.f32 %v1650, %v1162
      %v1659 = vadd.f32 %v1651, %v1162
      %v1660 = vmax.f32 %v1652, 0.0
      %v1661 = vmax.f32 %v1653, 0.0
      %v1662 = vmax.f32 %v1654, 0.0
      %v1663 = vmax.f32 %v1655, 0.0
      %v1664 = vmax.f32 %v1656, 0.0
      %v1665 = vmax.f32 %v1657, 0.0
      %v1666 = vmax.f32 %v1658, 0.0
      %v1667 = vmax.f32 %v1659, 0.0
      %1668 = vmatprep.subr.mxu0 %v1661
      %1669 = vmatpush1.msra.mxu0 %v1660
      %1670 = vmatprep.subr.mxu0 %v1663
      %1671 = vmatpush1.msra.mxu0 %v1662
      %1672 = vmatprep.subr.mxu0 %v1665
      %1673 = vmatpush1.msra.mxu0 %v1664
      %1674 = vmatprep.subr.mxu0 %v1667
      %1675 = vmatpush1.msra.mxu0 %v1666
      %1676 = vmatprep.subr.mxu0 0.0
      %1677 = vmatpush1.msra.mxu0 0.0
      %1678 = vmatprep.subr.mxu0 0.0
      %1679 = vmatpush1.msra.mxu0 0.0
      %1680 = vmatprep.subr.mxu0 0.0
      %1681 = vmatpush1.msra.mxu0 0.0
      %1682 = vmatprep.subr.mxu0 0.0
      %1683 = vmatpush1.msra.mxu0 0.0
      %1684 = vmatprep.subr.mxu0 0.0
      %1685 = vmatpush1.msra.mxu0 0.0
      %1686 = vmatprep.subr.mxu0 0.0
      %1687 = vmatpush1.msra.mxu0 0.0
      %1688 = vmatprep.subr.mxu0 0.0
      %1689 = vmatpush1.msra.mxu0 0.0
      %1690 = vmatprep.subr.mxu0 0.0
      %1691 = vmatpush1.msra.mxu0 0.0
      %1692 = vmatprep.subr.mxu0 0.0
      %1693 = vmatpush1.msra.mxu0 0.0
      %1694 = vmatprep.subr.mxu0 0.0
      %1695 = vmatpush1.msra.mxu0 0.0
      %1696 = vmatprep.subr.mxu0 0.0
      %1697 = vmatpush1.msra.mxu0 0.0
      %1698 = vmatprep.subr.mxu0 0.0
      %1699 = vmatpush1.msra.mxu0 0.0
      %1700 = vmatprep.subr.mxu0 0.0
      %1701 = vmatpush1.msra.mxu0 0.0
      %1702 = vmatprep.subr.mxu0 0.0
      %1703 = vmatpush1.msra.mxu0 0.0
      %1704 = vmatprep.subr.mxu0 0.0
      %1705 = vmatpush1.msra.mxu0 0.0
      %1706 = vmatprep.subr.mxu0 0.0
      %1707 = vmatpush1.msra.mxu0 0.0
      %1708 = vmatprep.subr.mxu0 0.0
      %1709 = vmatpush1.msra.mxu0 0.0
      %1710 = vmatprep.subr.mxu0 0.0
      %1711 = vmatpush1.msra.mxu0 0.0
      %1712 = vmatprep.subr.mxu0 0.0
      %1713 = vmatpush1.msra.mxu0 0.0
      %1714 = vmatprep.subr.mxu0 0.0
      %1715 = vmatpush1.msra.mxu0 0.0
      %1716 = vmatprep.subr.mxu0 0.0
      %1717 = vmatpush1.msra.mxu0 0.0
      %1718 = vmatprep.subr.mxu0 0.0
      %1719 = vmatpush1.msra.mxu0 0.0
      %1720 = vmatprep.subr.mxu0 0.0
      %1721 = vmatpush1.msra.mxu0 0.0
      %1722 = vmatprep.subr.mxu0 0.0
      %1723 = vmatpush1.msra.mxu0 0.0
      %1724 = vmatprep.subr.mxu0 0.0
      %1725 = vmatpush1.msra.mxu0 0.0
      %1726 = vmatprep.subr.mxu0 0.0
      %1727 = vmatpush1.msra.mxu0 0.0
      %1728 = vmatprep.subr.mxu0 0.0
      %1729 = vmatpush1.msra.mxu0 0.0
      %1730 = vmatprep.subr.mxu0 0.0
      %1731 = vmatpush1.msra.mxu0 0.0
      %1732 = vmatprep.mubr.f32.mxu0 0.0
      %1733 = vmatmul.mubr.f32.gmra.mrb[0].mxu0 %v1182
      %v1734 = vpop.f32.mrb[0].mxu0
      %v1735 = vadd.f32 0.0, %v1734
      %v1736 = vpop.f32.mrb[0].mxu0
      %v1737 = vadd.f32 0.0, %v1736
      %1738 = vdwg.mxu0
      %s1739 = scalar_lea.vmem %s320, 1
      %v1740 = vld [vmem:[%s1739] ss:$8 sm:$0x3]
      %v1742 = vlaneseq
      %v1743 = vshrl.u32 %v1742, 7
      %v1744 = vsub.s32 0, %v1743
      %v1745 = vrot.slane %v1740, %v1744
      %v1746 = vlaneseq
      %v1747 = vshrl.u32 %v1746, 7
      %v1748 = vsub.s32 1, %v1747
      %v1749 = vrot.slane %v1740, %v1748
      %v1752 = vmul.f32 %v1735, %v1745
      %v1753 = vmul.f32 %v1737, %v1749
      %v1756 = vcombine.low %v1752, %v1753
      %v1758 = vadd.f32 %v1273, %v1756
      %v1760 = vcombine.high %v1758, %v1758
      %v1762 = vpack.c.bf16 %v1758, %v1758
      %v1763 = vpack.c.bf16 %v1760, %v1760
      %1764 = vmatprep.subr.bf16.mxu0 %v606
      %1765 = vmatpush1.bf16.msra.mxu0 %v605
      %1766 = vmatprep.subr.bf16.mxu0 %v610
      %1767 = vmatpush1.bf16.msra.mxu0 %v609
      %1768 = vmatprep.subr.bf16.mxu0 %v614
      %1769 = vmatpush1.bf16.msra.mxu0 %v613
      %1770 = vmatprep.subr.bf16.mxu0 %v618
      %1771 = vmatpush1.bf16.msra.mxu0 %v617
      %1772 = vmatprep.subr.bf16.mxu0 %v622
      %1773 = vmatpush1.bf16.msra.mxu0 %v621
      %1774 = vmatprep.subr.bf16.mxu0 %v626
      %1775 = vmatpush1.bf16.msra.mxu0 %v625
      %1776 = vmatprep.subr.bf16.mxu0 %v630
      %1777 = vmatpush1.bf16.msra.mxu0 %v629
      %1778 = vmatprep.subr.bf16.mxu0 %v634
      %1779 = vmatpush1.bf16.msra.mxu0 %v633
      %1780 = vmatprep.subr.bf16.mxu0 %v638
      %1781 = vmatpush1.bf16.msra.mxu0 %v637
      %1782 = vmatprep.subr.bf16.mxu0 %v642
      %1783 = vmatpush1.bf16.msra.mxu0 %v641
      %1784 = vmatprep.subr.bf16.mxu0 %v646
      %1785 = vmatpush1.bf16.msra.mxu0 %v645
      %1786 = vmatprep.subr.bf16.mxu0 %v650
      %1787 = vmatpush1.bf16.msra.mxu0 %v649
      %1788 = vmatprep.subr.bf16.mxu0 %v654
      %1789 = vmatpush1.bf16.msra.mxu0 %v653
      %1790 = vmatprep.subr.bf16.mxu0 %v658
      %1791 = vmatpush1.bf16.msra.mxu0 %v657
      %1792 = vmatprep.subr.bf16.mxu0 %v662
      %1793 = vmatpush1.bf16.msra.mxu0 %v661
      %1794 = vmatprep.subr.bf16.mxu0 %v666
      %1795 = vmatpush1.bf16.msra.mxu0 %v665
      %1796 = vmatprep.mubr.bf16.mxu0 %v1763
      %1797 = vmatmul.mubr.bf16.gmra.mrb[0].mxu0 %v1762
      %v1798 = vpop.f32.mrb[0].mxu0
      %v1799 = vadd.f32 0.0, %v1798
      %v1800 = vpop.f32.mrb[0].mxu0
      %v1801 = vadd.f32 0.0, %v1800
      %v1802 = vpop.f32.mrb[0].mxu0
      %v1803 = vpop.f32.mrb[0].mxu0
      %1804 = vdwg.mxu0
      %1805 = vmatprep.subr.bf16.mxu0 %v608
      %1806 = vmatpush1.bf16.msra.mxu0 %v607
      %1807 = vmatprep.subr.bf16.mxu0 %v612
      %1808 = vmatpush1.bf16.msra.mxu0 %v611
      %1809 = vmatprep.subr.bf16.mxu0 %v616
      %1810 = vmatpush1.bf16.msra.mxu0 %v615
      %1811 = vmatprep.subr.bf16.mxu0 %v620
      %1812 = vmatpush1.bf16.msra.mxu0 %v619
      %1813 = vmatprep.subr.bf16.mxu0 %v624
      %1814 = vmatpush1.bf16.msra.mxu0 %v623
      %1815 = vmatprep.subr.bf16.mxu0 %v628
      %1816 = vmatpush1.bf16.msra.mxu0 %v627
      %1817 = vmatprep.subr.bf16.mxu0 %v632
      %1818 = vmatpush1.bf16.msra.mxu0 %v631
      %1819 = vmatprep.subr.bf16.mxu0 %v636
      %1820 = vmatpush1.bf16.msra.mxu0 %v635
      %1821 = vmatprep.subr.bf16.mxu0 %v640
      %1822 = vmatpush1.bf16.msra.mxu0 %v639
      %1823 = vmatprep.subr.bf16.mxu0 %v644
      %1824 = vmatpush1.bf16.msra.mxu0 %v643
      %1825 = vmatprep.subr.bf16.mxu0 %v648
      %1826 = vmatpush1.bf16.msra.mxu0 %v647
      %1827 = vmatprep.subr.bf16.mxu0 %v652
      %1828 = vmatpush1.bf16.msra.mxu0 %v651
      %1829 = vmatprep.subr.bf16.mxu0 %v656
      %1830 = vmatpush1.bf16.msra.mxu0 %v655
      %1831 = vmatprep.subr.bf16.mxu0 %v660
      %1832 = vmatpush1.bf16.msra.mxu0 %v659
      %1833 = vmatprep.subr.bf16.mxu0 %v664
      %1834 = vmatpush1.bf16.msra.mxu0 %v663
      %1835 = vmatprep.subr.bf16.mxu0 %v668
      %1836 = vmatpush1.bf16.msra.mxu0 %v667
      %1837 = vmatprep.mubr.bf16.mxu0 %v1763
      %1838 = vmatmul.mubr.bf16.gmra.mrb[0].mxu0 %v1762
      %v1839 = vpop.f32.mrb[0].mxu0
      %v1840 = vadd.f32 0.0, %v1839
      %v1841 = vpop.f32.mrb[0].mxu0
      %v1842 = vadd.f32 0.0, %v1841
      %v1843 = vpop.f32.mrb[0].mxu0
      %v1844 = vpop.f32.mrb[0].mxu0
      %1845 = vdwg.mxu0
      %v1847 = vsel %vm828, %v1799, 0
      %v1850 = vsel %vm828, %v1801, 0
      %1852 = vmatprep.subr.mxu0 %v1850
      %1853 = vmatpush1.msra.mxu0 %v1847
      %1854 = vmatprep.subr.mxu0 0.0
      %1855 = vmatpush1.msra.mxu0 0.0
      %1856 = vmatprep.subr.mxu0 0.0
      %1857 = vmatpush1.msra.mxu0 0.0
      %1858 = vmatprep.subr.mxu0 0.0
      %1859 = vmatpush1.msra.mxu0 0.0
      %1860 = vmatprep.subr.mxu0 0.0
      %1861 = vmatpush1.msra.mxu0 0.0
      %1862 = vmatprep.subr.mxu0 0.0
      %1863 = vmatpush1.msra.mxu0 0.0
      %1864 = vmatprep.subr.mxu0 0.0
      %1865 = vmatpush1.msra.mxu0 0.0
      %1866 = vmatprep.subr.mxu0 0.0
      %1867 = vmatpush1.msra.mxu0 0.0
      %1868 = vmatprep.subr.mxu0 0.0
      %1869 = vmatpush1.msra.mxu0 0.0
      %1870 = vmatprep.subr.mxu0 0.0
      %1871 = vmatpush1.msra.mxu0 0.0
      %1872 = vmatprep.subr.mxu0 0.0
      %1873 = vmatpush1.msra.mxu0 0.0
      %1874 = vmatprep.subr.mxu0 0.0
      %1875 = vmatpush1.msra.mxu0 0.0
      %1876 = vmatprep.subr.mxu0 0.0
      %1877 = vmatpush1.msra.mxu0 0.0
      %1878 = vmatprep.subr.mxu0 0.0
      %1879 = vmatpush1.msra.mxu0 0.0
      %1880 = vmatprep.subr.mxu0 0.0
      %1881 = vmatpush1.msra.mxu0 0.0
      %1882 = vmatprep.subr.mxu0 0.0
      %1883 = vmatpush1.msra.mxu0 0.0
      %1884 = vmatprep.subr.mxu0 0.0
      %1885 = vmatpush1.msra.mxu0 0.0
      %1886 = vmatprep.subr.mxu0 0.0
      %1887 = vmatpush1.msra.mxu0 0.0
      %1888 = vmatprep.subr.mxu0 0.0
      %1889 = vmatpush1.msra.mxu0 0.0
      %1890 = vmatprep.subr.mxu0 0.0
      %1891 = vmatpush1.msra.mxu0 0.0
      %1892 = vmatprep.subr.mxu0 0.0
      %1893 = vmatpush1.msra.mxu0 0.0
      %1894 = vmatprep.subr.mxu0 0.0
      %1895 = vmatpush1.msra.mxu0 0.0
      %1896 = vmatprep.subr.mxu0 0.0
      %1897 = vmatpush1.msra.mxu0 0.0
      %1898 = vmatprep.subr.mxu0 0.0
      %1899 = vmatpush1.msra.mxu0 0.0
      %1900 = vmatprep.subr.mxu0 0.0
      %1901 = vmatpush1.msra.mxu0 0.0
      %1902 = vmatprep.subr.mxu0 0.0
      %1903 = vmatpush1.msra.mxu0 0.0
      %1904 = vmatprep.subr.mxu0 0.0
      %1905 = vmatpush1.msra.mxu0 0.0
      %1906 = vmatprep.subr.mxu0 0.0
      %1907 = vmatpush1.msra.mxu0 0.0
      %1908 = vmatprep.subr.mxu0 0.0
      %1909 = vmatpush1.msra.mxu0 0.0
      %1910 = vmatprep.subr.mxu0 0.0
      %1911 = vmatpush1.msra.mxu0 0.0
      %1912 = vmatprep.subr.mxu0 0.0
      %1913 = vmatpush1.msra.mxu0 0.0
      %1914 = vmatprep.subr.mxu0 0.0
      %1915 = vmatpush1.msra.mxu0 0.0
      %1916 = vmatprep.mubr.f32.mxu0 0.0
      %1917 = vmatmul.mubr.f32.gmra.mrb[0].mxu0 %v817
      %v1918 = vpop.f32.mrb[0].mxu0
      %v1919 = vadd.f32 0.0, %v1918
      %v1920 = vpop.f32.mrb[0].mxu0
      %v1921 = vadd.f32 0.0, %v1920
      %1922 = vmatprep.mubr.f32.mxu0 0.0
      %1923 = vmatmul.mubr.f32.gmra.mrb[0].mxu0 %v820
      %v1924 = vpop.f32.mrb[0].mxu0
      %v1925 = vadd.f32 0.0, %v1924
      %v1926 = vpop.f32.mrb[0].mxu0
      %v1927 = vadd.f32 0.0, %v1926
      %1928 = vmatprep.mubr.f32.mxu0 0.0
      %1929 = vmatmul.mubr.f32.gmra.mrb[0].mxu0 %v823
      %v1930 = vpop.f32.mrb[0].mxu0
      %v1931 = vadd.f32 0.0, %v1930
      %v1932 = vpop.f32.mrb[0].mxu0
      %v1933 = vadd.f32 0.0, %v1932
      %1934 = vmatprep.mubr.f32.mxu0 0.0
      %1935 = vmatmul.mubr.f32.gmra.mrb[0].mxu0 %v826
      %v1936 = vpop.f32.mrb[0].mxu0
      %v1937 = vadd.f32 0.0, %v1936
      %v1938 = vpop.f32.mrb[0].mxu0
      %v1939 = vadd.f32 0.0, %v1938
      %1940 = vdwg.mxu0
      %v1941 = vsel %vm828, %v1758, 0
      %v1943 = vsel %vm828, %v1760, 0
      %1945 = vmatprep.subr.mxu0 %v1943
      %1946 = vmatpush1.msra.mxu0 %v1941
      %1947 = vmatprep.subr.mxu0 0.0
      %1948 = vmatpush1.msra.mxu0 0.0
      %1949 = vmatprep.subr.mxu0 0.0
      %1950 = vmatpush1.msra.mxu0 0.0
      %1951 = vmatprep.subr.mxu0 0.0
      %1952 = vmatpush1.msra.mxu0 0.0
      %1953 = vmatprep.subr.mxu0 0.0
      %1954 = vmatpush1.msra.mxu0 0.0
      %1955 = vmatprep.subr.mxu0 0.0
      %1956 = vmatpush1.msra.mxu0 0.0
      %1957 = vmatprep.subr.mxu0 0.0
      %1958 = vmatpush1.msra.mxu0 0.0
      %1959 = vmatprep.subr.mxu0 0.0
      %1960 = vmatpush1.msra.mxu0 0.0
      %1961 = vmatprep.subr.mxu0 0.0
      %1962 = vmatpush1.msra.mxu0 0.0
      %1963 = vmatprep.subr.mxu0 0.0
      %1964 = vmatpush1.msra.mxu0 0.0
      %1965 = vmatprep.subr.mxu0 0.0
      %1966 = vmatpush1.msra.mxu0 0.0
      %1967 = vmatprep.subr.mxu0 0.0
      %1968 = vmatpush1.msra.mxu0 0.0
      %1969 = vmatprep.subr.mxu0 0.0
      %1970 = vmatpush1.msra.mxu0 0.0
      %1971 = vmatprep.subr.mxu0 0.0
      %1972 = vmatpush1.msra.mxu0 0.0
      %1973 = vmatprep.subr.mxu0 0.0
      %1974 = vmatpush1.msra.mxu0 0.0
      %1975 = vmatprep.subr.mxu0 0.0
      %1976 = vmatpush1.msra.mxu0 0.0
      %1977 = vmatprep.subr.mxu0 0.0
      %1978 = vmatpush1.msra.mxu0 0.0
      %1979 = vmatprep.subr.mxu0 0.0
      %1980 = vmatpush1.msra.mxu0 0.0
      %1981 = vmatprep.subr.mxu0 0.0
      %1982 = vmatpush1.msra.mxu0 0.0
      %1983 = vmatprep.subr.mxu0 0.0
      %1984 = vmatpush1.msra.mxu0 0.0
      %1985 = vmatprep.subr.mxu0 0.0
      %1986 = vmatpush1.msra.mxu0 0.0
      %1987 = vmatprep.subr.mxu0 0.0
      %1988 = vmatpush1.msra.mxu0 0.0
      %1989 = vmatprep.subr.mxu0 0.0
      %1990 = vmatpush1.msra.mxu0 0.0
      %1991 = vmatprep.subr.mxu0 0.0
      %1992 = vmatpush1.msra.mxu0 0.0
      %1993 = vmatprep.subr.mxu0 0.0
      %1994 = vmatpush1.msra.mxu0 0.0
      %1995 = vmatprep.subr.mxu0 0.0
      %1996 = vmatpush1.msra.mxu0 0.0
      %1997 = vmatprep.subr.mxu0 0.0
      %1998 = vmatpush1.msra.mxu0 0.0
      %1999 = vmatprep.subr.mxu0 0.0
      %2000 = vmatpush1.msra.mxu0 0.0
      %2001 = vmatprep.subr.mxu0 0.0
      %2002 = vmatpush1.msra.mxu0 0.0
      %2003 = vmatprep.subr.mxu0 0.0
      %2004 = vmatpush1.msra.mxu0 0.0
      %2005 = vmatprep.subr.mxu0 0.0
      %2006 = vmatpush1.msra.mxu0 0.0
      %2007 = vmatprep.subr.mxu0 0.0
      %2008 = vmatpush1.msra.mxu0 0.0
      %2009 = vmatprep.mubr.f32.mxu0 0.0
      %2010 = vmatmul.mubr.f32.gmra.mrb[0].mxu0 %v925
      %v2011 = vpop.f32.mrb[0].mxu0
      %v2012 = vadd.f32 %v1919, %v2011
      %v2013 = vpop.f32.mrb[0].mxu0
      %v2014 = vadd.f32 %v1921, %v2013
      %2015 = vmatprep.mubr.f32.mxu0 0.0
      %2016 = vmatmul.mubr.f32.gmra.mrb[0].mxu0 %v928
      %v2017 = vpop.f32.mrb[0].mxu0
      %v2018 = vadd.f32 %v1925, %v2017
      %v2019 = vpop.f32.mrb[0].mxu0
      %v2020 = vadd.f32 %v1927, %v2019
      %2021 = vmatprep.mubr.f32.mxu0 0.0
      %2022 = vmatmul.mubr.f32.gmra.mrb[0].mxu0 %v931
      %v2023 = vpop.f32.mrb[0].mxu0
      %v2024 = vadd.f32 %v1931, %v2023
      %v2025 = vpop.f32.mrb[0].mxu0
      %v2026 = vadd.f32 %v1933, %v2025
      %2027 = vmatprep.mubr.f32.mxu0 0.0
      %2028 = vmatmul.mubr.f32.gmra.mrb[0].mxu0 %v934
      %v2029 = vpop.f32.mrb[0].mxu0
      %v2030 = vadd.f32 %v1937, %v2029
      %v2031 = vpop.f32.mrb[0].mxu0
      %v2032 = vadd.f32 %v1939, %v2031
      %2033 = vdwg.mxu0
      %v2035 = vsel %vm828, %v1840, 0
      %v2038 = vsel %vm828, %v1842, 0
      %2040 = vmatprep.subr.mxu0 %v2038
      %2041 = vmatpush1.msra.mxu0 %v2035
      %2042 = vmatprep.subr.mxu0 0.0
      %2043 = vmatpush1.msra.mxu0 0.0
      %2044 = vmatprep.subr.mxu0 0.0
      %2045 = vmatpush1.msra.mxu0 0.0
      %2046 = vmatprep.subr.mxu0 0.0
      %2047 = vmatpush1.msra.mxu0 0.0
      %2048 = vmatprep.subr.mxu0 0.0
      %2049 = vmatpush1.msra.mxu0 0.0
      %2050 = vmatprep.subr.mxu0 0.0
      %2051 = vmatpush1.msra.mxu0 0.0
      %2052 = vmatprep.subr.mxu0 0.0
      %2053 = vmatpush1.msra.mxu0 0.0
      %2054 = vmatprep.subr.mxu0 0.0
      %2055 = vmatpush1.msra.mxu0 0.0
      %2056 = vmatprep.subr.mxu0 0.0
      %2057 = vmatpush1.msra.mxu0 0.0
      %2058 = vmatprep.subr.mxu0 0.0
      %2059 = vmatpush1.msra.mxu0 0.0
      %2060 = vmatprep.subr.mxu0 0.0
      %2061 = vmatpush1.msra.mxu0 0.0
      %2062 = vmatprep.subr.mxu0 0.0
      %2063 = vmatpush1.msra.mxu0 0.0
      %2064 = vmatprep.subr.mxu0 0.0
      %2065 = vmatpush1.msra.mxu0 0.0
      %2066 = vmatprep.subr.mxu0 0.0
      %2067 = vmatpush1.msra.mxu0 0.0
      %2068 = vmatprep.subr.mxu0 0.0
      %2069 = vmatpush1.msra.mxu0 0.0
      %2070 = vmatprep.subr.mxu0 0.0
      %2071 = vmatpush1.msra.mxu0 0.0
      %2072 = vmatprep.subr.mxu0 0.0
      %2073 = vmatpush1.msra.mxu0 0.0
      %2074 = vmatprep.subr.mxu0 0.0
      %2075 = vmatpush1.msra.mxu0 0.0
      %2076 = vmatprep.subr.mxu0 0.0
      %2077 = vmatpush1.msra.mxu0 0.0
      %2078 = vmatprep.subr.mxu0 0.0
      %2079 = vmatpush1.msra.mxu0 0.0
      %2080 = vmatprep.subr.mxu0 0.0
      %2081 = vmatpush1.msra.mxu0 0.0
      %2082 = vmatprep.subr.mxu0 0.0
      %2083 = vmatpush1.msra.mxu0 0.0
      %2084 = vmatprep.subr.mxu0 0.0
      %2085 = vmatpush1.msra.mxu0 0.0
      %2086 = vmatprep.subr.mxu0 0.0
      %2087 = vmatpush1.msra.mxu0 0.0
      %2088 = vmatprep.subr.mxu0 0.0
      %2089 = vmatpush1.msra.mxu0 0.0
      %2090 = vmatprep.subr.mxu0 0.0
      %2091 = vmatpush1.msra.mxu0 0.0
      %2092 = vmatprep.subr.mxu0 0.0
      %2093 = vmatpush1.msra.mxu0 0.0
      %2094 = vmatprep.subr.mxu0 0.0
      %2095 = vmatpush1.msra.mxu0 0.0
      %2096 = vmatprep.subr.mxu0 0.0
      %2097 = vmatpush1.msra.mxu0 0.0
      %2098 = vmatprep.subr.mxu0 0.0
      %2099 = vmatpush1.msra.mxu0 0.0
      %2100 = vmatprep.subr.mxu0 0.0
      %2101 = vmatpush1.msra.mxu0 0.0
      %2102 = vmatprep.subr.mxu0 0.0
      %2103 = vmatpush1.msra.mxu0 0.0
      %2104 = vmatprep.mubr.f32.mxu0 0.0
      %2105 = vmatmul.mubr.f32.gmra.mrb[0].mxu0 %v1030
      %v2106 = vpop.f32.mrb[0].mxu0
      %v2107 = vadd.f32 0.0, %v2106
      %v2108 = vpop.f32.mrb[0].mxu0
      %v2109 = vadd.f32 0.0, %v2108
      %2110 = vmatprep.mubr.f32.mxu0 0.0
      %2111 = vmatmul.mubr.f32.gmra.mrb[0].mxu0 %v1033
      %v2112 = vpop.f32.mrb[0].mxu0
      %v2113 = vadd.f32 0.0, %v2112
      %v2114 = vpop.f32.mrb[0].mxu0
      %v2115 = vadd.f32 0.0, %v2114
      %2116 = vmatprep.mubr.f32.mxu0 0.0
      %2117 = vmatmul.mubr.f32.gmra.mrb[0].mxu0 %v1036
      %v2118 = vpop.f32.mrb[0].mxu0
      %v2119 = vadd.f32 0.0, %v2118
      %v2120 = vpop.f32.mrb[0].mxu0
      %v2121 = vadd.f32 0.0, %v2120
      %2122 = vmatprep.mubr.f32.mxu0 0.0
      %2123 = vmatmul.mubr.f32.gmra.mrb[0].mxu0 %v1039
      %v2124 = vpop.f32.mrb[0].mxu0
      %v2125 = vadd.f32 0.0, %v2124
      %v2126 = vpop.f32.mrb[0].mxu0
      %v2127 = vadd.f32 0.0, %v2126
      %2128 = vdwg.mxu0
      %v2129 = vadd.f32 %v2012, %v2107
      %v2130 = vadd.f32 %v2014, %v2109
      %v2131 = vadd.f32 %v2018, %v2113
      %v2132 = vadd.f32 %v2020, %v2115
      %v2133 = vadd.f32 %v2024, %v2119
      %v2134 = vadd.f32 %v2026, %v2121
      %v2135 = vadd.f32 %v2030, %v2125
      %v2136 = vadd.f32 %v2032, %v2127
      %v2137 = vadd.f32 %v2129, %v1147
      %v2138 = vadd.f32 %v2130, %v1147
      %v2139 = vadd.f32 %v2131, %v1152
      %v2140 = vadd.f32 %v2132, %v1152
      %v2141 = vadd.f32 %v2133, %v1157
      %v2142 = vadd.f32 %v2134, %v1157
      %v2143 = vadd.f32 %v2135, %v1162
      %v2144 = vadd.f32 %v2136, %v1162
      %v2145 = vmax.f32 %v2137, 0.0
      %v2146 = vmax.f32 %v2138, 0.0
      %v2147 = vmax.f32 %v2139, 0.0
      %v2148 = vmax.f32 %v2140, 0.0
      %v2149 = vmax.f32 %v2141, 0.0
      %v2150 = vmax.f32 %v2142, 0.0
      %v2151 = vmax.f32 %v2143, 0.0
      %v2152 = vmax.f32 %v2144, 0.0
      %2153 = vmatprep.subr.mxu0 %v2146
      %2154 = vmatpush1.msra.mxu0 %v2145
      %2155 = vmatprep.subr.mxu0 %v2148
      %2156 = vmatpush1.msra.mxu0 %v2147
      %2157 = vmatprep.subr.mxu0 %v2150
      %2158 = vmatpush1.msra.mxu0 %v2149
      %2159 = vmatprep.subr.mxu0 %v2152
      %2160 = vmatpush1.msra.mxu0 %v2151
      %2161 = vmatprep.subr.mxu0 0.0
      %2162 = vmatpush1.msra.mxu0 0.0
      %2163 = vmatprep.subr.mxu0 0.0
      %2164 = vmatpush1.msra.mxu0 0.0
      %2165 = vmatprep.subr.mxu0 0.0
      %2166 = vmatpush1.msra.mxu0 0.0
      %2167 = vmatprep.subr.mxu0 0.0
      %2168 = vmatpush1.msra.mxu0 0.0
      %2169 = vmatprep.subr.mxu0 0.0
      %2170 = vmatpush1.msra.mxu0 0.0
      %2171 = vmatprep.subr.mxu0 0.0
      %2172 = vmatpush1.msra.mxu0 0.0
      %2173 = vmatprep.subr.mxu0 0.0
      %2174 = vmatpush1.msra.mxu0 0.0
      %2175 = vmatprep.subr.mxu0 0.0
      %2176 = vmatpush1.msra.mxu0 0.0
      %2177 = vmatprep.subr.mxu0 0.0
      %2178 = vmatpush1.msra.mxu0 0.0
      %2179 = vmatprep.subr.mxu0 0.0
      %2180 = vmatpush1.msra.mxu0 0.0
      %2181 = vmatprep.subr.mxu0 0.0
      %2182 = vmatpush1.msra.mxu0 0.0
      %2183 = vmatprep.subr.mxu0 0.0
      %2184 = vmatpush1.msra.mxu0 0.0
      %2185 = vmatprep.subr.mxu0 0.0
      %2186 = vmatpush1.msra.mxu0 0.0
      %2187 = vmatprep.subr.mxu0 0.0
      %2188 = vmatpush1.msra.mxu0 0.0
      %2189 = vmatprep.subr.mxu0 0.0
      %2190 = vmatpush1.msra.mxu0 0.0
      %2191 = vmatprep.subr.mxu0 0.0
      %2192 = vmatpush1.msra.mxu0 0.0
      %2193 = vmatprep.subr.mxu0 0.0
      %2194 = vmatpush1.msra.mxu0 0.0
      %2195 = vmatprep.subr.mxu0 0.0
      %2196 = vmatpush1.msra.mxu0 0.0
      %2197 = vmatprep.subr.mxu0 0.0
      %2198 = vmatpush1.msra.mxu0 0.0
      %2199 = vmatprep.subr.mxu0 0.0
      %2200 = vmatpush1.msra.mxu0 0.0
      %2201 = vmatprep.subr.mxu0 0.0
      %2202 = vmatpush1.msra.mxu0 0.0
      %2203 = vmatprep.subr.mxu0 0.0
      %2204 = vmatpush1.msra.mxu0 0.0
      %2205 = vmatprep.subr.mxu0 0.0
      %2206 = vmatpush1.msra.mxu0 0.0
      %2207 = vmatprep.subr.mxu0 0.0
      %2208 = vmatpush1.msra.mxu0 0.0
      %2209 = vmatprep.subr.mxu0 0.0
      %2210 = vmatpush1.msra.mxu0 0.0
      %2211 = vmatprep.subr.mxu0 0.0
      %2212 = vmatpush1.msra.mxu0 0.0
      %2213 = vmatprep.subr.mxu0 0.0
      %2214 = vmatpush1.msra.mxu0 0.0
      %2215 = vmatprep.subr.mxu0 0.0
      %2216 = vmatpush1.msra.mxu0 0.0
      %2217 = vmatprep.mubr.f32.mxu0 0.0
      %2218 = vmatmul.mubr.f32.gmra.mrb[0].mxu0 %v1182
      %v2219 = vpop.f32.mrb[0].mxu0
      %v2220 = vadd.f32 0.0, %v2219
      %v2221 = vpop.f32.mrb[0].mxu0
      %v2222 = vadd.f32 0.0, %v2221
      %2223 = vdwg.mxu0
      %s2224 = scalar_lea.vmem %s320, 2
      %v2225 = vld [vmem:[%s2224] ss:$8 sm:$0x3]
      %v2227 = vlaneseq
      %v2228 = vshrl.u32 %v2227, 7
      %v2229 = vsub.s32 0, %v2228
      %v2230 = vrot.slane %v2225, %v2229
      %v2231 = vlaneseq
      %v2232 = vshrl.u32 %v2231, 7
      %v2233 = vsub.s32 1, %v2232
      %v2234 = vrot.slane %v2225, %v2233
      %v2237 = vmul.f32 %v2220, %v2230
      %v2238 = vmul.f32 %v2222, %v2234
      %v2241 = vcombine.low %v2237, %v2238
      %v2243 = vadd.f32 %v1758, %v2241
      %v2245 = vcombine.high %v2243, %v2243
      %v2247 = vpack.c.bf16 %v2243, %v2243
      %v2248 = vpack.c.bf16 %v2245, %v2245
      %2249 = vmatprep.subr.bf16.mxu0 %v606
      %2250 = vmatpush1.bf16.msra.mxu0 %v605
      %2251 = vmatprep.subr.bf16.mxu0 %v610
      %2252 = vmatpush1.bf16.msra.mxu0 %v609
      %2253 = vmatprep.subr.bf16.mxu0 %v614
      %2254 = vmatpush1.bf16.msra.mxu0 %v613
      %2255 = vmatprep.subr.bf16.mxu0 %v618
      %2256 = vmatpush1.bf16.msra.mxu0 %v617
      %2257 = vmatprep.subr.bf16.mxu0 %v622
      %2258 = vmatpush1.bf16.msra.mxu0 %v621
      %2259 = vmatprep.subr.bf16.mxu0 %v626
      %2260 = vmatpush1.bf16.msra.mxu0 %v625
      %2261 = vmatprep.subr.bf16.mxu0 %v630
      %2262 = vmatpush1.bf16.msra.mxu0 %v629
      %2263 = vmatprep.subr.bf16.mxu0 %v634
      %2264 = vmatpush1.bf16.msra.mxu0 %v633
      %2265 = vmatprep.subr.bf16.mxu0 %v638
      %2266 = vmatpush1.bf16.msra.mxu0 %v637
      %2267 = vmatprep.subr.bf16.mxu0 %v642
      %2268 = vmatpush1.bf16.msra.mxu0 %v641
      %2269 = vmatprep.subr.bf16.mxu0 %v646
      %2270 = vmatpush1.bf16.msra.mxu0 %v645
      %2271 = vmatprep.subr.bf16.mxu0 %v650
      %2272 = vmatpush1.bf16.msra.mxu0 %v649
      %2273 = vmatprep.subr.bf16.mxu0 %v654
      %2274 = vmatpush1.bf16.msra.mxu0 %v653
      %2275 = vmatprep.subr.bf16.mxu0 %v658
      %2276 = vmatpush1.bf16.msra.mxu0 %v657
      %2277 = vmatprep.subr.bf16.mxu0 %v662
      %2278 = vmatpush1.bf16.msra.mxu0 %v661
      %2279 = vmatprep.subr.bf16.mxu0 %v666
      %2280 = vmatpush1.bf16.msra.mxu0 %v665
      %2281 = vmatprep.mubr.bf16.mxu0 %v2248
      %2282 = vmatmul.mubr.bf16.gmra.mrb[0].mxu0 %v2247
      %v2283 = vpop.f32.mrb[0].mxu0
      %v2284 = vadd.f32 0.0, %v2283
      %v2285 = vpop.f32.mrb[0].mxu0
      %v2286 = vadd.f32 0.0, %v2285
      %v2287 = vpop.f32.mrb[0].mxu0
      %v2288 = vpop.f32.mrb[0].mxu0
      %2289 = vdwg.mxu0
      %2290 = vmatprep.subr.bf16.mxu0 %v608
      %2291 = vmatpush1.bf16.msra.mxu0 %v607
      %2292 = vmatprep.subr.bf16.mxu0 %v612
      %2293 = vmatpush1.bf16.msra.mxu0 %v611
      %2294 = vmatprep.subr.bf16.mxu0 %v616
      %2295 = vmatpush1.bf16.msra.mxu0 %v615
      %2296 = vmatprep.subr.bf16.mxu0 %v620
      %2297 = vmatpush1.bf16.msra.mxu0 %v619
      %2298 = vmatprep.subr.bf16.mxu0 %v624
      %2299 = vmatpush1.bf16.msra.mxu0 %v623
      %2300 = vmatprep.subr.bf16.mxu0 %v628
      %2301 = vmatpush1.bf16.msra.mxu0 %v627
      %2302 = vmatprep.subr.bf16.mxu0 %v632
      %2303 = vmatpush1.bf16.msra.mxu0 %v631
      %2304 = vmatprep.subr.bf16.mxu0 %v636
      %2305 = vmatpush1.bf16.msra.mxu0 %v635
      %2306 = vmatprep.subr.bf16.mxu0 %v640
      %2307 = vmatpush1.bf16.msra.mxu0 %v639
      %2308 = vmatprep.subr.bf16.mxu0 %v644
      %2309 = vmatpush1.bf16.msra.mxu0 %v643
      %2310 = vmatprep.subr.bf16.mxu0 %v648
      %2311 = vmatpush1.bf16.msra.mxu0 %v647
      %2312 = vmatprep.subr.bf16.mxu0 %v652
      %2313 = vmatpush1.bf16.msra.mxu0 %v651
      %2314 = vmatprep.subr.bf16.mxu0 %v656
      %2315 = vmatpush1.bf16.msra.mxu0 %v655
      %2316 = vmatprep.subr.bf16.mxu0 %v660
      %2317 = vmatpush1.bf16.msra.mxu0 %v659
      %2318 = vmatprep.subr.bf16.mxu0 %v664
      %2319 = vmatpush1.bf16.msra.mxu0 %v663
      %2320 = vmatprep.subr.bf16.mxu0 %v668
      %2321 = vmatpush1.bf16.msra.mxu0 %v667
      %2322 = vmatprep.mubr.bf16.mxu0 %v2248
      %2323 = vmatmul.mubr.bf16.gmra.mrb[0].mxu0 %v2247
      %v2324 = vpop.f32.mrb[0].mxu0
      %v2325 = vadd.f32 0.0, %v2324
      %v2326 = vpop.f32.mrb[0].mxu0
      %v2327 = vadd.f32 0.0, %v2326
      %v2328 = vpop.f32.mrb[0].mxu0
      %v2329 = vpop.f32.mrb[0].mxu0
      %2330 = vdwg.mxu0
      %v2332 = vsel %vm828, %v2284, 0
      %v2335 = vsel %vm828, %v2286, 0
      %2337 = vmatprep.subr.mxu0 %v2335
      %2338 = vmatpush1.msra.mxu0 %v2332
      %2339 = vmatprep.subr.mxu0 0.0
      %2340 = vmatpush1.msra.mxu0 0.0
      %2341 = vmatprep.subr.mxu0 0.0
      %2342 = vmatpush1.msra.mxu0 0.0
      %2343 = vmatprep.subr.mxu0 0.0
      %2344 = vmatpush1.msra.mxu0 0.0
      %2345 = vmatprep.subr.mxu0 0.0
      %2346 = vmatpush1.msra.mxu0 0.0
      %2347 = vmatprep.subr.mxu0 0.0
      %2348 = vmatpush1.msra.mxu0 0.0
      %2349 = vmatprep.subr.mxu0 0.0
      %2350 = vmatpush1.msra.mxu0 0.0
      %2351 = vmatprep.subr.mxu0 0.0
      %2352 = vmatpush1.msra.mxu0 0.0
      %2353 = vmatprep.subr.mxu0 0.0
      %2354 = vmatpush1.msra.mxu0 0.0
      %2355 = vmatprep.subr.mxu0 0.0
      %2356 = vmatpush1.msra.mxu0 0.0
      %2357 = vmatprep.subr.mxu0 0.0
      %2358 = vmatpush1.msra.mxu0 0.0
      %2359 = vmatprep.subr.mxu0 0.0
      %2360 = vmatpush1.msra.mxu0 0.0
      %2361 = vmatprep.subr.mxu0 0.0
      %2362 = vmatpush1.msra.mxu0 0.0
      %2363 = vmatprep.subr.mxu0 0.0
      %2364 = vmatpush1.msra.mxu0 0.0
      %2365 = vmatprep.subr.mxu0 0.0
      %2366 = vmatpush1.msra.mxu0 0.0
      %2367 = vmatprep.subr.mxu0 0.0
      %2368 = vmatpush1.msra.mxu0 0.0
      %2369 = vmatprep.subr.mxu0 0.0
      %2370 = vmatpush1.msra.mxu0 0.0
      %2371 = vmatprep.subr.mxu0 0.0
      %2372 = vmatpush1.msra.mxu0 0.0
      %2373 = vmatprep.subr.mxu0 0.0
      %2374 = vmatpush1.msra.mxu0 0.0
      %2375 = vmatprep.subr.mxu0 0.0
      %2376 = vmatpush1.msra.mxu0 0.0
      %2377 = vmatprep.subr.mxu0 0.0
      %2378 = vmatpush1.msra.mxu0 0.0
      %2379 = vmatprep.subr.mxu0 0.0
      %2380 = vmatpush1.msra.mxu0 0.0
      %2381 = vmatprep.subr.mxu0 0.0
      %2382 = vmatpush1.msra.mxu0 0.0
      %2383 = vmatprep.subr.mxu0 0.0
      %2384 = vmatpush1.msra.mxu0 0.0
      %2385 = vmatprep.subr.mxu0 0.0
      %2386 = vmatpush1.msra.mxu0 0.0
      %2387 = vmatprep.subr.mxu0 0.0
      %2388 = vmatpush1.msra.mxu0 0.0
      %2389 = vmatprep.subr.mxu0 0.0
      %2390 = vmatpush1.msra.mxu0 0.0
      %2391 = vmatprep.subr.mxu0 0.0
      %2392 = vmatpush1.msra.mxu0 0.0
      %2393 = vmatprep.subr.mxu0 0.0
      %2394 = vmatpush1.msra.mxu0 0.0
      %2395 = vmatprep.subr.mxu0 0.0
      %2396 = vmatpush1.msra.mxu0 0.0
      %2397 = vmatprep.subr.mxu0 0.0
      %2398 = vmatpush1.msra.mxu0 0.0
      %2399 = vmatprep.subr.mxu0 0.0
      %2400 = vmatpush1.msra.mxu0 0.0
      %2401 = vmatprep.mubr.f32.mxu0 0.0
      %2402 = vmatmul.mubr.f32.gmra.mrb[0].mxu0 %v817
      %v2403 = vpop.f32.mrb[0].mxu0
      %v2404 = vadd.f32 0.0, %v2403
      %v2405 = vpop.f32.mrb[0].mxu0
      %v2406 = vadd.f32 0.0, %v2405
      %2407 = vmatprep.mubr.f32.mxu0 0.0
      %2408 = vmatmul.mubr.f32.gmra.mrb[0].mxu0 %v820
      %v2409 = vpop.f32.mrb[0].mxu0
      %v2410 = vadd.f32 0.0, %v2409
      %v2411 = vpop.f32.mrb[0].mxu0
      %v2412 = vadd.f32 0.0, %v2411
      %2413 = vmatprep.mubr.f32.mxu0 0.0
      %2414 = vmatmul.mubr.f32.gmra.mrb[0].mxu0 %v823
      %v2415 = vpop.f32.mrb[0].mxu0
      %v2416 = vadd.f32 0.0, %v2415
      %v2417 = vpop.f32.mrb[0].mxu0
      %v2418 = vadd.f32 0.0, %v2417
      %2419 = vmatprep.mubr.f32.mxu0 0.0
      %2420 = vmatmul.mubr.f32.gmra.mrb[0].mxu0 %v826
      %v2421 = vpop.f32.mrb[0].mxu0
      %v2422 = vadd.f32 0.0, %v2421
      %v2423 = vpop.f32.mrb[0].mxu0
      %v2424 = vadd.f32 0.0, %v2423
      %2425 = vdwg.mxu0
      %v2426 = vsel %vm828, %v2243, 0
      %v2428 = vsel %vm828, %v2245, 0
      %2430 = vmatprep.subr.mxu0 %v2428
      %2431 = vmatpush1.msra.mxu0 %v2426
      %2432 = vmatprep.subr.mxu0 0.0
      %2433 = vmatpush1.msra.mxu0 0.0
      %2434 = vmatprep.subr.mxu0 0.0
      %2435 = vmatpush1.msra.mxu0 0.0
      %2436 = vmatprep.subr.mxu0 0.0
      %2437 = vmatpush1.msra.mxu0 0.0
      %2438 = vmatprep.subr.mxu0 0.0
      %2439 = vmatpush1.msra.mxu0 0.0
      %2440 = vmatprep.subr.mxu0 0.0
      %2441 = vmatpush1.msra.mxu0 0.0
      %2442 = vmatprep.subr.mxu0 0.0
      %2443 = vmatpush1.msra.mxu0 0.0
      %2444 = vmatprep.subr.mxu0 0.0
      %2445 = vmatpush1.msra.mxu0 0.0
      %2446 = vmatprep.subr.mxu0 0.0
      %2447 = vmatpush1.msra.mxu0 0.0
      %2448 = vmatprep.subr.mxu0 0.0
      %2449 = vmatpush1.msra.mxu0 0.0
      %2450 = vmatprep.subr.mxu0 0.0
      %2451 = vmatpush1.msra.mxu0 0.0
      %2452 = vmatprep.subr.mxu0 0.0
      %2453 = vmatpush1.msra.mxu0 0.0
      %2454 = vmatprep.subr.mxu0 0.0
      %2455 = vmatpush1.msra.mxu0 0.0
      %2456 = vmatprep.subr.mxu0 0.0
      %2457 = vmatpush1.msra.mxu0 0.0
      %2458 = vmatprep.subr.mxu0 0.0
      %2459 = vmatpush1.msra.mxu0 0.0
      %2460 = vmatprep.subr.mxu0 0.0
      %2461 = vmatpush1.msra.mxu0 0.0
      %2462 = vmatprep.subr.mxu0 0.0
      %2463 = vmatpush1.msra.mxu0 0.0
      %2464 = vmatprep.subr.mxu0 0.0
      %2465 = vmatpush1.msra.mxu0 0.0
      %2466 = vmatprep.subr.mxu0 0.0
      %2467 = vmatpush1.msra.mxu0 0.0
      %2468 = vmatprep.subr.mxu0 0.0
      %2469 = vmatpush1.msra.mxu0 0.0
      %2470 = vmatprep.subr.mxu0 0.0
      %2471 = vmatpush1.msra.mxu0 0.0
      %2472 = vmatprep.subr.mxu0 0.0
      %2473 = vmatpush1.msra.mxu0 0.0
      %2474 = vmatprep.subr.mxu0 0.0
      %2475 = vmatpush1.msra.mxu0 0.0
      %2476 = vmatprep.subr.mxu0 0.0
      %2477 = vmatpush1.msra.mxu0 0.0
      %2478 = vmatprep.subr.mxu0 0.0
      %2479 = vmatpush1.msra.mxu0 0.0
      %2480 = vmatprep.subr.mxu0 0.0
      %2481 = vmatpush1.msra.mxu0 0.0
      %2482 = vmatprep.subr.mxu0 0.0
      %2483 = vmatpush1.msra.mxu0 0.0
      %2484 = vmatprep.subr.mxu0 0.0
      %2485 = vmatpush1.msra.mxu0 0.0
      %2486 = vmatprep.subr.mxu0 0.0
      %2487 = vmatpush1.msra.mxu0 0.0
      %2488 = vmatprep.subr.mxu0 0.0
      %2489 = vmatpush1.msra.mxu0 0.0
      %2490 = vmatprep.subr.mxu0 0.0
      %2491 = vmatpush1.msra.mxu0 0.0
      %2492 = vmatprep.subr.mxu0 0.0
      %2493 = vmatpush1.msra.mxu0 0.0
      %2494 = vmatprep.mubr.f32.mxu0 0.0
      %2495 = vmatmul.mubr.f32.gmra.mrb[0].mxu0 %v925
      %v2496 = vpop.f32.mrb[0].mxu0
      %v2497 = vadd.f32 %v2404, %v2496
      %v2498 = vpop.f32.mrb[0].mxu0
      %v2499 = vadd.f32 %v2406, %v2498
      %2500 = vmatprep.mubr.f32.mxu0 0.0
      %2501 = vmatmul.mubr.f32.gmra.mrb[0].mxu0 %v928
      %v2502 = vpop.f32.mrb[0].mxu0
      %v2503 = vadd.f32 %v2410, %v2502
      %v2504 = vpop.f32.mrb[0].mxu0
      %v2505 = vadd.f32 %v2412, %v2504
      %2506 = vmatprep.mubr.f32.mxu0 0.0
      %2507 = vmatmul.mubr.f32.gmra.mrb[0].mxu0 %v931
      %v2508 = vpop.f32.mrb[0].mxu0
      %v2509 = vadd.f32 %v2416, %v2508
      %v2510 = vpop.f32.mrb[0].mxu0
      %v2511 = vadd.f32 %v2418, %v2510
      %2512 = vmatprep.mubr.f32.mxu0 0.0
      %2513 = vmatmul.mubr.f32.gmra.mrb[0].mxu0 %v934
      %v2514 = vpop.f32.mrb[0].mxu0
      %v2515 = vadd.f32 %v2422, %v2514
      %v2516 = vpop.f32.mrb[0].mxu0
      %v2517 = vadd.f32 %v2424, %v2516
      %2518 = vdwg.mxu0
      %v2520 = vsel %vm828, %v2325, 0
      %v2523 = vsel %vm828, %v2327, 0
      %2525 = vmatprep.subr.mxu0 %v2523
      %2526 = vmatpush1.msra.mxu0 %v2520
      %2527 = vmatprep.subr.mxu0 0.0
      %2528 = vmatpush1.msra.mxu0 0.0
      %2529 = vmatprep.subr.mxu0 0.0
      %2530 = vmatpush1.msra.mxu0 0.0
      %2531 = vmatprep.subr.mxu0 0.0
      %2532 = vmatpush1.msra.mxu0 0.0
      %2533 = vmatprep.subr.mxu0 0.0
      %2534 = vmatpush1.msra.mxu0 0.0
      %2535 = vmatprep.subr.mxu0 0.0
      %2536 = vmatpush1.msra.mxu0 0.0
      %2537 = vmatprep.subr.mxu0 0.0
      %2538 = vmatpush1.msra.mxu0 0.0
      %2539 = vmatprep.subr.mxu0 0.0
      %2540 = vmatpush1.msra.mxu0 0.0
      %2541 = vmatprep.subr.mxu0 0.0
      %2542 = vmatpush1.msra.mxu0 0.0
      %2543 = vmatprep.subr.mxu0 0.0
      %2544 = vmatpush1.msra.mxu0 0.0
      %2545 = vmatprep.subr.mxu0 0.0
      %2546 = vmatpush1.msra.mxu0 0.0
      %2547 = vmatprep.subr.mxu0 0.0
      %2548 = vmatpush1.msra.mxu0 0.0
      %2549 = vmatprep.subr.mxu0 0.0
      %2550 = vmatpush1.msra.mxu0 0.0
      %2551 = vmatprep.subr.mxu0 0.0
      %2552 = vmatpush1.msra.mxu0 0.0
      %2553 = vmatprep.subr.mxu0 0.0
      %2554 = vmatpush1.msra.mxu0 0.0
      %2555 = vmatprep.subr.mxu0 0.0
      %2556 = vmatpush1.msra.mxu0 0.0
      %2557 = vmatprep.subr.mxu0 0.0
      %2558 = vmatpush1.msra.mxu0 0.0
      %2559 = vmatprep.subr.mxu0 0.0
      %2560 = vmatpush1.msra.mxu0 0.0
      %2561 = vmatprep.subr.mxu0 0.0
      %2562 = vmatpush1.msra.mxu0 0.0
      %2563 = vmatprep.subr.mxu0 0.0
      %2564 = vmatpush1.msra.mxu0 0.0
      %2565 = vmatprep.subr.mxu0 0.0
      %2566 = vmatpush1.msra.mxu0 0.0
      %2567 = vmatprep.subr.mxu0 0.0
      %2568 = vmatpush1.msra.mxu0 0.0
      %2569 = vmatprep.subr.mxu0 0.0
      %2570 = vmatpush1.msra.mxu0 0.0
      %2571 = vmatprep.subr.mxu0 0.0
      %2572 = vmatpush1.msra.mxu0 0.0
      %2573 = vmatprep.subr.mxu0 0.0
      %2574 = vmatpush1.msra.mxu0 0.0
      %2575 = vmatprep.subr.mxu0 0.0
      %2576 = vmatpush1.msra.mxu0 0.0
      %2577 = vmatprep.subr.mxu0 0.0
      %2578 = vmatpush1.msra.mxu0 0.0
      %2579 = vmatprep.subr.mxu0 0.0
      %2580 = vmatpush1.msra.mxu0 0.0
      %2581 = vmatprep.subr.mxu0 0.0
      %2582 = vmatpush1.msra.mxu0 0.0
      %2583 = vmatprep.subr.mxu0 0.0
      %2584 = vmatpush1.msra.mxu0 0.0
      %2585 = vmatprep.subr.mxu0 0.0
      %2586 = vmatpush1.msra.mxu0 0.0
      %2587 = vmatprep.subr.mxu0 0.0
      %2588 = vmatpush1.msra.mxu0 0.0
      %2589 = vmatprep.mubr.f32.mxu0 0.0
      %2590 = vmatmul.mubr.f32.gmra.mrb[0].mxu0 %v1030
      %v2591 = vpop.f32.mrb[0].mxu0
      %v2592 = vadd.f32 0.0, %v2591
      %v2593 = vpop.f32.mrb[0].mxu0
      %v2594 = vadd.f32 0.0, %v2593
      %2595 = vmatprep.mubr.f32.mxu0 0.0
      %2596 = vmatmul.mubr.f32.gmra.mrb[0].mxu0 %v1033
      %v2597 = vpop.f32.mrb[0].mxu0
      %v2598 = vadd.f32 0.0, %v2597
      %v2599 = vpop.f32.mrb[0].mxu0
      %v2600 = vadd.f32 0.0, %v2599
      %2601 = vmatprep.mubr.f32.mxu0 0.0
      %2602 = vmatmul.mubr.f32.gmra.mrb[0].mxu0 %v1036
      %v2603 = vpop.f32.mrb[0].mxu0
      %v2604 = vadd.f32 0.0, %v2603
      %v2605 = vpop.f32.mrb[0].mxu0
      %v2606 = vadd.f32 0.0, %v2605
      %2607 = vmatprep.mubr.f32.mxu0 0.0
      %2608 = vmatmul.mubr.f32.gmra.mrb[0].mxu0 %v1039
      %v2609 = vpop.f32.mrb[0].mxu0
      %v2610 = vadd.f32 0.0, %v2609
      %v2611 = vpop.f32.mrb[0].mxu0
      %v2612 = vadd.f32 0.0, %v2611
      %2613 = vdwg.mxu0
      %v2614 = vadd.f32 %v2497, %v2592
      %v2615 = vadd.f32 %v2499, %v2594
      %v2616 = vadd.f32 %v2503, %v2598
      %v2617 = vadd.f32 %v2505, %v2600
      %v2618 = vadd.f32 %v2509, %v2604
      %v2619 = vadd.f32 %v2511, %v2606
      %v2620 = vadd.f32 %v2515, %v2610
      %v2621 = vadd.f32 %v2517, %v2612
      %v2622 = vadd.f32 %v2614, %v1147
      %v2623 = vadd.f32 %v2615, %v1147
      %v2624 = vadd.f32 %v2616, %v1152
      %v2625 = vadd.f32 %v2617, %v1152
      %v2626 = vadd.f32 %v2618, %v1157
      %v2627 = vadd.f32 %v2619, %v1157
      %v2628 = vadd.f32 %v2620, %v1162
      %v2629 = vadd.f32 %v2621, %v1162
      %v2630 = vmax.f32 %v2622, 0.0
      %v2631 = vmax.f32 %v2623, 0.0
      %v2632 = vmax.f32 %v2624, 0.0
      %v2633 = vmax.f32 %v2625, 0.0
      %v2634 = vmax.f32 %v2626, 0.0
      %v2635 = vmax.f32 %v2627, 0.0
      %v2636 = vmax.f32 %v2628, 0.0
      %v2637 = vmax.f32 %v2629, 0.0
      %2638 = vmatprep.subr.mxu0 %v2631
      %2639 = vmatpush1.msra.mxu0 %v2630
      %2640 = vmatprep.subr.mxu0 %v2633
      %2641 = vmatpush1.msra.mxu0 %v2632
      %2642 = vmatprep.subr.mxu0 %v2635
      %2643 = vmatpush1.msra.mxu0 %v2634
      %2644 = vmatprep.subr.mxu0 %v2637
      %2645 = vmatpush1.msra.mxu0 %v2636
      %2646 = vmatprep.subr.mxu0 0.0
      %2647 = vmatpush1.msra.mxu0 0.0
      %2648 = vmatprep.subr.mxu0 0.0
      %2649 = vmatpush1.msra.mxu0 0.0
      %2650 = vmatprep.subr.mxu0 0.0
      %2651 = vmatpush1.msra.mxu0 0.0
      %2652 = vmatprep.subr.mxu0 0.0
      %2653 = vmatpush1.msra.mxu0 0.0
      %2654 = vmatprep.subr.mxu0 0.0
      %2655 = vmatpush1.msra.mxu0 0.0
      %2656 = vmatprep.subr.mxu0 0.0
      %2657 = vmatpush1.msra.mxu0 0.0
      %2658 = vmatprep.subr.mxu0 0.0
      %2659 = vmatpush1.msra.mxu0 0.0
      %2660 = vmatprep.subr.mxu0 0.0
      %2661 = vmatpush1.msra.mxu0 0.0
      %2662 = vmatprep.subr.mxu0 0.0
      %2663 = vmatpush1.msra.mxu0 0.0
      %2664 = vmatprep.subr.mxu0 0.0
      %2665 = vmatpush1.msra.mxu0 0.0
      %2666 = vmatprep.subr.mxu0 0.0
      %2667 = vmatpush1.msra.mxu0 0.0
      %2668 = vmatprep.subr.mxu0 0.0
      %2669 = vmatpush1.msra.mxu0 0.0
      %2670 = vmatprep.subr.mxu0 0.0
      %2671 = vmatpush1.msra.mxu0 0.0
      %2672 = vmatprep.subr.mxu0 0.0
      %2673 = vmatpush1.msra.mxu0 0.0
      %2674 = vmatprep.subr.mxu0 0.0
      %2675 = vmatpush1.msra.mxu0 0.0
      %2676 = vmatprep.subr.mxu0 0.0
      %2677 = vmatpush1.msra.mxu0 0.0
      %2678 = vmatprep.subr.mxu0 0.0
      %2679 = vmatpush1.msra.mxu0 0.0
      %2680 = vmatprep.subr.mxu0 0.0
      %2681 = vmatpush1.msra.mxu0 0.0
      %2682 = vmatprep.subr.mxu0 0.0
      %2683 = vmatpush1.msra.mxu0 0.0
      %2684 = vmatprep.subr.mxu0 0.0
      %2685 = vmatpush1.msra.mxu0 0.0
      %2686 = vmatprep.subr.mxu0 0.0
      %2687 = vmatpush1.msra.mxu0 0.0
      %2688 = vmatprep.subr.mxu0 0.0
      %2689 = vmatpush1.msra.mxu0 0.0
      %2690 = vmatprep.subr.mxu0 0.0
      %2691 = vmatpush1.msra.mxu0 0.0
      %2692 = vmatprep.subr.mxu0 0.0
      %2693 = vmatpush1.msra.mxu0 0.0
      %2694 = vmatprep.subr.mxu0 0.0
      %2695 = vmatpush1.msra.mxu0 0.0
      %2696 = vmatprep.subr.mxu0 0.0
      %2697 = vmatpush1.msra.mxu0 0.0
      %2698 = vmatprep.subr.mxu0 0.0
      %2699 = vmatpush1.msra.mxu0 0.0
      %2700 = vmatprep.subr.mxu0 0.0
      %2701 = vmatpush1.msra.mxu0 0.0
      %2702 = vmatprep.mubr.f32.mxu0 0.0
      %2703 = vmatmul.mubr.f32.gmra.mrb[0].mxu0 %v1182
      %v2704 = vpop.f32.mrb[0].mxu0
      %v2705 = vadd.f32 0.0, %v2704
      %v2706 = vpop.f32.mrb[0].mxu0
      %v2707 = vadd.f32 0.0, %v2706
      %2708 = vdwg.mxu0
      %s2709 = scalar_lea.vmem %s320, 3
      %v2710 = vld [vmem:[%s2709] ss:$8 sm:$0x3]
      %v2712 = vlaneseq
      %v2713 = vshrl.u32 %v2712, 7
      %v2714 = vsub.s32 0, %v2713
      %v2715 = vrot.slane %v2710, %v2714
      %v2716 = vlaneseq
      %v2717 = vshrl.u32 %v2716, 7
      %v2718 = vsub.s32 1, %v2717
      %v2719 = vrot.slane %v2710, %v2718
      %v2722 = vmul.f32 %v2705, %v2715
      %v2723 = vmul.f32 %v2707, %v2719
      %v2726 = vcombine.low %v2722, %v2723
      %v2728 = vadd.f32 %v2243, %v2726
      %v2730 = vcombine.high %v2728, %v2728
      %v2732 = vpack.c.bf16 %v2728, %v2728
      %v2733 = vpack.c.bf16 %v2730, %v2730
      %2734 = vmatprep.subr.bf16.mxu0 %v606
      %2735 = vmatpush1.bf16.msra.mxu0 %v605
      %2736 = vmatprep.subr.bf16.mxu0 %v610
      %2737 = vmatpush1.bf16.msra.mxu0 %v609
      %2738 = vmatprep.subr.bf16.mxu0 %v614
      %2739 = vmatpush1.bf16.msra.mxu0 %v613
      %2740 = vmatprep.subr.bf16.mxu0 %v618
      %2741 = vmatpush1.bf16.msra.mxu0 %v617
      %2742 = vmatprep.subr.bf16.mxu0 %v622
      %2743 = vmatpush1.bf16.msra.mxu0 %v621
      %2744 = vmatprep.subr.bf16.mxu0 %v626
      %2745 = vmatpush1.bf16.msra.mxu0 %v625
      %2746 = vmatprep.subr.bf16.mxu0 %v630
      %2747 = vmatpush1.bf16.msra.mxu0 %v629
      %2748 = vmatprep.subr.bf16.mxu0 %v634
      %2749 = vmatpush1.bf16.msra.mxu0 %v633
      %2750 = vmatprep.subr.bf16.mxu0 %v638
      %2751 = vmatpush1.bf16.msra.mxu0 %v637
      %2752 = vmatprep.subr.bf16.mxu0 %v642
      %2753 = vmatpush1.bf16.msra.mxu0 %v641
      %2754 = vmatprep.subr.bf16.mxu0 %v646
      %2755 = vmatpush1.bf16.msra.mxu0 %v645
      %2756 = vmatprep.subr.bf16.mxu0 %v650
      %2757 = vmatpush1.bf16.msra.mxu0 %v649
      %2758 = vmatprep.subr.bf16.mxu0 %v654
      %2759 = vmatpush1.bf16.msra.mxu0 %v653
      %2760 = vmatprep.subr.bf16.mxu0 %v658
      %2761 = vmatpush1.bf16.msra.mxu0 %v657
      %2762 = vmatprep.subr.bf16.mxu0 %v662
      %2763 = vmatpush1.bf16.msra.mxu0 %v661
      %2764 = vmatprep.subr.bf16.mxu0 %v666
      %2765 = vmatpush1.bf16.msra.mxu0 %v665
      %2766 = vmatprep.mubr.bf16.mxu0 %v2733
      %2767 = vmatmul.mubr.bf16.gmra.mrb[0].mxu0 %v2732
      %v2768 = vpop.f32.mrb[0].mxu0
      %v2769 = vadd.f32 0.0, %v2768
      %v2770 = vpop.f32.mrb[0].mxu0
      %v2771 = vadd.f32 0.0, %v2770
      %v2772 = vpop.f32.mrb[0].mxu0
      %v2773 = vpop.f32.mrb[0].mxu0
      %2774 = vdwg.mxu0
      %2775 = vmatprep.subr.bf16.mxu0 %v608
      %2776 = vmatpush1.bf16.msra.mxu0 %v607
      %2777 = vmatprep.subr.bf16.mxu0 %v612
      %2778 = vmatpush1.bf16.msra.mxu0 %v611
      %2779 = vmatprep.subr.bf16.mxu0 %v616
      %2780 = vmatpush1.bf16.msra.mxu0 %v615
      %2781 = vmatprep.subr.bf16.mxu0 %v620
      %2782 = vmatpush1.bf16.msra.mxu0 %v619
      %2783 = vmatprep.subr.bf16.mxu0 %v624
      %2784 = vmatpush1.bf16.msra.mxu0 %v623
      %2785 = vmatprep.subr.bf16.mxu0 %v628
      %2786 = vmatpush1.bf16.msra.mxu0 %v627
      %2787 = vmatprep.subr.bf16.mxu0 %v632
      %2788 = vmatpush1.bf16.msra.mxu0 %v631
      %2789 = vmatprep.subr.bf16.mxu0 %v636
      %2790 = vmatpush1.bf16.msra.mxu0 %v635
      %2791 = vmatprep.subr.bf16.mxu0 %v640
      %2792 = vmatpush1.bf16.msra.mxu0 %v639
      %2793 = vmatprep.subr.bf16.mxu0 %v644
      %2794 = vmatpush1.bf16.msra.mxu0 %v643
      %2795 = vmatprep.subr.bf16.mxu0 %v648
      %2796 = vmatpush1.bf16.msra.mxu0 %v647
      %2797 = vmatprep.subr.bf16.mxu0 %v652
      %2798 = vmatpush1.bf16.msra.mxu0 %v651
      %2799 = vmatprep.subr.bf16.mxu0 %v656
      %2800 = vmatpush1.bf16.msra.mxu0 %v655
      %2801 = vmatprep.subr.bf16.mxu0 %v660
      %2802 = vmatpush1.bf16.msra.mxu0 %v659
      %2803 = vmatprep.subr.bf16.mxu0 %v664
      %2804 = vmatpush1.bf16.msra.mxu0 %v663
      %2805 = vmatprep.subr.bf16.mxu0 %v668
      %2806 = vmatpush1.bf16.msra.mxu0 %v667
      %2807 = vmatprep.mubr.bf16.mxu0 %v2733
      %2808 = vmatmul.mubr.bf16.gmra.mrb[0].mxu0 %v2732
      %v2809 = vpop.f32.mrb[0].mxu0
      %v2810 = vadd.f32 0.0, %v2809
      %v2811 = vpop.f32.mrb[0].mxu0
      %v2812 = vadd.f32 0.0, %v2811
      %v2813 = vpop.f32.mrb[0].mxu0
      %v2814 = vpop.f32.mrb[0].mxu0
      %2815 = vdwg.mxu0
      %v2817 = vsel %vm828, %v2769, 0
      %v2820 = vsel %vm828, %v2771, 0
      %2822 = vmatprep.subr.mxu0 %v2820
      %2823 = vmatpush1.msra.mxu0 %v2817
      %2824 = vmatprep.subr.mxu0 0.0
      %2825 = vmatpush1.msra.mxu0 0.0
      %2826 = vmatprep.subr.mxu0 0.0
      %2827 = vmatpush1.msra.mxu0 0.0
      %2828 = vmatprep.subr.mxu0 0.0
      %2829 = vmatpush1.msra.mxu0 0.0
      %2830 = vmatprep.subr.mxu0 0.0
      %2831 = vmatpush1.msra.mxu0 0.0
      %2832 = vmatprep.subr.mxu0 0.0
      %2833 = vmatpush1.msra.mxu0 0.0
      %2834 = vmatprep.subr.mxu0 0.0
      %2835 = vmatpush1.msra.mxu0 0.0
      %2836 = vmatprep.subr.mxu0 0.0
      %2837 = vmatpush1.msra.mxu0 0.0
      %2838 = vmatprep.subr.mxu0 0.0
      %2839 = vmatpush1.msra.mxu0 0.0
      %2840 = vmatprep.subr.mxu0 0.0
      %2841 = vmatpush1.msra.mxu0 0.0
      %2842 = vmatprep.subr.mxu0 0.0
      %2843 = vmatpush1.msra.mxu0 0.0
      %2844 = vmatprep.subr.mxu0 0.0
      %2845 = vmatpush1.msra.mxu0 0.0
      %2846 = vmatprep.subr.mxu0 0.0
      %2847 = vmatpush1.msra.mxu0 0.0
      %2848 = vmatprep.subr.mxu0 0.0
      %2849 = vmatpush1.msra.mxu0 0.0
      %2850 = vmatprep.subr.mxu0 0.0
      %2851 = vmatpush1.msra.mxu0 0.0
      %2852 = vmatprep.subr.mxu0 0.0
      %2853 = vmatpush1.msra.mxu0 0.0
      %2854 = vmatprep.subr.mxu0 0.0
      %2855 = vmatpush1.msra.mxu0 0.0
      %2856 = vmatprep.subr.mxu0 0.0
      %2857 = vmatpush1.msra.mxu0 0.0
      %2858 = vmatprep.subr.mxu0 0.0
      %2859 = vmatpush1.msra.mxu0 0.0
      %2860 = vmatprep.subr.mxu0 0.0
      %2861 = vmatpush1.msra.mxu0 0.0
      %2862 = vmatprep.subr.mxu0 0.0
      %2863 = vmatpush1.msra.mxu0 0.0
      %2864 = vmatprep.subr.mxu0 0.0
      %2865 = vmatpush1.msra.mxu0 0.0
      %2866 = vmatprep.subr.mxu0 0.0
      %2867 = vmatpush1.msra.mxu0 0.0
      %2868 = vmatprep.subr.mxu0 0.0
      %2869 = vmatpush1.msra.mxu0 0.0
      %2870 = vmatprep.subr.mxu0 0.0
      %2871 = vmatpush1.msra.mxu0 0.0
      %2872 = vmatprep.subr.mxu0 0.0
      %2873 = vmatpush1.msra.mxu0 0.0
      %2874 = vmatprep.subr.mxu0 0.0
      %2875 = vmatpush1.msra.mxu0 0.0
      %2876 = vmatprep.subr.mxu0 0.0
      %2877 = vmatpush1.msra.mxu0 0.0
      %2878 = vmatprep.subr.mxu0 0.0
      %2879 = vmatpush1.msra.mxu0 0.0
      %2880 = vmatprep.subr.mxu0 0.0
      %2881 = vmatpush1.msra.mxu0 0.0
      %2882 = vmatprep.subr.mxu0 0.0
      %2883 = vmatpush1.msra.mxu0 0.0
      %2884 = vmatprep.subr.mxu0 0.0
      %2885 = vmatpush1.msra.mxu0 0.0
      %2886 = vmatprep.mubr.f32.mxu0 0.0
      %2887 = vmatmul.mubr.f32.gmra.mrb[0].mxu0 %v817
      %v2888 = vpop.f32.mrb[0].mxu0
      %v2889 = vadd.f32 0.0, %v2888
      %v2890 = vpop.f32.mrb[0].mxu0
      %v2891 = vadd.f32 0.0, %v2890
      %2892 = vmatprep.mubr.f32.mxu0 0.0
      %2893 = vmatmul.mubr.f32.gmra.mrb[0].mxu0 %v820
      %v2894 = vpop.f32.mrb[0].mxu0
      %v2895 = vadd.f32 0.0, %v2894
      %v2896 = vpop.f32.mrb[0].mxu0
      %v2897 = vadd.f32 0.0, %v2896
      %2898 = vmatprep.mubr.f32.mxu0 0.0
      %2899 = vmatmul.mubr.f32.gmra.mrb[0].mxu0 %v823
      %v2900 = vpop.f32.mrb[0].mxu0
      %v2901 = vadd.f32 0.0, %v2900
      %v2902 = vpop.f32.mrb[0].mxu0
      %v2903 = vadd.f32 0.0, %v2902
      %2904 = vmatprep.mubr.f32.mxu0 0.0
      %2905 = vmatmul.mubr.f32.gmra.mrb[0].mxu0 %v826
      %v2906 = vpop.f32.mrb[0].mxu0
      %v2907 = vadd.f32 0.0, %v2906
      %v2908 = vpop.f32.mrb[0].mxu0
      %v2909 = vadd.f32 0.0, %v2908
      %2910 = vdwg.mxu0
      %v2911 = vsel %vm828, %v2728, 0
      %v2913 = vsel %vm828, %v2730, 0
      %2915 = vmatprep.subr.mxu0 %v2913
      %2916 = vmatpush1.msra.mxu0 %v2911
      %2917 = vmatprep.subr.mxu0 0.0
      %2918 = vmatpush1.msra.mxu0 0.0
      %2919 = vmatprep.subr.mxu0 0.0
      %2920 = vmatpush1.msra.mxu0 0.0
      %2921 = vmatprep.subr.mxu0 0.0
      %2922 = vmatpush1.msra.mxu0 0.0
      %2923 = vmatprep.subr.mxu0 0.0
      %2924 = vmatpush1.msra.mxu0 0.0
      %2925 = vmatprep.subr.mxu0 0.0
      %2926 = vmatpush1.msra.mxu0 0.0
      %2927 = vmatprep.subr.mxu0 0.0
      %2928 = vmatpush1.msra.mxu0 0.0
      %2929 = vmatprep.subr.mxu0 0.0
      %2930 = vmatpush1.msra.mxu0 0.0
      %2931 = vmatprep.subr.mxu0 0.0
      %2932 = vmatpush1.msra.mxu0 0.0
      %2933 = vmatprep.subr.mxu0 0.0
      %2934 = vmatpush1.msra.mxu0 0.0
      %2935 = vmatprep.subr.mxu0 0.0
      %2936 = vmatpush1.msra.mxu0 0.0
      %2937 = vmatprep.subr.mxu0 0.0
      %2938 = vmatpush1.msra.mxu0 0.0
      %2939 = vmatprep.subr.mxu0 0.0
      %2940 = vmatpush1.msra.mxu0 0.0
      %2941 = vmatprep.subr.mxu0 0.0
      %2942 = vmatpush1.msra.mxu0 0.0
      %2943 = vmatprep.subr.mxu0 0.0
      %2944 = vmatpush1.msra.mxu0 0.0
      %2945 = vmatprep.subr.mxu0 0.0
      %2946 = vmatpush1.msra.mxu0 0.0
      %2947 = vmatprep.subr.mxu0 0.0
      %2948 = vmatpush1.msra.mxu0 0.0
      %2949 = vmatprep.subr.mxu0 0.0
      %2950 = vmatpush1.msra.mxu0 0.0
      %2951 = vmatprep.subr.mxu0 0.0
      %2952 = vmatpush1.msra.mxu0 0.0
      %2953 = vmatprep.subr.mxu0 0.0
      %2954 = vmatpush1.msra.mxu0 0.0
      %2955 = vmatprep.subr.mxu0 0.0
      %2956 = vmatpush1.msra.mxu0 0.0
      %2957 = vmatprep.subr.mxu0 0.0
      %2958 = vmatpush1.msra.mxu0 0.0
      %2959 = vmatprep.subr.mxu0 0.0
      %2960 = vmatpush1.msra.mxu0 0.0
      %2961 = vmatprep.subr.mxu0 0.0
      %2962 = vmatpush1.msra.mxu0 0.0
      %2963 = vmatprep.subr.mxu0 0.0
      %2964 = vmatpush1.msra.mxu0 0.0
      %2965 = vmatprep.subr.mxu0 0.0
      %2966 = vmatpush1.msra.mxu0 0.0
      %2967 = vmatprep.subr.mxu0 0.0
      %2968 = vmatpush1.msra.mxu0 0.0
      %2969 = vmatprep.subr.mxu0 0.0
      %2970 = vmatpush1.msra.mxu0 0.0
      %2971 = vmatprep.subr.mxu0 0.0
      %2972 = vmatpush1.msra.mxu0 0.0
      %2973 = vmatprep.subr.mxu0 0.0
      %2974 = vmatpush1.msra.mxu0 0.0
      %2975 = vmatprep.subr.mxu0 0.0
      %2976 = vmatpush1.msra.mxu0 0.0
      %2977 = vmatprep.subr.mxu0 0.0
      %2978 = vmatpush1.msra.mxu0 0.0
      %2979 = vmatprep.mubr.f32.mxu0 0.0
      %2980 = vmatmul.mubr.f32.gmra.mrb[0].mxu0 %v925
      %v2981 = vpop.f32.mrb[0].mxu0
      %v2982 = vadd.f32 %v2889, %v2981
      %v2983 = vpop.f32.mrb[0].mxu0
      %v2984 = vadd.f32 %v2891, %v2983
      %2985 = vmatprep.mubr.f32.mxu0 0.0
      %2986 = vmatmul.mubr.f32.gmra.mrb[0].mxu0 %v928
      %v2987 = vpop.f32.mrb[0].mxu0
      %v2988 = vadd.f32 %v2895, %v2987
      %v2989 = vpop.f32.mrb[0].mxu0
      %v2990 = vadd.f32 %v2897, %v2989
      %2991 = vmatprep.mubr.f32.mxu0 0.0
      %2992 = vmatmul.mubr.f32.gmra.mrb[0].mxu0 %v931
      %v2993 = vpop.f32.mrb[0].mxu0
      %v2994 = vadd.f32 %v2901, %v2993
      %v2995 = vpop.f32.mrb[0].mxu0
      %v2996 = vadd.f32 %v2903, %v2995
      %2997 = vmatprep.mubr.f32.mxu0 0.0
      %2998 = vmatmul.mubr.f32.gmra.mrb[0].mxu0 %v934
      %v2999 = vpop.f32.mrb[0].mxu0
      %v3000 = vadd.f32 %v2907, %v2999
      %v3001 = vpop.f32.mrb[0].mxu0
      %v3002 = vadd.f32 %v2909, %v3001
      %3003 = vdwg.mxu0
      %v3005 = vsel %vm828, %v2810, 0
      %v3008 = vsel %vm828, %v2812, 0
      %3010 = vmatprep.subr.mxu0 %v3008
      %3011 = vmatpush1.msra.mxu0 %v3005
      %3012 = vmatprep.subr.mxu0 0.0
      %3013 = vmatpush1.msra.mxu0 0.0
      %3014 = vmatprep.subr.mxu0 0.0
      %3015 = vmatpush1.msra.mxu0 0.0
      %3016 = vmatprep.subr.mxu0 0.0
      %3017 = vmatpush1.msra.mxu0 0.0
      %3018 = vmatprep.subr.mxu0 0.0
      %3019 = vmatpush1.msra.mxu0 0.0
      %3020 = vmatprep.subr.mxu0 0.0
      %3021 = vmatpush1.msra.mxu0 0.0
      %3022 = vmatprep.subr.mxu0 0.0
      %3023 = vmatpush1.msra.mxu0 0.0
      %3024 = vmatprep.subr.mxu0 0.0
      %3025 = vmatpush1.msra.mxu0 0.0
      %3026 = vmatprep.subr.mxu0 0.0
      %3027 = vmatpush1.msra.mxu0 0.0
      %3028 = vmatprep.subr.mxu0 0.0
      %3029 = vmatpush1.msra.mxu0 0.0
      %3030 = vmatprep.subr.mxu0 0.0
      %3031 = vmatpush1.msra.mxu0 0.0
      %3032 = vmatprep.subr.mxu0 0.0
      %3033 = vmatpush1.msra.mxu0 0.0
      %3034 = vmatprep.subr.mxu0 0.0
      %3035 = vmatpush1.msra.mxu0 0.0
      %3036 = vmatprep.subr.mxu0 0.0
      %3037 = vmatpush1.msra.mxu0 0.0
      %3038 = vmatprep.subr.mxu0 0.0
      %3039 = vmatpush1.msra.mxu0 0.0
      %3040 = vmatprep.subr.mxu0 0.0
      %3041 = vmatpush1.msra.mxu0 0.0
      %3042 = vmatprep.subr.mxu0 0.0
      %3043 = vmatpush1.msra.mxu0 0.0
      %3044 = vmatprep.subr.mxu0 0.0
      %3045 = vmatpush1.msra.mxu0 0.0
      %3046 = vmatprep.subr.mxu0 0.0
      %3047 = vmatpush1.msra.mxu0 0.0
      %3048 = vmatprep.subr.mxu0 0.0
      %3049 = vmatpush1.msra.mxu0 0.0
      %3050 = vmatprep.subr.mxu0 0.0
      %3051 = vmatpush1.msra.mxu0 0.0
      %3052 = vmatprep.subr.mxu0 0.0
      %3053 = vmatpush1.msra.mxu0 0.0
      %3054 = vmatprep.subr.mxu0 0.0
      %3055 = vmatpush1.msra.mxu0 0.0
      %3056 = vmatprep.subr.mxu0 0.0
      %3057 = vmatpush1.msra.mxu0 0.0
      %3058 = vmatprep.subr.mxu0 0.0
      %3059 = vmatpush1.msra.mxu0 0.0
      %3060 = vmatprep.subr.mxu0 0.0
      %3061 = vmatpush1.msra.mxu0 0.0
      %3062 = vmatprep.subr.mxu0 0.0
      %3063 = vmatpush1.msra.mxu0 0.0
      %3064 = vmatprep.subr.mxu0 0.0
      %3065 = vmatpush1.msra.mxu0 0.0
      %3066 = vmatprep.subr.mxu0 0.0
      %3067 = vmatpush1.msra.mxu0 0.0
      %3068 = vmatprep.subr.mxu0 0.0
      %3069 = vmatpush1.msra.mxu0 0.0
      %3070 = vmatprep.subr.mxu0 0.0
      %3071 = vmatpush1.msra.mxu0 0.0
      %3072 = vmatprep.subr.mxu0 0.0
      %3073 = vmatpush1.msra.mxu0 0.0
      %3074 = vmatprep.mubr.f32.mxu0 0.0
      %3075 = vmatmul.mubr.f32.gmra.mrb[0].mxu0 %v1030
      %v3076 = vpop.f32.mrb[0].mxu0
      %v3077 = vadd.f32 0.0, %v3076
      %v3078 = vpop.f32.mrb[0].mxu0
      %v3079 = vadd.f32 0.0, %v3078
      %3080 = vmatprep.mubr.f32.mxu0 0.0
      %3081 = vmatmul.mubr.f32.gmra.mrb[0].mxu0 %v1033
      %v3082 = vpop.f32.mrb[0].mxu0
      %v3083 = vadd.f32 0.0, %v3082
      %v3084 = vpop.f32.mrb[0].mxu0
      %v3085 = vadd.f32 0.0, %v3084
      %3086 = vmatprep.mubr.f32.mxu0 0.0
      %3087 = vmatmul.mubr.f32.gmra.mrb[0].mxu0 %v1036
      %v3088 = vpop.f32.mrb[0].mxu0
      %v3089 = vadd.f32 0.0, %v3088
      %v3090 = vpop.f32.mrb[0].mxu0
      %v3091 = vadd.f32 0.0, %v3090
      %3092 = vmatprep.mubr.f32.mxu0 0.0
      %3093 = vmatmul.mubr.f32.gmra.mrb[0].mxu0 %v1039
      %v3094 = vpop.f32.mrb[0].mxu0
      %v3095 = vadd.f32 0.0, %v3094
      %v3096 = vpop.f32.mrb[0].mxu0
      %v3097 = vadd.f32 0.0, %v3096
      %3098 = vdwg.mxu0
      %v3099 = vadd.f32 %v2982, %v3077
      %v3100 = vadd.f32 %v2984, %v3079
      %v3101 = vadd.f32 %v2988, %v3083
      %v3102 = vadd.f32 %v2990, %v3085
      %v3103 = vadd.f32 %v2994, %v3089
      %v3104 = vadd.f32 %v2996, %v3091
      %v3105 = vadd.f32 %v3000, %v3095
      %v3106 = vadd.f32 %v3002, %v3097
      %v3107 = vadd.f32 %v3099, %v1147
      %v3108 = vadd.f32 %v3100, %v1147
      %v3109 = vadd.f32 %v3101, %v1152
      %v3110 = vadd.f32 %v3102, %v1152
      %v3111 = vadd.f32 %v3103, %v1157
      %v3112 = vadd.f32 %v3104, %v1157
      %v3113 = vadd.f32 %v3105, %v1162
      %v3114 = vadd.f32 %v3106, %v1162
      %v3115 = vmax.f32 %v3107, 0.0
      %v3116 = vmax.f32 %v3108, 0.0
      %v3117 = vmax.f32 %v3109, 0.0
      %v3118 = vmax.f32 %v3110, 0.0
      %v3119 = vmax.f32 %v3111, 0.0
      %v3120 = vmax.f32 %v3112, 0.0
      %v3121 = vmax.f32 %v3113, 0.0
      %v3122 = vmax.f32 %v3114, 0.0
      %3123 = vmatprep.subr.mxu0 %v3116
      %3124 = vmatpush1.msra.mxu0 %v3115
      %3125 = vmatprep.subr.mxu0 %v3118
      %3126 = vmatpush1.msra.mxu0 %v3117
      %3127 = vmatprep.subr.mxu0 %v3120
      %3128 = vmatpush1.msra.mxu0 %v3119
      %3129 = vmatprep.subr.mxu0 %v3122
      %3130 = vmatpush1.msra.mxu0 %v3121
      %3131 = vmatprep.subr.mxu0 0.0
      %3132 = vmatpush1.msra.mxu0 0.0
      %3133 = vmatprep.subr.mxu0 0.0
      %3134 = vmatpush1.msra.mxu0 0.0
      %3135 = vmatprep.subr.mxu0 0.0
      %3136 = vmatpush1.msra.mxu0 0.0
      %3137 = vmatprep.subr.mxu0 0.0
      %3138 = vmatpush1.msra.mxu0 0.0
      %3139 = vmatprep.subr.mxu0 0.0
      %3140 = vmatpush1.msra.mxu0 0.0
      %3141 = vmatprep.subr.mxu0 0.0
      %3142 = vmatpush1.msra.mxu0 0.0
      %3143 = vmatprep.subr.mxu0 0.0
      %3144 = vmatpush1.msra.mxu0 0.0
      %3145 = vmatprep.subr.mxu0 0.0
      %3146 = vmatpush1.msra.mxu0 0.0
      %3147 = vmatprep.subr.mxu0 0.0
      %3148 = vmatpush1.msra.mxu0 0.0
      %3149 = vmatprep.subr.mxu0 0.0
      %3150 = vmatpush1.msra.mxu0 0.0
      %3151 = vmatprep.subr.mxu0 0.0
      %3152 = vmatpush1.msra.mxu0 0.0
      %3153 = vmatprep.subr.mxu0 0.0
      %3154 = vmatpush1.msra.mxu0 0.0
      %3155 = vmatprep.subr.mxu0 0.0
      %3156 = vmatpush1.msra.mxu0 0.0
      %3157 = vmatprep.subr.mxu0 0.0
      %3158 = vmatpush1.msra.mxu0 0.0
      %3159 = vmatprep.subr.mxu0 0.0
      %3160 = vmatpush1.msra.mxu0 0.0
      %3161 = vmatprep.subr.mxu0 0.0
      %3162 = vmatpush1.msra.mxu0 0.0
      %3163 = vmatprep.subr.mxu0 0.0
      %3164 = vmatpush1.msra.mxu0 0.0
      %3165 = vmatprep.subr.mxu0 0.0
      %3166 = vmatpush1.msra.mxu0 0.0
      %3167 = vmatprep.subr.mxu0 0.0
      %3168 = vmatpush1.msra.mxu0 0.0
      %3169 = vmatprep.subr.mxu0 0.0
      %3170 = vmatpush1.msra.mxu0 0.0
      %3171 = vmatprep.subr.mxu0 0.0
      %3172 = vmatpush1.msra.mxu0 0.0
      %3173 = vmatprep.subr.mxu0 0.0
      %3174 = vmatpush1.msra.mxu0 0.0
      %3175 = vmatprep.subr.mxu0 0.0
      %3176 = vmatpush1.msra.mxu0 0.0
      %3177 = vmatprep.subr.mxu0 0.0
      %3178 = vmatpush1.msra.mxu0 0.0
      %3179 = vmatprep.subr.mxu0 0.0
      %3180 = vmatpush1.msra.mxu0 0.0
      %3181 = vmatprep.subr.mxu0 0.0
      %3182 = vmatpush1.msra.mxu0 0.0
      %3183 = vmatprep.subr.mxu0 0.0
      %3184 = vmatpush1.msra.mxu0 0.0
      %3185 = vmatprep.subr.mxu0 0.0
      %3186 = vmatpush1.msra.mxu0 0.0
      %3187 = vmatprep.mubr.f32.mxu0 0.0
      %3188 = vmatmul.mubr.f32.gmra.mrb[0].mxu0 %v1182
      %v3189 = vpop.f32.mrb[0].mxu0
      %v3190 = vadd.f32 0.0, %v3189
      %v3191 = vpop.f32.mrb[0].mxu0
      %v3192 = vadd.f32 0.0, %v3191
      %3193 = vdwg.mxu0
      %s3194 = scalar_lea.vmem %s320, 4
      %v3195 = vld [vmem:[%s3194] ss:$8 sm:$0x3]
      %v3197 = vlaneseq
      %v3198 = vshrl.u32 %v3197, 7
      %v3199 = vsub.s32 0, %v3198
      %v3200 = vrot.slane %v3195, %v3199
      %v3201 = vlaneseq
      %v3202 = vshrl.u32 %v3201, 7
      %v3203 = vsub.s32 1, %v3202
      %v3204 = vrot.slane %v3195, %v3203
      %v3207 = vmul.f32 %v3190, %v3200
      %v3208 = vmul.f32 %v3192, %v3204
      %v3211 = vcombine.low %v3207, %v3208
      %v3213 = vadd.f32 %v2728, %v3211
      %v3215 = vcombine.high %v3213, %v3213
      %v3217 = vpack.c.bf16 %v3213, %v3213
      %v3218 = vpack.c.bf16 %v3215, %v3215
      %3219 = vmatprep.subr.bf16.mxu0 %v606
      %3220 = vmatpush1.bf16.msra.mxu0 %v605
      %3221 = vmatprep.subr.bf16.mxu0 %v610
      %3222 = vmatpush1.bf16.msra.mxu0 %v609
      %3223 = vmatprep.subr.bf16.mxu0 %v614
      %3224 = vmatpush1.bf16.msra.mxu0 %v613
      %3225 = vmatprep.subr.bf16.mxu0 %v618
      %3226 = vmatpush1.bf16.msra.mxu0 %v617
      %3227 = vmatprep.subr.bf16.mxu0 %v622
      %3228 = vmatpush1.bf16.msra.mxu0 %v621
      %3229 = vmatprep.subr.bf16.mxu0 %v626
      %3230 = vmatpush1.bf16.msra.mxu0 %v625
      %3231 = vmatprep.subr.bf16.mxu0 %v630
      %3232 = vmatpush1.bf16.msra.mxu0 %v629
      %3233 = vmatprep.subr.bf16.mxu0 %v634
      %3234 = vmatpush1.bf16.msra.mxu0 %v633
      %3235 = vmatprep.subr.bf16.mxu0 %v638
      %3236 = vmatpush1.bf16.msra.mxu0 %v637
      %3237 = vmatprep.subr.bf16.mxu0 %v642
      %3238 = vmatpush1.bf16.msra.mxu0 %v641
      %3239 = vmatprep.subr.bf16.mxu0 %v646
      %3240 = vmatpush1.bf16.msra.mxu0 %v645
      %3241 = vmatprep.subr.bf16.mxu0 %v650
      %3242 = vmatpush1.bf16.msra.mxu0 %v649
      %3243 = vmatprep.subr.bf16.mxu0 %v654
      %3244 = vmatpush1.bf16.msra.mxu0 %v653
      %3245 = vmatprep.subr.bf16.mxu0 %v658
      %3246 = vmatpush1.bf16.msra.mxu0 %v657
      %3247 = vmatprep.subr.bf16.mxu0 %v662
      %3248 = vmatpush1.bf16.msra.mxu0 %v661
      %3249 = vmatprep.subr.bf16.mxu0 %v666
      %3250 = vmatpush1.bf16.msra.mxu0 %v665
      %3251 = vmatprep.mubr.bf16.mxu0 %v3218
      %3252 = vmatmul.mubr.bf16.gmra.mrb[0].mxu0 %v3217
      %v3253 = vpop.f32.mrb[0].mxu0
      %v3254 = vadd.f32 0.0, %v3253
      %v3255 = vpop.f32.mrb[0].mxu0
      %v3256 = vadd.f32 0.0, %v3255
      %v3257 = vpop.f32.mrb[0].mxu0
      %v3258 = vpop.f32.mrb[0].mxu0
      %3259 = vdwg.mxu0
      %3260 = vmatprep.subr.bf16.mxu0 %v608
      %3261 = vmatpush1.bf16.msra.mxu0 %v607
      %3262 = vmatprep.subr.bf16.mxu0 %v612
      %3263 = vmatpush1.bf16.msra.mxu0 %v611
      %3264 = vmatprep.subr.bf16.mxu0 %v616
      %3265 = vmatpush1.bf16.msra.mxu0 %v615
      %3266 = vmatprep.subr.bf16.mxu0 %v620
      %3267 = vmatpush1.bf16.msra.mxu0 %v619
      %3268 = vmatprep.subr.bf16.mxu0 %v624
      %3269 = vmatpush1.bf16.msra.mxu0 %v623
      %3270 = vmatprep.subr.bf16.mxu0 %v628
      %3271 = vmatpush1.bf16.msra.mxu0 %v627
      %3272 = vmatprep.subr.bf16.mxu0 %v632
      %3273 = vmatpush1.bf16.msra.mxu0 %v631
      %3274 = vmatprep.subr.bf16.mxu0 %v636
      %3275 = vmatpush1.bf16.msra.mxu0 %v635
      %3276 = vmatprep.subr.bf16.mxu0 %v640
      %3277 = vmatpush1.bf16.msra.mxu0 %v639
      %3278 = vmatprep.subr.bf16.mxu0 %v644
      %3279 = vmatpush1.bf16.msra.mxu0 %v643
      %3280 = vmatprep.subr.bf16.mxu0 %v648
      %3281 = vmatpush1.bf16.msra.mxu0 %v647
      %3282 = vmatprep.subr.bf16.mxu0 %v652
      %3283 = vmatpush1.bf16.msra.mxu0 %v651
      %3284 = vmatprep.subr.bf16.mxu0 %v656
      %3285 = vmatpush1.bf16.msra.mxu0 %v655
      %3286 = vmatprep.subr.bf16.mxu0 %v660
      %3287 = vmatpush1.bf16.msra.mxu0 %v659
      %3288 = vmatprep.subr.bf16.mxu0 %v664
      %3289 = vmatpush1.bf16.msra.mxu0 %v663
      %3290 = vmatprep.subr.bf16.mxu0 %v668
      %3291 = vmatpush1.bf16.msra.mxu0 %v667
      %3292 = vmatprep.mubr.bf16.mxu0 %v3218
      %3293 = vmatmul.mubr.bf16.gmra.mrb[0].mxu0 %v3217
      %v3294 = vpop.f32.mrb[0].mxu0
      %v3295 = vadd.f32 0.0, %v3294
      %v3296 = vpop.f32.mrb[0].mxu0
      %v3297 = vadd.f32 0.0, %v3296
      %v3298 = vpop.f32.mrb[0].mxu0
      %v3299 = vpop.f32.mrb[0].mxu0
      %3300 = vdwg.mxu0
      %v3302 = vsel %vm828, %v3254, 0
      %v3305 = vsel %vm828, %v3256, 0
      %3307 = vmatprep.subr.mxu0 %v3305
      %3308 = vmatpush1.msra.mxu0 %v3302
      %3309 = vmatprep.subr.mxu0 0.0
      %3310 = vmatpush1.msra.mxu0 0.0
      %3311 = vmatprep.subr.mxu0 0.0
      %3312 = vmatpush1.msra.mxu0 0.0
      %3313 = vmatprep.subr.mxu0 0.0
      %3314 = vmatpush1.msra.mxu0 0.0
      %3315 = vmatprep.subr.mxu0 0.0
      %3316 = vmatpush1.msra.mxu0 0.0
      %3317 = vmatprep.subr.mxu0 0.0
      %3318 = vmatpush1.msra.mxu0 0.0
      %3319 = vmatprep.subr.mxu0 0.0
      %3320 = vmatpush1.msra.mxu0 0.0
      %3321 = vmatprep.subr.mxu0 0.0
      %3322 = vmatpush1.msra.mxu0 0.0
      %3323 = vmatprep.subr.mxu0 0.0
      %3324 = vmatpush1.msra.mxu0 0.0
      %3325 = vmatprep.subr.mxu0 0.0
      %3326 = vmatpush1.msra.mxu0 0.0
      %3327 = vmatprep.subr.mxu0 0.0
      %3328 = vmatpush1.msra.mxu0 0.0
      %3329 = vmatprep.subr.mxu0 0.0
      %3330 = vmatpush1.msra.mxu0 0.0
      %3331 = vmatprep.subr.mxu0 0.0
      %3332 = vmatpush1.msra.mxu0 0.0
      %3333 = vmatprep.subr.mxu0 0.0
      %3334 = vmatpush1.msra.mxu0 0.0
      %3335 = vmatprep.subr.mxu0 0.0
      %3336 = vmatpush1.msra.mxu0 0.0
      %3337 = vmatprep.subr.mxu0 0.0
      %3338 = vmatpush1.msra.mxu0 0.0
      %3339 = vmatprep.subr.mxu0 0.0
      %3340 = vmatpush1.msra.mxu0 0.0
      %3341 = vmatprep.subr.mxu0 0.0
      %3342 = vmatpush1.msra.mxu0 0.0
      %3343 = vmatprep.subr.mxu0 0.0
      %3344 = vmatpush1.msra.mxu0 0.0
      %3345 = vmatprep.subr.mxu0 0.0
      %3346 = vmatpush1.msra.mxu0 0.0
      %3347 = vmatprep.subr.mxu0 0.0
      %3348 = vmatpush1.msra.mxu0 0.0
      %3349 = vmatprep.subr.mxu0 0.0
      %3350 = vmatpush1.msra.mxu0 0.0
      %3351 = vmatprep.subr.mxu0 0.0
      %3352 = vmatpush1.msra.mxu0 0.0
      %3353 = vmatprep.subr.mxu0 0.0
      %3354 = vmatpush1.msra.mxu0 0.0
      %3355 = vmatprep.subr.mxu0 0.0
      %3356 = vmatpush1.msra.mxu0 0.0
      %3357 = vmatprep.subr.mxu0 0.0
      %3358 = vmatpush1.msra.mxu0 0.0
      %3359 = vmatprep.subr.mxu0 0.0
      %3360 = vmatpush1.msra.mxu0 0.0
      %3361 = vmatprep.subr.mxu0 0.0
      %3362 = vmatpush1.msra.mxu0 0.0
      %3363 = vmatprep.subr.mxu0 0.0
      %3364 = vmatpush1.msra.mxu0 0.0
      %3365 = vmatprep.subr.mxu0 0.0
      %3366 = vmatpush1.msra.mxu0 0.0
      %3367 = vmatprep.subr.mxu0 0.0
      %3368 = vmatpush1.msra.mxu0 0.0
      %3369 = vmatprep.subr.mxu0 0.0
      %3370 = vmatpush1.msra.mxu0 0.0
      %3371 = vmatprep.mubr.f32.mxu0 0.0
      %3372 = vmatmul.mubr.f32.gmra.mrb[0].mxu0 %v817
      %v3373 = vpop.f32.mrb[0].mxu0
      %v3374 = vadd.f32 0.0, %v3373
      %v3375 = vpop.f32.mrb[0].mxu0
      %v3376 = vadd.f32 0.0, %v3375
      %3377 = vmatprep.mubr.f32.mxu0 0.0
      %3378 = vmatmul.mubr.f32.gmra.mrb[0].mxu0 %v820
      %v3379 = vpop.f32.mrb[0].mxu0
      %v3380 = vadd.f32 0.0, %v3379
      %v3381 = vpop.f32.mrb[0].mxu0
      %v3382 = vadd.f32 0.0, %v3381
      %3383 = vmatprep.mubr.f32.mxu0 0.0
      %3384 = vmatmul.mubr.f32.gmra.mrb[0].mxu0 %v823
      %v3385 = vpop.f32.mrb[0].mxu0
      %v3386 = vadd.f32 0.0, %v3385
      %v3387 = vpop.f32.mrb[0].mxu0
      %v3388 = vadd.f32 0.0, %v3387
      %3389 = vmatprep.mubr.f32.mxu0 0.0
      %3390 = vmatmul.mubr.f32.gmra.mrb[0].mxu0 %v826
      %v3391 = vpop.f32.mrb[0].mxu0
      %v3392 = vadd.f32 0.0, %v3391
      %v3393 = vpop.f32.mrb[0].mxu0
      %v3394 = vadd.f32 0.0, %v3393
      %3395 = vdwg.mxu0
      %v3396 = vsel %vm828, %v3213, 0
      %v3398 = vsel %vm828, %v3215, 0
      %3400 = vmatprep.subr.mxu0 %v3398
      %3401 = vmatpush1.msra.mxu0 %v3396
      %3402 = vmatprep.subr.mxu0 0.0
      %3403 = vmatpush1.msra.mxu0 0.0
      %3404 = vmatprep.subr.mxu0 0.0
      %3405 = vmatpush1.msra.mxu0 0.0
      %3406 = vmatprep.subr.mxu0 0.0
      %3407 = vmatpush1.msra.mxu0 0.0
      %3408 = vmatprep.subr.mxu0 0.0
      %3409 = vmatpush1.msra.mxu0 0.0
      %3410 = vmatprep.subr.mxu0 0.0
      %3411 = vmatpush1.msra.mxu0 0.0
      %3412 = vmatprep.subr.mxu0 0.0
      %3413 = vmatpush1.msra.mxu0 0.0
      %3414 = vmatprep.subr.mxu0 0.0
      %3415 = vmatpush1.msra.mxu0 0.0
      %3416 = vmatprep.subr.mxu0 0.0
      %3417 = vmatpush1.msra.mxu0 0.0
      %3418 = vmatprep.subr.mxu0 0.0
      %3419 = vmatpush1.msra.mxu0 0.0
      %3420 = vmatprep.subr.mxu0 0.0
      %3421 = vmatpush1.msra.mxu0 0.0
      %3422 = vmatprep.subr.mxu0 0.0
      %3423 = vmatpush1.msra.mxu0 0.0
      %3424 = vmatprep.subr.mxu0 0.0
      %3425 = vmatpush1.msra.mxu0 0.0
      %3426 = vmatprep.subr.mxu0 0.0
      %3427 = vmatpush1.msra.mxu0 0.0
      %3428 = vmatprep.subr.mxu0 0.0
      %3429 = vmatpush1.msra.mxu0 0.0
      %3430 = vmatprep.subr.mxu0 0.0
      %3431 = vmatpush1.msra.mxu0 0.0
      %3432 = vmatprep.subr.mxu0 0.0
      %3433 = vmatpush1.msra.mxu0 0.0
      %3434 = vmatprep.subr.mxu0 0.0
      %3435 = vmatpush1.msra.mxu0 0.0
      %3436 = vmatprep.subr.mxu0 0.0
      %3437 = vmatpush1.msra.mxu0 0.0
      %3438 = vmatprep.subr.mxu0 0.0
      %3439 = vmatpush1.msra.mxu0 0.0
      %3440 = vmatprep.subr.mxu0 0.0
      %3441 = vmatpush1.msra.mxu0 0.0
      %3442 = vmatprep.subr.mxu0 0.0
      %3443 = vmatpush1.msra.mxu0 0.0
      %3444 = vmatprep.subr.mxu0 0.0
      %3445 = vmatpush1.msra.mxu0 0.0
      %3446 = vmatprep.subr.mxu0 0.0
      %3447 = vmatpush1.msra.mxu0 0.0
      %3448 = vmatprep.subr.mxu0 0.0
      %3449 = vmatpush1.msra.mxu0 0.0
      %3450 = vmatprep.subr.mxu0 0.0
      %3451 = vmatpush1.msra.mxu0 0.0
      %3452 = vmatprep.subr.mxu0 0.0
      %3453 = vmatpush1.msra.mxu0 0.0
      %3454 = vmatprep.subr.mxu0 0.0
      %3455 = vmatpush1.msra.mxu0 0.0
      %3456 = vmatprep.subr.mxu0 0.0
      %3457 = vmatpush1.msra.mxu0 0.0
      %3458 = vmatprep.subr.mxu0 0.0
      %3459 = vmatpush1.msra.mxu0 0.0
      %3460 = vmatprep.subr.mxu0 0.0
      %3461 = vmatpush1.msra.mxu0 0.0
      %3462 = vmatprep.subr.mxu0 0.0
      %3463 = vmatpush1.msra.mxu0 0.0
      %3464 = vmatprep.mubr.f32.mxu0 0.0
      %3465 = vmatmul.mubr.f32.gmra.mrb[0].mxu0 %v925
      %v3466 = vpop.f32.mrb[0].mxu0
      %v3467 = vadd.f32 %v3374, %v3466
      %v3468 = vpop.f32.mrb[0].mxu0
      %v3469 = vadd.f32 %v3376, %v3468
      %3470 = vmatprep.mubr.f32.mxu0 0.0
      %3471 = vmatmul.mubr.f32.gmra.mrb[0].mxu0 %v928
      %v3472 = vpop.f32.mrb[0].mxu0
      %v3473 = vadd.f32 %v3380, %v3472
      %v3474 = vpop.f32.mrb[0].mxu0
      %v3475 = vadd.f32 %v3382, %v3474
      %3476 = vmatprep.mubr.f32.mxu0 0.0
      %3477 = vmatmul.mubr.f32.gmra.mrb[0].mxu0 %v931
      %v3478 = vpop.f32.mrb[0].mxu0
      %v3479 = vadd.f32 %v3386, %v3478
      %v3480 = vpop.f32.mrb[0].mxu0
      %v3481 = vadd.f32 %v3388, %v3480
      %3482 = vmatprep.mubr.f32.mxu0 0.0
      %3483 = vmatmul.mubr.f32.gmra.mrb[0].mxu0 %v934
      %v3484 = vpop.f32.mrb[0].mxu0
      %v3485 = vadd.f32 %v3392, %v3484
      %v3486 = vpop.f32.mrb[0].mxu0
      %v3487 = vadd.f32 %v3394, %v3486
      %3488 = vdwg.mxu0
      %v3490 = vsel %vm828, %v3295, 0
      %v3493 = vsel %vm828, %v3297, 0
      %3495 = vmatprep.subr.mxu0 %v3493
      %3496 = vmatpush1.msra.mxu0 %v3490
      %3497 = vmatprep.subr.mxu0 0.0
      %3498 = vmatpush1.msra.mxu0 0.0
      %3499 = vmatprep.subr.mxu0 0.0
      %3500 = vmatpush1.msra.mxu0 0.0
      %3501 = vmatprep.subr.mxu0 0.0
      %3502 = vmatpush1.msra.mxu0 0.0
      %3503 = vmatprep.subr.mxu0 0.0
      %3504 = vmatpush1.msra.mxu0 0.0
      %3505 = vmatprep.subr.mxu0 0.0
      %3506 = vmatpush1.msra.mxu0 0.0
      %3507 = vmatprep.subr.mxu0 0.0
      %3508 = vmatpush1.msra.mxu0 0.0
      %3509 = vmatprep.subr.mxu0 0.0
      %3510 = vmatpush1.msra.mxu0 0.0
      %3511 = vmatprep.subr.mxu0 0.0
      %3512 = vmatpush1.msra.mxu0 0.0
      %3513 = vmatprep.subr.mxu0 0.0
      %3514 = vmatpush1.msra.mxu0 0.0
      %3515 = vmatprep.subr.mxu0 0.0
      %3516 = vmatpush1.msra.mxu0 0.0
      %3517 = vmatprep.subr.mxu0 0.0
      %3518 = vmatpush1.msra.mxu0 0.0
      %3519 = vmatprep.subr.mxu0 0.0
      %3520 = vmatpush1.msra.mxu0 0.0
      %3521 = vmatprep.subr.mxu0 0.0
      %3522 = vmatpush1.msra.mxu0 0.0
      %3523 = vmatprep.subr.mxu0 0.0
      %3524 = vmatpush1.msra.mxu0 0.0
      %3525 = vmatprep.subr.mxu0 0.0
      %3526 = vmatpush1.msra.mxu0 0.0
      %3527 = vmatprep.subr.mxu0 0.0
      %3528 = vmatpush1.msra.mxu0 0.0
      %3529 = vmatprep.subr.mxu0 0.0
      %3530 = vmatpush1.msra.mxu0 0.0
      %3531 = vmatprep.subr.mxu0 0.0
      %3532 = vmatpush1.msra.mxu0 0.0
      %3533 = vmatprep.subr.mxu0 0.0
      %3534 = vmatpush1.msra.mxu0 0.0
      %3535 = vmatprep.subr.mxu0 0.0
      %3536 = vmatpush1.msra.mxu0 0.0
      %3537 = vmatprep.subr.mxu0 0.0
      %3538 = vmatpush1.msra.mxu0 0.0
      %3539 = vmatprep.subr.mxu0 0.0
      %3540 = vmatpush1.msra.mxu0 0.0
      %3541 = vmatprep.subr.mxu0 0.0
      %3542 = vmatpush1.msra.mxu0 0.0
      %3543 = vmatprep.subr.mxu0 0.0
      %3544 = vmatpush1.msra.mxu0 0.0
      %3545 = vmatprep.subr.mxu0 0.0
      %3546 = vmatpush1.msra.mxu0 0.0
      %3547 = vmatprep.subr.mxu0 0.0
      %3548 = vmatpush1.msra.mxu0 0.0
      %3549 = vmatprep.subr.mxu0 0.0
      %3550 = vmatpush1.msra.mxu0 0.0
      %3551 = vmatprep.subr.mxu0 0.0
      %3552 = vmatpush1.msra.mxu0 0.0
      %3553 = vmatprep.subr.mxu0 0.0
      %3554 = vmatpush1.msra.mxu0 0.0
      %3555 = vmatprep.subr.mxu0 0.0
      %3556 = vmatpush1.msra.mxu0 0.0
      %3557 = vmatprep.subr.mxu0 0.0
      %3558 = vmatpush1.msra.mxu0 0.0
      %3559 = vmatprep.mubr.f32.mxu0 0.0
      %3560 = vmatmul.mubr.f32.gmra.mrb[0].mxu0 %v1030
      %v3561 = vpop.f32.mrb[0].mxu0
      %v3562 = vadd.f32 0.0, %v3561
      %v3563 = vpop.f32.mrb[0].mxu0
      %v3564 = vadd.f32 0.0, %v3563
      %3565 = vmatprep.mubr.f32.mxu0 0.0
      %3566 = vmatmul.mubr.f32.gmra.mrb[0].mxu0 %v1033
      %v3567 = vpop.f32.mrb[0].mxu0
      %v3568 = vadd.f32 0.0, %v3567
      %v3569 = vpop.f32.mrb[0].mxu0
      %v3570 = vadd.f32 0.0, %v3569
      %3571 = vmatprep.mubr.f32.mxu0 0.0
      %3572 = vmatmul.mubr.f32.gmra.mrb[0].mxu0 %v1036
      %v3573 = vpop.f32.mrb[0].mxu0
      %v3574 = vadd.f32 0.0, %v3573
      %v3575 = vpop.f32.mrb[0].mxu0
      %v3576 = vadd.f32 0.0, %v3575
      %3577 = vmatprep.mubr.f32.mxu0 0.0
      %3578 = vmatmul.mubr.f32.gmra.mrb[0].mxu0 %v1039
      %v3579 = vpop.f32.mrb[0].mxu0
      %v3580 = vadd.f32 0.0, %v3579
      %v3581 = vpop.f32.mrb[0].mxu0
      %v3582 = vadd.f32 0.0, %v3581
      %3583 = vdwg.mxu0
      %v3584 = vadd.f32 %v3467, %v3562
      %v3585 = vadd.f32 %v3469, %v3564
      %v3586 = vadd.f32 %v3473, %v3568
      %v3587 = vadd.f32 %v3475, %v3570
      %v3588 = vadd.f32 %v3479, %v3574
      %v3589 = vadd.f32 %v3481, %v3576
      %v3590 = vadd.f32 %v3485, %v3580
      %v3591 = vadd.f32 %v3487, %v3582
      %v3592 = vadd.f32 %v3584, %v1147
      %v3593 = vadd.f32 %v3585, %v1147
      %v3594 = vadd.f32 %v3586, %v1152
      %v3595 = vadd.f32 %v3587, %v1152
      %v3596 = vadd.f32 %v3588, %v1157
      %v3597 = vadd.f32 %v3589, %v1157
      %v3598 = vadd.f32 %v3590, %v1162
      %v3599 = vadd.f32 %v3591, %v1162
      %v3600 = vmax.f32 %v3592, 0.0
      %v3601 = vmax.f32 %v3593, 0.0
      %v3602 = vmax.f32 %v3594, 0.0
      %v3603 = vmax.f32 %v3595, 0.0
      %v3604 = vmax.f32 %v3596, 0.0
      %v3605 = vmax.f32 %v3597, 0.0
      %v3606 = vmax.f32 %v3598, 0.0
      %v3607 = vmax.f32 %v3599, 0.0
      %3608 = vmatprep.subr.mxu0 %v3601
      %3609 = vmatpush1.msra.mxu0 %v3600
      %3610 = vmatprep.subr.mxu0 %v3603
      %3611 = vmatpush1.msra.mxu0 %v3602
      %3612 = vmatprep.subr.mxu0 %v3605
      %3613 = vmatpush1.msra.mxu0 %v3604
      %3614 = vmatprep.subr.mxu0 %v3607
      %3615 = vmatpush1.msra.mxu0 %v3606
      %3616 = vmatprep.subr.mxu0 0.0
      %3617 = vmatpush1.msra.mxu0 0.0
      %3618 = vmatprep.subr.mxu0 0.0
      %3619 = vmatpush1.msra.mxu0 0.0
      %3620 = vmatprep.subr.mxu0 0.0
      %3621 = vmatpush1.msra.mxu0 0.0
      %3622 = vmatprep.subr.mxu0 0.0
      %3623 = vmatpush1.msra.mxu0 0.0
      %3624 = vmatprep.subr.mxu0 0.0
      %3625 = vmatpush1.msra.mxu0 0.0
      %3626 = vmatprep.subr.mxu0 0.0
      %3627 = vmatpush1.msra.mxu0 0.0
      %3628 = vmatprep.subr.mxu0 0.0
      %3629 = vmatpush1.msra.mxu0 0.0
      %3630 = vmatprep.subr.mxu0 0.0
      %3631 = vmatpush1.msra.mxu0 0.0
      %3632 = vmatprep.subr.mxu0 0.0
      %3633 = vmatpush1.msra.mxu0 0.0
      %3634 = vmatprep.subr.mxu0 0.0
      %3635 = vmatpush1.msra.mxu0 0.0
      %3636 = vmatprep.subr.mxu0 0.0
      %3637 = vmatpush1.msra.mxu0 0.0
      %3638 = vmatprep.subr.mxu0 0.0
      %3639 = vmatpush1.msra.mxu0 0.0
      %3640 = vmatprep.subr.mxu0 0.0
      %3641 = vmatpush1.msra.mxu0 0.0
      %3642 = vmatprep.subr.mxu0 0.0
      %3643 = vmatpush1.msra.mxu0 0.0
      %3644 = vmatprep.subr.mxu0 0.0
      %3645 = vmatpush1.msra.mxu0 0.0
      %3646 = vmatprep.subr.mxu0 0.0
      %3647 = vmatpush1.msra.mxu0 0.0
      %3648 = vmatprep.subr.mxu0 0.0
      %3649 = vmatpush1.msra.mxu0 0.0
      %3650 = vmatprep.subr.mxu0 0.0
      %3651 = vmatpush1.msra.mxu0 0.0
      %3652 = vmatprep.subr.mxu0 0.0
      %3653 = vmatpush1.msra.mxu0 0.0
      %3654 = vmatprep.subr.mxu0 0.0
      %3655 = vmatpush1.msra.mxu0 0.0
      %3656 = vmatprep.subr.mxu0 0.0
      %3657 = vmatpush1.msra.mxu0 0.0
      %3658 = vmatprep.subr.mxu0 0.0
      %3659 = vmatpush1.msra.mxu0 0.0
      %3660 = vmatprep.subr.mxu0 0.0
      %3661 = vmatpush1.msra.mxu0 0.0
      %3662 = vmatprep.subr.mxu0 0.0
      %3663 = vmatpush1.msra.mxu0 0.0
      %3664 = vmatprep.subr.mxu0 0.0
      %3665 = vmatpush1.msra.mxu0 0.0
      %3666 = vmatprep.subr.mxu0 0.0
      %3667 = vmatpush1.msra.mxu0 0.0
      %3668 = vmatprep.subr.mxu0 0.0
      %3669 = vmatpush1.msra.mxu0 0.0
      %3670 = vmatprep.subr.mxu0 0.0
      %3671 = vmatpush1.msra.mxu0 0.0
      %3672 = vmatprep.mubr.f32.mxu0 0.0
      %3673 = vmatmul.mubr.f32.gmra.mrb[0].mxu0 %v1182
      %v3674 = vpop.f32.mrb[0].mxu0
      %v3675 = vadd.f32 0.0, %v3674
      %v3676 = vpop.f32.mrb[0].mxu0
      %v3677 = vadd.f32 0.0, %v3676
      %3678 = vdwg.mxu0
      %s3679 = scalar_lea.vmem %s320, 5
      %v3680 = vld [vmem:[%s3679] ss:$8 sm:$0x3]
      %v3682 = vlaneseq
      %v3683 = vshrl.u32 %v3682, 7
      %v3684 = vsub.s32 0, %v3683
      %v3685 = vrot.slane %v3680, %v3684
      %v3686 = vlaneseq
      %v3687 = vshrl.u32 %v3686, 7
      %v3688 = vsub.s32 1, %v3687
      %v3689 = vrot.slane %v3680, %v3688
      %v3692 = vmul.f32 %v3675, %v3685
      %v3693 = vmul.f32 %v3677, %v3689
      %v3696 = vcombine.low %v3692, %v3693
      %v3698 = vadd.f32 %v3213, %v3696
      %v3700 = vcombine.high %v3698, %v3698
      %v3702 = vpack.c.bf16 %v3698, %v3698
      %v3703 = vpack.c.bf16 %v3700, %v3700
      %3704 = vmatprep.subr.bf16.mxu0 %v606
      %3705 = vmatpush1.bf16.msra.mxu0 %v605
      %3706 = vmatprep.subr.bf16.mxu0 %v610
      %3707 = vmatpush1.bf16.msra.mxu0 %v609
      %3708 = vmatprep.subr.bf16.mxu0 %v614
      %3709 = vmatpush1.bf16.msra.mxu0 %v613
      %3710 = vmatprep.subr.bf16.mxu0 %v618
      %3711 = vmatpush1.bf16.msra.mxu0 %v617
      %3712 = vmatprep.subr.bf16.mxu0 %v622
      %3713 = vmatpush1.bf16.msra.mxu0 %v621
      %3714 = vmatprep.subr.bf16.mxu0 %v626
      %3715 = vmatpush1.bf16.msra.mxu0 %v625
      %3716 = vmatprep.subr.bf16.mxu0 %v630
      %3717 = vmatpush1.bf16.msra.mxu0 %v629
      %3718 = vmatprep.subr.bf16.mxu0 %v634
      %3719 = vmatpush1.bf16.msra.mxu0 %v633
      %3720 = vmatprep.subr.bf16.mxu0 %v638
      %3721 = vmatpush1.bf16.msra.mxu0 %v637
      %3722 = vmatprep.subr.bf16.mxu0 %v642
      %3723 = vmatpush1.bf16.msra.mxu0 %v641
      %3724 = vmatprep.subr.bf16.mxu0 %v646
      %3725 = vmatpush1.bf16.msra.mxu0 %v645
      %3726 = vmatprep.subr.bf16.mxu0 %v650
      %3727 = vmatpush1.bf16.msra.mxu0 %v649
      %3728 = vmatprep.subr.bf16.mxu0 %v654
      %3729 = vmatpush1.bf16.msra.mxu0 %v653
      %3730 = vmatprep.subr.bf16.mxu0 %v658
      %3731 = vmatpush1.bf16.msra.mxu0 %v657
      %3732 = vmatprep.subr.bf16.mxu0 %v662
      %3733 = vmatpush1.bf16.msra.mxu0 %v661
      %3734 = vmatprep.subr.bf16.mxu0 %v666
      %3735 = vmatpush1.bf16.msra.mxu0 %v665
      %3736 = vmatprep.mubr.bf16.mxu0 %v3703
      %3737 = vmatmul.mubr.bf16.gmra.mrb[0].mxu0 %v3702
      %v3738 = vpop.f32.mrb[0].mxu0
      %v3739 = vadd.f32 0.0, %v3738
      %v3740 = vpop.f32.mrb[0].mxu0
      %v3741 = vadd.f32 0.0, %v3740
      %v3742 = vpop.f32.mrb[0].mxu0
      %v3743 = vpop.f32.mrb[0].mxu0
      %3744 = vdwg.mxu0
      %3745 = vmatprep.subr.bf16.mxu0 %v608
      %3746 = vmatpush1.bf16.msra.mxu0 %v607
      %3747 = vmatprep.subr.bf16.mxu0 %v612
      %3748 = vmatpush1.bf16.msra.mxu0 %v611
      %3749 = vmatprep.subr.bf16.mxu0 %v616
      %3750 = vmatpush1.bf16.msra.mxu0 %v615
      %3751 = vmatprep.subr.bf16.mxu0 %v620
      %3752 = vmatpush1.bf16.msra.mxu0 %v619
      %3753 = vmatprep.subr.bf16.mxu0 %v624
      %3754 = vmatpush1.bf16.msra.mxu0 %v623
      %3755 = vmatprep.subr.bf16.mxu0 %v628
      %3756 = vmatpush1.bf16.msra.mxu0 %v627
      %3757 = vmatprep.subr.bf16.mxu0 %v632
      %3758 = vmatpush1.bf16.msra.mxu0 %v631
      %3759 = vmatprep.subr.bf16.mxu0 %v636
      %3760 = vmatpush1.bf16.msra.mxu0 %v635
      %3761 = vmatprep.subr.bf16.mxu0 %v640
      %3762 = vmatpush1.bf16.msra.mxu0 %v639
      %3763 = vmatprep.subr.bf16.mxu0 %v644
      %3764 = vmatpush1.bf16.msra.mxu0 %v643
      %3765 = vmatprep.subr.bf16.mxu0 %v648
      %3766 = vmatpush1.bf16.msra.mxu0 %v647
      %3767 = vmatprep.subr.bf16.mxu0 %v652
      %3768 = vmatpush1.bf16.msra.mxu0 %v651
      %3769 = vmatprep.subr.bf16.mxu0 %v656
      %3770 = vmatpush1.bf16.msra.mxu0 %v655
      %3771 = vmatprep.subr.bf16.mxu0 %v660
      %3772 = vmatpush1.bf16.msra.mxu0 %v659
      %3773 = vmatprep.subr.bf16.mxu0 %v664
      %3774 = vmatpush1.bf16.msra.mxu0 %v663
      %3775 = vmatprep.subr.bf16.mxu0 %v668
      %3776 = vmatpush1.bf16.msra.mxu0 %v667
      %3777 = vmatprep.mubr.bf16.mxu0 %v3703
      %3778 = vmatmul.mubr.bf16.gmra.mrb[0].mxu0 %v3702
      %v3779 = vpop.f32.mrb[0].mxu0
      %v3780 = vadd.f32 0.0, %v3779
      %v3781 = vpop.f32.mrb[0].mxu0
      %v3782 = vadd.f32 0.0, %v3781
      %v3783 = vpop.f32.mrb[0].mxu0
      %v3784 = vpop.f32.mrb[0].mxu0
      %3785 = vdwg.mxu0
      %v3787 = vsel %vm828, %v3739, 0
      %v3790 = vsel %vm828, %v3741, 0
      %3792 = vmatprep.subr.mxu0 %v3790
      %3793 = vmatpush1.msra.mxu0 %v3787
      %3794 = vmatprep.subr.mxu0 0.0
      %3795 = vmatpush1.msra.mxu0 0.0
      %3796 = vmatprep.subr.mxu0 0.0
      %3797 = vmatpush1.msra.mxu0 0.0
      %3798 = vmatprep.subr.mxu0 0.0
      %3799 = vmatpush1.msra.mxu0 0.0
      %3800 = vmatprep.subr.mxu0 0.0
      %3801 = vmatpush1.msra.mxu0 0.0
      %3802 = vmatprep.subr.mxu0 0.0
      %3803 = vmatpush1.msra.mxu0 0.0
      %3804 = vmatprep.subr.mxu0 0.0
      %3805 = vmatpush1.msra.mxu0 0.0
      %3806 = vmatprep.subr.mxu0 0.0
      %3807 = vmatpush1.msra.mxu0 0.0
      %3808 = vmatprep.subr.mxu0 0.0
      %3809 = vmatpush1.msra.mxu0 0.0
      %3810 = vmatprep.subr.mxu0 0.0
      %3811 = vmatpush1.msra.mxu0 0.0
      %3812 = vmatprep.subr.mxu0 0.0
      %3813 = vmatpush1.msra.mxu0 0.0
      %3814 = vmatprep.subr.mxu0 0.0
      %3815 = vmatpush1.msra.mxu0 0.0
      %3816 = vmatprep.subr.mxu0 0.0
      %3817 = vmatpush1.msra.mxu0 0.0
      %3818 = vmatprep.subr.mxu0 0.0
      %3819 = vmatpush1.msra.mxu0 0.0
      %3820 = vmatprep.subr.mxu0 0.0
      %3821 = vmatpush1.msra.mxu0 0.0
      %3822 = vmatprep.subr.mxu0 0.0
      %3823 = vmatpush1.msra.mxu0 0.0
      %3824 = vmatprep.subr.mxu0 0.0
      %3825 = vmatpush1.msra.mxu0 0.0
      %3826 = vmatprep.subr.mxu0 0.0
      %3827 = vmatpush1.msra.mxu0 0.0
      %3828 = vmatprep.subr.mxu0 0.0
      %3829 = vmatpush1.msra.mxu0 0.0
      %3830 = vmatprep.subr.mxu0 0.0
      %3831 = vmatpush1.msra.mxu0 0.0
      %3832 = vmatprep.subr.mxu0 0.0
      %3833 = vmatpush1.msra.mxu0 0.0
      %3834 = vmatprep.subr.mxu0 0.0
      %3835 = vmatpush1.msra.mxu0 0.0
      %3836 = vmatprep.subr.mxu0 0.0
      %3837 = vmatpush1.msra.mxu0 0.0
      %3838 = vmatprep.subr.mxu0 0.0
      %3839 = vmatpush1.msra.mxu0 0.0
      %3840 = vmatprep.subr.mxu0 0.0
      %3841 = vmatpush1.msra.mxu0 0.0
      %3842 = vmatprep.subr.mxu0 0.0
      %3843 = vmatpush1.msra.mxu0 0.0
      %3844 = vmatprep.subr.mxu0 0.0
      %3845 = vmatpush1.msra.mxu0 0.0
      %3846 = vmatprep.subr.mxu0 0.0
      %3847 = vmatpush1.msra.mxu0 0.0
      %3848 = vmatprep.subr.mxu0 0.0
      %3849 = vmatpush1.msra.mxu0 0.0
      %3850 = vmatprep.subr.mxu0 0.0
      %3851 = vmatpush1.msra.mxu0 0.0
      %3852 = vmatprep.subr.mxu0 0.0
      %3853 = vmatpush1.msra.mxu0 0.0
      %3854 = vmatprep.subr.mxu0 0.0
      %3855 = vmatpush1.msra.mxu0 0.0
      %3856 = vmatprep.mubr.f32.mxu0 0.0
      %3857 = vmatmul.mubr.f32.gmra.mrb[0].mxu0 %v817
      %v3858 = vpop.f32.mrb[0].mxu0
      %v3859 = vadd.f32 0.0, %v3858
      %v3860 = vpop.f32.mrb[0].mxu0
      %v3861 = vadd.f32 0.0, %v3860
      %3862 = vmatprep.mubr.f32.mxu0 0.0
      %3863 = vmatmul.mubr.f32.gmra.mrb[0].mxu0 %v820
      %v3864 = vpop.f32.mrb[0].mxu0
      %v3865 = vadd.f32 0.0, %v3864
      %v3866 = vpop.f32.mrb[0].mxu0
      %v3867 = vadd.f32 0.0, %v3866
      %3868 = vmatprep.mubr.f32.mxu0 0.0
      %3869 = vmatmul.mubr.f32.gmra.mrb[0].mxu0 %v823
      %v3870 = vpop.f32.mrb[0].mxu0
      %v3871 = vadd.f32 0.0, %v3870
      %v3872 = vpop.f32.mrb[0].mxu0
      %v3873 = vadd.f32 0.0, %v3872
      %3874 = vmatprep.mubr.f32.mxu0 0.0
      %3875 = vmatmul.mubr.f32.gmra.mrb[0].mxu0 %v826
      %v3876 = vpop.f32.mrb[0].mxu0
      %v3877 = vadd.f32 0.0, %v3876
      %v3878 = vpop.f32.mrb[0].mxu0
      %v3879 = vadd.f32 0.0, %v3878
      %3880 = vdwg.mxu0
      %v3881 = vsel %vm828, %v3698, 0
      %v3883 = vsel %vm828, %v3700, 0
      %3885 = vmatprep.subr.mxu0 %v3883
      %3886 = vmatpush1.msra.mxu0 %v3881
      %3887 = vmatprep.subr.mxu0 0.0
      %3888 = vmatpush1.msra.mxu0 0.0
      %3889 = vmatprep.subr.mxu0 0.0
      %3890 = vmatpush1.msra.mxu0 0.0
      %3891 = vmatprep.subr.mxu0 0.0
      %3892 = vmatpush1.msra.mxu0 0.0
      %3893 = vmatprep.subr.mxu0 0.0
      %3894 = vmatpush1.msra.mxu0 0.0
      %3895 = vmatprep.subr.mxu0 0.0
      %3896 = vmatpush1.msra.mxu0 0.0
      %3897 = vmatprep.subr.mxu0 0.0
      %3898 = vmatpush1.msra.mxu0 0.0
      %3899 = vmatprep.subr.mxu0 0.0
      %3900 = vmatpush1.msra.mxu0 0.0
      %3901 = vmatprep.subr.mxu0 0.0
      %3902 = vmatpush1.msra.mxu0 0.0
      %3903 = vmatprep.subr.mxu0 0.0
      %3904 = vmatpush1.msra.mxu0 0.0
      %3905 = vmatprep.subr.mxu0 0.0
      %3906 = vmatpush1.msra.mxu0 0.0
      %3907 = vmatprep.subr.mxu0 0.0
      %3908 = vmatpush1.msra.mxu0 0.0
      %3909 = vmatprep.subr.mxu0 0.0
      %3910 = vmatpush1.msra.mxu0 0.0
      %3911 = vmatprep.subr.mxu0 0.0
      %3912 = vmatpush1.msra.mxu0 0.0
      %3913 = vmatprep.subr.mxu0 0.0
      %3914 = vmatpush1.msra.mxu0 0.0
      %3915 = vmatprep.subr.mxu0 0.0
      %3916 = vmatpush1.msra.mxu0 0.0
      %3917 = vmatprep.subr.mxu0 0.0
      %3918 = vmatpush1.msra.mxu0 0.0
      %3919 = vmatprep.subr.mxu0 0.0
      %3920 = vmatpush1.msra.mxu0 0.0
      %3921 = vmatprep.subr.mxu0 0.0
      %3922 = vmatpush1.msra.mxu0 0.0
      %3923 = vmatprep.subr.mxu0 0.0
      %3924 = vmatpush1.msra.mxu0 0.0
      %3925 = vmatprep.subr.mxu0 0.0
      %3926 = vmatpush1.msra.mxu0 0.0
      %3927 = vmatprep.subr.mxu0 0.0
      %3928 = vmatpush1.msra.mxu0 0.0
      %3929 = vmatprep.subr.mxu0 0.0
      %3930 = vmatpush1.msra.mxu0 0.0
      %3931 = vmatprep.subr.mxu0 0.0
      %3932 = vmatpush1.msra.mxu0 0.0
      %3933 = vmatprep.subr.mxu0 0.0
      %3934 = vmatpush1.msra.mxu0 0.0
      %3935 = vmatprep.subr.mxu0 0.0
      %3936 = vmatpush1.msra.mxu0 0.0
      %3937 = vmatprep.subr.mxu0 0.0
      %3938 = vmatpush1.msra.mxu0 0.0
      %3939 = vmatprep.subr.mxu0 0.0
      %3940 = vmatpush1.msra.mxu0 0.0
      %3941 = vmatprep.subr.mxu0 0.0
      %3942 = vmatpush1.msra.mxu0 0.0
      %3943 = vmatprep.subr.mxu0 0.0
      %3944 = vmatpush1.msra.mxu0 0.0
      %3945 = vmatprep.subr.mxu0 0.0
      %3946 = vmatpush1.msra.mxu0 0.0
      %3947 = vmatprep.subr.mxu0 0.0
      %3948 = vmatpush1.msra.mxu0 0.0
      %3949 = vmatprep.mubr.f32.mxu0 0.0
      %3950 = vmatmul.mubr.f32.gmra.mrb[0].mxu0 %v925
      %v3951 = vpop.f32.mrb[0].mxu0
      %v3952 = vadd.f32 %v3859, %v3951
      %v3953 = vpop.f32.mrb[0].mxu0
      %v3954 = vadd.f32 %v3861, %v3953
      %3955 = vmatprep.mubr.f32.mxu0 0.0
      %3956 = vmatmul.mubr.f32.gmra.mrb[0].mxu0 %v928
      %v3957 = vpop.f32.mrb[0].mxu0
      %v3958 = vadd.f32 %v3865, %v3957
      %v3959 = vpop.f32.mrb[0].mxu0
      %v3960 = vadd.f32 %v3867, %v3959
      %3961 = vmatprep.mubr.f32.mxu0 0.0
      %3962 = vmatmul.mubr.f32.gmra.mrb[0].mxu0 %v931
      %v3963 = vpop.f32.mrb[0].mxu0
      %v3964 = vadd.f32 %v3871, %v3963
      %v3965 = vpop.f32.mrb[0].mxu0
      %v3966 = vadd.f32 %v3873, %v3965
      %3967 = vmatprep.mubr.f32.mxu0 0.0
      %3968 = vmatmul.mubr.f32.gmra.mrb[0].mxu0 %v934
      %v3969 = vpop.f32.mrb[0].mxu0
      %v3970 = vadd.f32 %v3877, %v3969
      %v3971 = vpop.f32.mrb[0].mxu0
      %v3972 = vadd.f32 %v3879, %v3971
      %3973 = vdwg.mxu0
      %v3975 = vsel %vm828, %v3780, 0
      %v3978 = vsel %vm828, %v3782, 0
      %3980 = vmatprep.subr.mxu0 %v3978
      %3981 = vmatpush1.msra.mxu0 %v3975
      %3982 = vmatprep.subr.mxu0 0.0
      %3983 = vmatpush1.msra.mxu0 0.0
      %3984 = vmatprep.subr.mxu0 0.0
      %3985 = vmatpush1.msra.mxu0 0.0
      %3986 = vmatprep.subr.mxu0 0.0
      %3987 = vmatpush1.msra.mxu0 0.0
      %3988 = vmatprep.subr.mxu0 0.0
      %3989 = vmatpush1.msra.mxu0 0.0
      %3990 = vmatprep.subr.mxu0 0.0
      %3991 = vmatpush1.msra.mxu0 0.0
      %3992 = vmatprep.subr.mxu0 0.0
      %3993 = vmatpush1.msra.mxu0 0.0
      %3994 = vmatprep.subr.mxu0 0.0
      %3995 = vmatpush1.msra.mxu0 0.0
      %3996 = vmatprep.subr.mxu0 0.0
      %3997 = vmatpush1.msra.mxu0 0.0
      %3998 = vmatprep.subr.mxu0 0.0
      %3999 = vmatpush1.msra.mxu0 0.0
      %4000 = vmatprep.subr.mxu0 0.0
      %4001 = vmatpush1.msra.mxu0 0.0
      %4002 = vmatprep.subr.mxu0 0.0
      %4003 = vmatpush1.msra.mxu0 0.0
      %4004 = vmatprep.subr.mxu0 0.0
      %4005 = vmatpush1.msra.mxu0 0.0
      %4006 = vmatprep.subr.mxu0 0.0
      %4007 = vmatpush1.msra.mxu0 0.0
      %4008 = vmatprep.subr.mxu0 0.0
      %4009 = vmatpush1.msra.mxu0 0.0
      %4010 = vmatprep.subr.mxu0 0.0
      %4011 = vmatpush1.msra.mxu0 0.0
      %4012 = vmatprep.subr.mxu0 0.0
      %4013 = vmatpush1.msra.mxu0 0.0
      %4014 = vmatprep.subr.mxu0 0.0
      %4015 = vmatpush1.msra.mxu0 0.0
      %4016 = vmatprep.subr.mxu0 0.0
      %4017 = vmatpush1.msra.mxu0 0.0
      %4018 = vmatprep.subr.mxu0 0.0
      %4019 = vmatpush1.msra.mxu0 0.0
      %4020 = vmatprep.subr.mxu0 0.0
      %4021 = vmatpush1.msra.mxu0 0.0
      %4022 = vmatprep.subr.mxu0 0.0
      %4023 = vmatpush1.msra.mxu0 0.0
      %4024 = vmatprep.subr.mxu0 0.0
      %4025 = vmatpush1.msra.mxu0 0.0
      %4026 = vmatprep.subr.mxu0 0.0
      %4027 = vmatpush1.msra.mxu0 0.0
      %4028 = vmatprep.subr.mxu0 0.0
      %4029 = vmatpush1.msra.mxu0 0.0
      %4030 = vmatprep.subr.mxu0 0.0
      %4031 = vmatpush1.msra.mxu0 0.0
      %4032 = vmatprep.subr.mxu0 0.0
      %4033 = vmatpush1.msra.mxu0 0.0
      %4034 = vmatprep.subr.mxu0 0.0
      %4035 = vmatpush1.msra.mxu0 0.0
      %4036 = vmatprep.subr.mxu0 0.0
      %4037 = vmatpush1.msra.mxu0 0.0
      %4038 = vmatprep.subr.mxu0 0.0
      %4039 = vmatpush1.msra.mxu0 0.0
      %4040 = vmatprep.subr.mxu0 0.0
      %4041 = vmatpush1.msra.mxu0 0.0
      %4042 = vmatprep.subr.mxu0 0.0
      %4043 = vmatpush1.msra.mxu0 0.0
      %4044 = vmatprep.mubr.f32.mxu0 0.0
      %4045 = vmatmul.mubr.f32.gmra.mrb[0].mxu0 %v1030
      %v4046 = vpop.f32.mrb[0].mxu0
      %v4047 = vadd.f32 0.0, %v4046
      %v4048 = vpop.f32.mrb[0].mxu0
      %v4049 = vadd.f32 0.0, %v4048
      %4050 = vmatprep.mubr.f32.mxu0 0.0
      %4051 = vmatmul.mubr.f32.gmra.mrb[0].mxu0 %v1033
      %v4052 = vpop.f32.mrb[0].mxu0
      %v4053 = vadd.f32 0.0, %v4052
      %v4054 = vpop.f32.mrb[0].mxu0
      %v4055 = vadd.f32 0.0, %v4054
      %4056 = vmatprep.mubr.f32.mxu0 0.0
      %4057 = vmatmul.mubr.f32.gmra.mrb[0].mxu0 %v1036
      %v4058 = vpop.f32.mrb[0].mxu0
      %v4059 = vadd.f32 0.0, %v4058
      %v4060 = vpop.f32.mrb[0].mxu0
      %v4061 = vadd.f32 0.0, %v4060
      %4062 = vmatprep.mubr.f32.mxu0 0.0
      %4063 = vmatmul.mubr.f32.gmra.mrb[0].mxu0 %v1039
      %v4064 = vpop.f32.mrb[0].mxu0
      %v4065 = vadd.f32 0.0, %v4064
      %v4066 = vpop.f32.mrb[0].mxu0
      %v4067 = vadd.f32 0.0, %v4066
      %4068 = vdwg.mxu0
      %v4069 = vadd.f32 %v3952, %v4047
      %v4070 = vadd.f32 %v3954, %v4049
      %v4071 = vadd.f32 %v3958, %v4053
      %v4072 = vadd.f32 %v3960, %v4055
      %v4073 = vadd.f32 %v3964, %v4059
      %v4074 = vadd.f32 %v3966, %v4061
      %v4075 = vadd.f32 %v3970, %v4065
      %v4076 = vadd.f32 %v3972, %v4067
      %v4077 = vadd.f32 %v4069, %v1147
      %v4078 = vadd.f32 %v4070, %v1147
      %v4079 = vadd.f32 %v4071, %v1152
      %v4080 = vadd.f32 %v4072, %v1152
      %v4081 = vadd.f32 %v4073, %v1157
      %v4082 = vadd.f32 %v4074, %v1157
      %v4083 = vadd.f32 %v4075, %v1162
      %v4084 = vadd.f32 %v4076, %v1162
      %v4085 = vmax.f32 %v4077, 0.0
      %v4086 = vmax.f32 %v4078, 0.0
      %v4087 = vmax.f32 %v4079, 0.0
      %v4088 = vmax.f32 %v4080, 0.0
      %v4089 = vmax.f32 %v4081, 0.0
      %v4090 = vmax.f32 %v4082, 0.0
      %v4091 = vmax.f32 %v4083, 0.0
      %v4092 = vmax.f32 %v4084, 0.0
      %4093 = vmatprep.subr.mxu0 %v4086
      %4094 = vmatpush1.msra.mxu0 %v4085
      %4095 = vmatprep.subr.mxu0 %v4088
      %4096 = vmatpush1.msra.mxu0 %v4087
      %4097 = vmatprep.subr.mxu0 %v4090
      %4098 = vmatpush1.msra.mxu0 %v4089
      %4099 = vmatprep.subr.mxu0 %v4092
      %4100 = vmatpush1.msra.mxu0 %v4091
      %4101 = vmatprep.subr.mxu0 0.0
      %4102 = vmatpush1.msra.mxu0 0.0
      %4103 = vmatprep.subr.mxu0 0.0
      %4104 = vmatpush1.msra.mxu0 0.0
      %4105 = vmatprep.subr.mxu0 0.0
      %4106 = vmatpush1.msra.mxu0 0.0
      %4107 = vmatprep.subr.mxu0 0.0
      %4108 = vmatpush1.msra.mxu0 0.0
      %4109 = vmatprep.subr.mxu0 0.0
      %4110 = vmatpush1.msra.mxu0 0.0
      %4111 = vmatprep.subr.mxu0 0.0
      %4112 = vmatpush1.msra.mxu0 0.0
      %4113 = vmatprep.subr.mxu0 0.0
      %4114 = vmatpush1.msra.mxu0 0.0
      %4115 = vmatprep.subr.mxu0 0.0
      %4116 = vmatpush1.msra.mxu0 0.0
      %4117 = vmatprep.subr.mxu0 0.0
      %4118 = vmatpush1.msra.mxu0 0.0
      %4119 = vmatprep.subr.mxu0 0.0
      %4120 = vmatpush1.msra.mxu0 0.0
      %4121 = vmatprep.subr.mxu0 0.0
      %4122 = vmatpush1.msra.mxu0 0.0
      %4123 = vmatprep.subr.mxu0 0.0
      %4124 = vmatpush1.msra.mxu0 0.0
      %4125 = vmatprep.subr.mxu0 0.0
      %4126 = vmatpush1.msra.mxu0 0.0
      %4127 = vmatprep.subr.mxu0 0.0
      %4128 = vmatpush1.msra.mxu0 0.0
      %4129 = vmatprep.subr.mxu0 0.0
      %4130 = vmatpush1.msra.mxu0 0.0
      %4131 = vmatprep.subr.mxu0 0.0
      %4132 = vmatpush1.msra.mxu0 0.0
      %4133 = vmatprep.subr.mxu0 0.0
      %4134 = vmatpush1.msra.mxu0 0.0
      %4135 = vmatprep.subr.mxu0 0.0
      %4136 = vmatpush1.msra.mxu0 0.0
      %4137 = vmatprep.subr.mxu0 0.0
      %4138 = vmatpush1.msra.mxu0 0.0
      %4139 = vmatprep.subr.mxu0 0.0
      %4140 = vmatpush1.msra.mxu0 0.0
      %4141 = vmatprep.subr.mxu0 0.0
      %4142 = vmatpush1.msra.mxu0 0.0
      %4143 = vmatprep.subr.mxu0 0.0
      %4144 = vmatpush1.msra.mxu0 0.0
      %4145 = vmatprep.subr.mxu0 0.0
      %4146 = vmatpush1.msra.mxu0 0.0
      %4147 = vmatprep.subr.mxu0 0.0
      %4148 = vmatpush1.msra.mxu0 0.0
      %4149 = vmatprep.subr.mxu0 0.0
      %4150 = vmatpush1.msra.mxu0 0.0
      %4151 = vmatprep.subr.mxu0 0.0
      %4152 = vmatpush1.msra.mxu0 0.0
      %4153 = vmatprep.subr.mxu0 0.0
      %4154 = vmatpush1.msra.mxu0 0.0
      %4155 = vmatprep.subr.mxu0 0.0
      %4156 = vmatpush1.msra.mxu0 0.0
      %4157 = vmatprep.mubr.f32.mxu0 0.0
      %4158 = vmatmul.mubr.f32.gmra.mrb[0].mxu0 %v1182
      %v4159 = vpop.f32.mrb[0].mxu0
      %v4160 = vadd.f32 0.0, %v4159
      %v4161 = vpop.f32.mrb[0].mxu0
      %v4162 = vadd.f32 0.0, %v4161
      %4163 = vdwg.mxu0
      %s4164 = scalar_lea.vmem %s320, 6
      %v4165 = vld [vmem:[%s4164] ss:$8 sm:$0x3]
      %v4167 = vlaneseq
      %v4168 = vshrl.u32 %v4167, 7
      %v4169 = vsub.s32 0, %v4168
      %v4170 = vrot.slane %v4165, %v4169
      %v4171 = vlaneseq
      %v4172 = vshrl.u32 %v4171, 7
      %v4173 = vsub.s32 1, %v4172
      %v4174 = vrot.slane %v4165, %v4173
      %v4177 = vmul.f32 %v4160, %v4170
      %v4178 = vmul.f32 %v4162, %v4174
      %v4181 = vcombine.low %v4177, %v4178
      %v4183 = vadd.f32 %v3698, %v4181
      %v4185 = vcombine.high %v4183, %v4183
      %v4187 = vpack.c.bf16 %v4183, %v4183
      %v4188 = vpack.c.bf16 %v4185, %v4185
      %4189 = vmatprep.subr.bf16.mxu0 %v606
      %4190 = vmatpush1.bf16.msra.mxu0 %v605
      %4191 = vmatprep.subr.bf16.mxu0 %v610
      %4192 = vmatpush1.bf16.msra.mxu0 %v609
      %4193 = vmatprep.subr.bf16.mxu0 %v614
      %4194 = vmatpush1.bf16.msra.mxu0 %v613
      %4195 = vmatprep.subr.bf16.mxu0 %v618
      %4196 = vmatpush1.bf16.msra.mxu0 %v617
      %4197 = vmatprep.subr.bf16.mxu0 %v622
      %4198 = vmatpush1.bf16.msra.mxu0 %v621
      %4199 = vmatprep.subr.bf16.mxu0 %v626
      %4200 = vmatpush1.bf16.msra.mxu0 %v625
      %4201 = vmatprep.subr.bf16.mxu0 %v630
      %4202 = vmatpush1.bf16.msra.mxu0 %v629
      %4203 = vmatprep.subr.bf16.mxu0 %v634
      %4204 = vmatpush1.bf16.msra.mxu0 %v633
      %4205 = vmatprep.subr.bf16.mxu0 %v638
      %4206 = vmatpush1.bf16.msra.mxu0 %v637
      %4207 = vmatprep.subr.bf16.mxu0 %v642
      %4208 = vmatpush1.bf16.msra.mxu0 %v641
      %4209 = vmatprep.subr.bf16.mxu0 %v646
      %4210 = vmatpush1.bf16.msra.mxu0 %v645
      %4211 = vmatprep.subr.bf16.mxu0 %v650
      %4212 = vmatpush1.bf16.msra.mxu0 %v649
      %4213 = vmatprep.subr.bf16.mxu0 %v654
      %4214 = vmatpush1.bf16.msra.mxu0 %v653
      %4215 = vmatprep.subr.bf16.mxu0 %v658
      %4216 = vmatpush1.bf16.msra.mxu0 %v657
      %4217 = vmatprep.subr.bf16.mxu0 %v662
      %4218 = vmatpush1.bf16.msra.mxu0 %v661
      %4219 = vmatprep.subr.bf16.mxu0 %v666
      %4220 = vmatpush1.bf16.msra.mxu0 %v665
      %4221 = vmatprep.mubr.bf16.mxu0 %v4188
      %4222 = vmatmul.mubr.bf16.gmra.mrb[0].mxu0 %v4187
      %v4223 = vpop.f32.mrb[0].mxu0
      %v4224 = vadd.f32 0.0, %v4223
      %v4225 = vpop.f32.mrb[0].mxu0
      %v4226 = vadd.f32 0.0, %v4225
      %v4227 = vpop.f32.mrb[0].mxu0
      %v4228 = vpop.f32.mrb[0].mxu0
      %4229 = vdwg.mxu0
      %4230 = vmatprep.subr.bf16.mxu0 %v608
      %4231 = vmatpush1.bf16.msra.mxu0 %v607
      %4232 = vmatprep.subr.bf16.mxu0 %v612
      %4233 = vmatpush1.bf16.msra.mxu0 %v611
      %4234 = vmatprep.subr.bf16.mxu0 %v616
      %4235 = vmatpush1.bf16.msra.mxu0 %v615
      %4236 = vmatprep.subr.bf16.mxu0 %v620
      %4237 = vmatpush1.bf16.msra.mxu0 %v619
      %4238 = vmatprep.subr.bf16.mxu0 %v624
      %4239 = vmatpush1.bf16.msra.mxu0 %v623
      %4240 = vmatprep.subr.bf16.mxu0 %v628
      %4241 = vmatpush1.bf16.msra.mxu0 %v627
      %4242 = vmatprep.subr.bf16.mxu0 %v632
      %4243 = vmatpush1.bf16.msra.mxu0 %v631
      %4244 = vmatprep.subr.bf16.mxu0 %v636
      %4245 = vmatpush1.bf16.msra.mxu0 %v635
      %4246 = vmatprep.subr.bf16.mxu0 %v640
      %4247 = vmatpush1.bf16.msra.mxu0 %v639
      %4248 = vmatprep.subr.bf16.mxu0 %v644
      %4249 = vmatpush1.bf16.msra.mxu0 %v643
      %4250 = vmatprep.subr.bf16.mxu0 %v648
      %4251 = vmatpush1.bf16.msra.mxu0 %v647
      %4252 = vmatprep.subr.bf16.mxu0 %v652
      %4253 = vmatpush1.bf16.msra.mxu0 %v651
      %4254 = vmatprep.subr.bf16.mxu0 %v656
      %4255 = vmatpush1.bf16.msra.mxu0 %v655
      %4256 = vmatprep.subr.bf16.mxu0 %v660
      %4257 = vmatpush1.bf16.msra.mxu0 %v659
      %4258 = vmatprep.subr.bf16.mxu0 %v664
      %4259 = vmatpush1.bf16.msra.mxu0 %v663
      %4260 = vmatprep.subr.bf16.mxu0 %v668
      %4261 = vmatpush1.bf16.msra.mxu0 %v667
      %4262 = vmatprep.mubr.bf16.mxu0 %v4188
      %4263 = vmatmul.mubr.bf16.gmra.mrb[0].mxu0 %v4187
      %v4264 = vpop.f32.mrb[0].mxu0
      %v4265 = vadd.f32 0.0, %v4264
      %v4266 = vpop.f32.mrb[0].mxu0
      %v4267 = vadd.f32 0.0, %v4266
      %v4268 = vpop.f32.mrb[0].mxu0
      %v4269 = vpop.f32.mrb[0].mxu0
      %4270 = vdwg.mxu0
      %v4272 = vsel %vm828, %v4224, 0
      %v4275 = vsel %vm828, %v4226, 0
      %4277 = vmatprep.subr.mxu0 %v4275
      %4278 = vmatpush1.msra.mxu0 %v4272
      %4279 = vmatprep.subr.mxu0 0.0
      %4280 = vmatpush1.msra.mxu0 0.0
      %4281 = vmatprep.subr.mxu0 0.0
      %4282 = vmatpush1.msra.mxu0 0.0
      %4283 = vmatprep.subr.mxu0 0.0
      %4284 = vmatpush1.msra.mxu0 0.0
      %4285 = vmatprep.subr.mxu0 0.0
      %4286 = vmatpush1.msra.mxu0 0.0
      %4287 = vmatprep.subr.mxu0 0.0
      %4288 = vmatpush1.msra.mxu0 0.0
      %4289 = vmatprep.subr.mxu0 0.0
      %4290 = vmatpush1.msra.mxu0 0.0
      %4291 = vmatprep.subr.mxu0 0.0
      %4292 = vmatpush1.msra.mxu0 0.0
      %4293 = vmatprep.subr.mxu0 0.0
      %4294 = vmatpush1.msra.mxu0 0.0
      %4295 = vmatprep.subr.mxu0 0.0
      %4296 = vmatpush1.msra.mxu0 0.0
      %4297 = vmatprep.subr.mxu0 0.0
      %4298 = vmatpush1.msra.mxu0 0.0
      %4299 = vmatprep.subr.mxu0 0.0
      %4300 = vmatpush1.msra.mxu0 0.0
      %4301 = vmatprep.subr.mxu0 0.0
      %4302 = vmatpush1.msra.mxu0 0.0
      %4303 = vmatprep.subr.mxu0 0.0
      %4304 = vmatpush1.msra.mxu0 0.0
      %4305 = vmatprep.subr.mxu0 0.0
      %4306 = vmatpush1.msra.mxu0 0.0
      %4307 = vmatprep.subr.mxu0 0.0
      %4308 = vmatpush1.msra.mxu0 0.0
      %4309 = vmatprep.subr.mxu0 0.0
      %4310 = vmatpush1.msra.mxu0 0.0
      %4311 = vmatprep.subr.mxu0 0.0
      %4312 = vmatpush1.msra.mxu0 0.0
      %4313 = vmatprep.subr.mxu0 0.0
      %4314 = vmatpush1.msra.mxu0 0.0
      %4315 = vmatprep.subr.mxu0 0.0
      %4316 = vmatpush1.msra.mxu0 0.0
      %4317 = vmatprep.subr.mxu0 0.0
      %4318 = vmatpush1.msra.mxu0 0.0
      %4319 = vmatprep.subr.mxu0 0.0
      %4320 = vmatpush1.msra.mxu0 0.0
      %4321 = vmatprep.subr.mxu0 0.0
      %4322 = vmatpush1.msra.mxu0 0.0
      %4323 = vmatprep.subr.mxu0 0.0
      %4324 = vmatpush1.msra.mxu0 0.0
      %4325 = vmatprep.subr.mxu0 0.0
      %4326 = vmatpush1.msra.mxu0 0.0
      %4327 = vmatprep.subr.mxu0 0.0
      %4328 = vmatpush1.msra.mxu0 0.0
      %4329 = vmatprep.subr.mxu0 0.0
      %4330 = vmatpush1.msra.mxu0 0.0
      %4331 = vmatprep.subr.mxu0 0.0
      %4332 = vmatpush1.msra.mxu0 0.0
      %4333 = vmatprep.subr.mxu0 0.0
      %4334 = vmatpush1.msra.mxu0 0.0
      %4335 = vmatprep.subr.mxu0 0.0
      %4336 = vmatpush1.msra.mxu0 0.0
      %4337 = vmatprep.subr.mxu0 0.0
      %4338 = vmatpush1.msra.mxu0 0.0
      %4339 = vmatprep.subr.mxu0 0.0
      %4340 = vmatpush1.msra.mxu0 0.0
      %4341 = vmatprep.mubr.f32.mxu0 0.0
      %4342 = vmatmul.mubr.f32.gmra.mrb[0].mxu0 %v817
      %v4343 = vpop.f32.mrb[0].mxu0
      %v4344 = vadd.f32 0.0, %v4343
      %v4345 = vpop.f32.mrb[0].mxu0
      %v4346 = vadd.f32 0.0, %v4345
      %4347 = vmatprep.mubr.f32.mxu0 0.0
      %4348 = vmatmul.mubr.f32.gmra.mrb[0].mxu0 %v820
      %v4349 = vpop.f32.mrb[0].mxu0
      %v4350 = vadd.f32 0.0, %v4349
      %v4351 = vpop.f32.mrb[0].mxu0
      %v4352 = vadd.f32 0.0, %v4351
      %4353 = vmatprep.mubr.f32.mxu0 0.0
      %4354 = vmatmul.mubr.f32.gmra.mrb[0].mxu0 %v823
      %v4355 = vpop.f32.mrb[0].mxu0
      %v4356 = vadd.f32 0.0, %v4355
      %v4357 = vpop.f32.mrb[0].mxu0
      %v4358 = vadd.f32 0.0, %v4357
      %4359 = vmatprep.mubr.f32.mxu0 0.0
      %4360 = vmatmul.mubr.f32.gmra.mrb[0].mxu0 %v826
      %v4361 = vpop.f32.mrb[0].mxu0
      %v4362 = vadd.f32 0.0, %v4361
      %v4363 = vpop.f32.mrb[0].mxu0
      %v4364 = vadd.f32 0.0, %v4363
      %4365 = vdwg.mxu0
      %v4366 = vsel %vm828, %v4183, 0
      %v4368 = vsel %vm828, %v4185, 0
      %4370 = vmatprep.subr.mxu0 %v4368
      %4371 = vmatpush1.msra.mxu0 %v4366
      %4372 = vmatprep.subr.mxu0 0.0
      %4373 = vmatpush1.msra.mxu0 0.0
      %4374 = vmatprep.subr.mxu0 0.0
      %4375 = vmatpush1.msra.mxu0 0.0
      %4376 = vmatprep.subr.mxu0 0.0
      %4377 = vmatpush1.msra.mxu0 0.0
      %4378 = vmatprep.subr.mxu0 0.0
      %4379 = vmatpush1.msra.mxu0 0.0
      %4380 = vmatprep.subr.mxu0 0.0
      %4381 = vmatpush1.msra.mxu0 0.0
      %4382 = vmatprep.subr.mxu0 0.0
      %4383 = vmatpush1.msra.mxu0 0.0
      %4384 = vmatprep.subr.mxu0 0.0
      %4385 = vmatpush1.msra.mxu0 0.0
      %4386 = vmatprep.subr.mxu0 0.0
      %4387 = vmatpush1.msra.mxu0 0.0
      %4388 = vmatprep.subr.mxu0 0.0
      %4389 = vmatpush1.msra.mxu0 0.0
      %4390 = vmatprep.subr.mxu0 0.0
      %4391 = vmatpush1.msra.mxu0 0.0
      %4392 = vmatprep.subr.mxu0 0.0
      %4393 = vmatpush1.msra.mxu0 0.0
      %4394 = vmatprep.subr.mxu0 0.0
      %4395 = vmatpush1.msra.mxu0 0.0
      %4396 = vmatprep.subr.mxu0 0.0
      %4397 = vmatpush1.msra.mxu0 0.0
      %4398 = vmatprep.subr.mxu0 0.0
      %4399 = vmatpush1.msra.mxu0 0.0
      %4400 = vmatprep.subr.mxu0 0.0
      %4401 = vmatpush1.msra.mxu0 0.0
      %4402 = vmatprep.subr.mxu0 0.0
      %4403 = vmatpush1.msra.mxu0 0.0
      %4404 = vmatprep.subr.mxu0 0.0
      %4405 = vmatpush1.msra.mxu0 0.0
      %4406 = vmatprep.subr.mxu0 0.0
      %4407 = vmatpush1.msra.mxu0 0.0
      %4408 = vmatprep.subr.mxu0 0.0
      %4409 = vmatpush1.msra.mxu0 0.0
      %4410 = vmatprep.subr.mxu0 0.0
      %4411 = vmatpush1.msra.mxu0 0.0
      %4412 = vmatprep.subr.mxu0 0.0
      %4413 = vmatpush1.msra.mxu0 0.0
      %4414 = vmatprep.subr.mxu0 0.0
      %4415 = vmatpush1.msra.mxu0 0.0
      %4416 = vmatprep.subr.mxu0 0.0
      %4417 = vmatpush1.msra.mxu0 0.0
      %4418 = vmatprep.subr.mxu0 0.0
      %4419 = vmatpush1.msra.mxu0 0.0
      %4420 = vmatprep.subr.mxu0 0.0
      %4421 = vmatpush1.msra.mxu0 0.0
      %4422 = vmatprep.subr.mxu0 0.0
      %4423 = vmatpush1.msra.mxu0 0.0
      %4424 = vmatprep.subr.mxu0 0.0
      %4425 = vmatpush1.msra.mxu0 0.0
      %4426 = vmatprep.subr.mxu0 0.0
      %4427 = vmatpush1.msra.mxu0 0.0
      %4428 = vmatprep.subr.mxu0 0.0
      %4429 = vmatpush1.msra.mxu0 0.0
      %4430 = vmatprep.subr.mxu0 0.0
      %4431 = vmatpush1.msra.mxu0 0.0
      %4432 = vmatprep.subr.mxu0 0.0
      %4433 = vmatpush1.msra.mxu0 0.0
      %4434 = vmatprep.mubr.f32.mxu0 0.0
      %4435 = vmatmul.mubr.f32.gmra.mrb[0].mxu0 %v925
      %v4436 = vpop.f32.mrb[0].mxu0
      %v4437 = vadd.f32 %v4344, %v4436
      %v4438 = vpop.f32.mrb[0].mxu0
      %v4439 = vadd.f32 %v4346, %v4438
      %4440 = vmatprep.mubr.f32.mxu0 0.0
      %4441 = vmatmul.mubr.f32.gmra.mrb[0].mxu0 %v928
      %v4442 = vpop.f32.mrb[0].mxu0
      %v4443 = vadd.f32 %v4350, %v4442
      %v4444 = vpop.f32.mrb[0].mxu0
      %v4445 = vadd.f32 %v4352, %v4444
      %4446 = vmatprep.mubr.f32.mxu0 0.0
      %4447 = vmatmul.mubr.f32.gmra.mrb[0].mxu0 %v931
      %v4448 = vpop.f32.mrb[0].mxu0
      %v4449 = vadd.f32 %v4356, %v4448
      %v4450 = vpop.f32.mrb[0].mxu0
      %v4451 = vadd.f32 %v4358, %v4450
      %4452 = vmatprep.mubr.f32.mxu0 0.0
      %4453 = vmatmul.mubr.f32.gmra.mrb[0].mxu0 %v934
      %v4454 = vpop.f32.mrb[0].mxu0
      %v4455 = vadd.f32 %v4362, %v4454
      %v4456 = vpop.f32.mrb[0].mxu0
      %v4457 = vadd.f32 %v4364, %v4456
      %4458 = vdwg.mxu0
      %v4460 = vsel %vm828, %v4265, 0
      %v4463 = vsel %vm828, %v4267, 0
      %4465 = vmatprep.subr.mxu0 %v4463
      %4466 = vmatpush1.msra.mxu0 %v4460
      %4467 = vmatprep.subr.mxu0 0.0
      %4468 = vmatpush1.msra.mxu0 0.0
      %4469 = vmatprep.subr.mxu0 0.0
      %4470 = vmatpush1.msra.mxu0 0.0
      %4471 = vmatprep.subr.mxu0 0.0
      %4472 = vmatpush1.msra.mxu0 0.0
      %4473 = vmatprep.subr.mxu0 0.0
      %4474 = vmatpush1.msra.mxu0 0.0
      %4475 = vmatprep.subr.mxu0 0.0
      %4476 = vmatpush1.msra.mxu0 0.0
      %4477 = vmatprep.subr.mxu0 0.0
      %4478 = vmatpush1.msra.mxu0 0.0
      %4479 = vmatprep.subr.mxu0 0.0
      %4480 = vmatpush1.msra.mxu0 0.0
      %4481 = vmatprep.subr.mxu0 0.0
      %4482 = vmatpush1.msra.mxu0 0.0
      %4483 = vmatprep.subr.mxu0 0.0
      %4484 = vmatpush1.msra.mxu0 0.0
      %4485 = vmatprep.subr.mxu0 0.0
      %4486 = vmatpush1.msra.mxu0 0.0
      %4487 = vmatprep.subr.mxu0 0.0
      %4488 = vmatpush1.msra.mxu0 0.0
      %4489 = vmatprep.subr.mxu0 0.0
      %4490 = vmatpush1.msra.mxu0 0.0
      %4491 = vmatprep.subr.mxu0 0.0
      %4492 = vmatpush1.msra.mxu0 0.0
      %4493 = vmatprep.subr.mxu0 0.0
      %4494 = vmatpush1.msra.mxu0 0.0
      %4495 = vmatprep.subr.mxu0 0.0
      %4496 = vmatpush1.msra.mxu0 0.0
      %4497 = vmatprep.subr.mxu0 0.0
      %4498 = vmatpush1.msra.mxu0 0.0
      %4499 = vmatprep.subr.mxu0 0.0
      %4500 = vmatpush1.msra.mxu0 0.0
      %4501 = vmatprep.subr.mxu0 0.0
      %4502 = vmatpush1.msra.mxu0 0.0
      %4503 = vmatprep.subr.mxu0 0.0
      %4504 = vmatpush1.msra.mxu0 0.0
      %4505 = vmatprep.subr.mxu0 0.0
      %4506 = vmatpush1.msra.mxu0 0.0
      %4507 = vmatprep.subr.mxu0 0.0
      %4508 = vmatpush1.msra.mxu0 0.0
      %4509 = vmatprep.subr.mxu0 0.0
      %4510 = vmatpush1.msra.mxu0 0.0
      %4511 = vmatprep.subr.mxu0 0.0
      %4512 = vmatpush1.msra.mxu0 0.0
      %4513 = vmatprep.subr.mxu0 0.0
      %4514 = vmatpush1.msra.mxu0 0.0
      %4515 = vmatprep.subr.mxu0 0.0
      %4516 = vmatpush1.msra.mxu0 0.0
      %4517 = vmatprep.subr.mxu0 0.0
      %4518 = vmatpush1.msra.mxu0 0.0
      %4519 = vmatprep.subr.mxu0 0.0
      %4520 = vmatpush1.msra.mxu0 0.0
      %4521 = vmatprep.subr.mxu0 0.0
      %4522 = vmatpush1.msra.mxu0 0.0
      %4523 = vmatprep.subr.mxu0 0.0
      %4524 = vmatpush1.msra.mxu0 0.0
      %4525 = vmatprep.subr.mxu0 0.0
      %4526 = vmatpush1.msra.mxu0 0.0
      %4527 = vmatprep.subr.mxu0 0.0
      %4528 = vmatpush1.msra.mxu0 0.0
      %4529 = vmatprep.mubr.f32.mxu0 0.0
      %4530 = vmatmul.mubr.f32.gmra.mrb[0].mxu0 %v1030
      %v4531 = vpop.f32.mrb[0].mxu0
      %v4532 = vadd.f32 0.0, %v4531
      %v4533 = vpop.f32.mrb[0].mxu0
      %v4534 = vadd.f32 0.0, %v4533
      %4535 = vmatprep.mubr.f32.mxu0 0.0
      %4536 = vmatmul.mubr.f32.gmra.mrb[0].mxu0 %v1033
      %v4537 = vpop.f32.mrb[0].mxu0
      %v4538 = vadd.f32 0.0, %v4537
      %v4539 = vpop.f32.mrb[0].mxu0
      %v4540 = vadd.f32 0.0, %v4539
      %4541 = vmatprep.mubr.f32.mxu0 0.0
      %4542 = vmatmul.mubr.f32.gmra.mrb[0].mxu0 %v1036
      %v4543 = vpop.f32.mrb[0].mxu0
      %v4544 = vadd.f32 0.0, %v4543
      %v4545 = vpop.f32.mrb[0].mxu0
      %v4546 = vadd.f32 0.0, %v4545
      %4547 = vmatprep.mubr.f32.mxu0 0.0
      %4548 = vmatmul.mubr.f32.gmra.mrb[0].mxu0 %v1039
      %v4549 = vpop.f32.mrb[0].mxu0
      %v4550 = vadd.f32 0.0, %v4549
      %v4551 = vpop.f32.mrb[0].mxu0
      %v4552 = vadd.f32 0.0, %v4551
      %4553 = vdwg.mxu0
      %v4554 = vadd.f32 %v4437, %v4532
      %v4555 = vadd.f32 %v4439, %v4534
      %v4556 = vadd.f32 %v4443, %v4538
      %v4557 = vadd.f32 %v4445, %v4540
      %v4558 = vadd.f32 %v4449, %v4544
      %v4559 = vadd.f32 %v4451, %v4546
      %v4560 = vadd.f32 %v4455, %v4550
      %v4561 = vadd.f32 %v4457, %v4552
      %v4562 = vadd.f32 %v4554, %v1147
      %v4563 = vadd.f32 %v4555, %v1147
      %v4564 = vadd.f32 %v4556, %v1152
      %v4565 = vadd.f32 %v4557, %v1152
      %v4566 = vadd.f32 %v4558, %v1157
      %v4567 = vadd.f32 %v4559, %v1157
      %v4568 = vadd.f32 %v4560, %v1162
      %v4569 = vadd.f32 %v4561, %v1162
      %v4570 = vmax.f32 %v4562, 0.0
      %v4571 = vmax.f32 %v4563, 0.0
      %v4572 = vmax.f32 %v4564, 0.0
      %v4573 = vmax.f32 %v4565, 0.0
      %v4574 = vmax.f32 %v4566, 0.0
      %v4575 = vmax.f32 %v4567, 0.0
      %v4576 = vmax.f32 %v4568, 0.0
      %v4577 = vmax.f32 %v4569, 0.0
      %4578 = vmatprep.subr.mxu0 %v4571
      %4579 = vmatpush1.msra.mxu0 %v4570
      %4580 = vmatprep.subr.mxu0 %v4573
      %4581 = vmatpush1.msra.mxu0 %v4572
      %4582 = vmatprep.subr.mxu0 %v4575
      %4583 = vmatpush1.msra.mxu0 %v4574
      %4584 = vmatprep.subr.mxu0 %v4577
      %4585 = vmatpush1.msra.mxu0 %v4576
      %4586 = vmatprep.subr.mxu0 0.0
      %4587 = vmatpush1.msra.mxu0 0.0
      %4588 = vmatprep.subr.mxu0 0.0
      %4589 = vmatpush1.msra.mxu0 0.0
      %4590 = vmatprep.subr.mxu0 0.0
      %4591 = vmatpush1.msra.mxu0 0.0
      %4592 = vmatprep.subr.mxu0 0.0
      %4593 = vmatpush1.msra.mxu0 0.0
      %4594 = vmatprep.subr.mxu0 0.0
      %4595 = vmatpush1.msra.mxu0 0.0
      %4596 = vmatprep.subr.mxu0 0.0
      %4597 = vmatpush1.msra.mxu0 0.0
      %4598 = vmatprep.subr.mxu0 0.0
      %4599 = vmatpush1.msra.mxu0 0.0
      %4600 = vmatprep.subr.mxu0 0.0
      %4601 = vmatpush1.msra.mxu0 0.0
      %4602 = vmatprep.subr.mxu0 0.0
      %4603 = vmatpush1.msra.mxu0 0.0
      %4604 = vmatprep.subr.mxu0 0.0
      %4605 = vmatpush1.msra.mxu0 0.0
      %4606 = vmatprep.subr.mxu0 0.0
      %4607 = vmatpush1.msra.mxu0 0.0
      %4608 = vmatprep.subr.mxu0 0.0
      %4609 = vmatpush1.msra.mxu0 0.0
      %4610 = vmatprep.subr.mxu0 0.0
      %4611 = vmatpush1.msra.mxu0 0.0
      %4612 = vmatprep.subr.mxu0 0.0
      %4613 = vmatpush1.msra.mxu0 0.0
      %4614 = vmatprep.subr.mxu0 0.0
      %4615 = vmatpush1.msra.mxu0 0.0
      %4616 = vmatprep.subr.mxu0 0.0
      %4617 = vmatpush1.msra.mxu0 0.0
      %4618 = vmatprep.subr.mxu0 0.0
      %4619 = vmatpush1.msra.mxu0 0.0
      %4620 = vmatprep.subr.mxu0 0.0
      %4621 = vmatpush1.msra.mxu0 0.0
      %4622 = vmatprep.subr.mxu0 0.0
      %4623 = vmatpush1.msra.mxu0 0.0
      %4624 = vmatprep.subr.mxu0 0.0
      %4625 = vmatpush1.msra.mxu0 0.0
      %4626 = vmatprep.subr.mxu0 0.0
      %4627 = vmatpush1.msra.mxu0 0.0
      %4628 = vmatprep.subr.mxu0 0.0
      %4629 = vmatpush1.msra.mxu0 0.0
      %4630 = vmatprep.subr.mxu0 0.0
      %4631 = vmatpush1.msra.mxu0 0.0
      %4632 = vmatprep.subr.mxu0 0.0
      %4633 = vmatpush1.msra.mxu0 0.0
      %4634 = vmatprep.subr.mxu0 0.0
      %4635 = vmatpush1.msra.mxu0 0.0
      %4636 = vmatprep.subr.mxu0 0.0
      %4637 = vmatpush1.msra.mxu0 0.0
      %4638 = vmatprep.subr.mxu0 0.0
      %4639 = vmatpush1.msra.mxu0 0.0
      %4640 = vmatprep.subr.mxu0 0.0
      %4641 = vmatpush1.msra.mxu0 0.0
      %4642 = vmatprep.mubr.f32.mxu0 0.0
      %4643 = vmatmul.mubr.f32.gmra.mrb[0].mxu0 %v1182
      %v4644 = vpop.f32.mrb[0].mxu0
      %v4645 = vadd.f32 0.0, %v4644
      %v4646 = vpop.f32.mrb[0].mxu0
      %v4647 = vadd.f32 0.0, %v4646
      %4648 = vdwg.mxu0
      %s4649 = scalar_lea.vmem %s320, 7
      %v4650 = vld [vmem:[%s4649] ss:$8 sm:$0x3]
      %v4652 = vlaneseq
      %v4653 = vshrl.u32 %v4652, 7
      %v4654 = vsub.s32 0, %v4653
      %v4655 = vrot.slane %v4650, %v4654
      %v4656 = vlaneseq
      %v4657 = vshrl.u32 %v4656, 7
      %v4658 = vsub.s32 1, %v4657
      %v4659 = vrot.slane %v4650, %v4658
      %v4662 = vmul.f32 %v4645, %v4655
      %v4663 = vmul.f32 %v4647, %v4659
      %v4666 = vcombine.low %v4662, %v4663
      %v4668 = vadd.f32 %v4183, %v4666
      %4669 = vst [vmem:[%s325] sm:$0xff] %v4668
      %p4670 = scmp.lt.s32.totalorder %s19, 1
      %s4671 = scalar_select %p4670, %s19, 1
      %s4672 = smul.addr %s4671, 2
      %s4673 = smul.addr %s4672, 4
      %s4674 = scalar_lea.vmem %s8, %s4673
      // Predicated region
      $region53: #{basic_nca_forward.1} parent=51 // pred_check
        %p4675 = pneg %p215
      $region54: #{basic_nca_forward.1} parent=51 // pred_check_branch
        %4677 = sbr.rel (%p4675) target = $region56
      $region55: #{basic_nca_forward.1} parent=51 // pred_region
        _
      $region56: #{basic_nca_forward.1} parent=51 // pred_fallthru
        _
    $region52: #{basic_nca_forward.1} parent=5 // pred_fallthru
      _
    %p4678 = scmp.le.s32.totalorder 2, %s14
    // Predicated region
    $region57: #{basic_nca_forward.1} parent=5 // pred_check
      %p4679 = pneg %p4678
    $region58: #{basic_nca_forward.1} parent=5 // pred_check_branch
      %4681 = sbr.rel (%p4679) target = $region60
    $region59: #{basic_nca_forward.1} parent=5 // pred_region
      %s4682 = ssub.s32 %s14, 2
      // Predicated region
      $region61: #{basic_nca_forward.1} parent=59 // pred_check
        %p4683 = pneg %p221
      $region62: #{basic_nca_forward.1} parent=59 // pred_check_branch
        %4685 = sbr.rel (%p4683) target = $region64
      $region63: #{basic_nca_forward.1} parent=59 // pred_region
        %p4686 = scmp.lt.s32.totalorder %s20, 1
        %s4687 = scalar_select %p4686, %s20, 1
        %s4688 = smul.addr %s4687, 2
        %s4689 = smul.addr %s4688, 4
        %s4690 = scalar_lea.vmem %s8, %s4689
      $region64: #{basic_nca_forward.1} parent=59 // pred_fallthru
        _
    $region60: #{basic_nca_forward.1} parent=5 // pred_fallthru
      _
  $region6: #{basic_nca_forward.1} parent=0 // loop_footer
    %s18 = sadd.s32 1, %s14
  $region7: #{basic_nca_forward.1} parent=0 // loop_footer_branch
    %13 = sbr.rel target = $region3
  $region8: #{basic_nca_forward.1} parent=0 // loop_exit
    _

</llo_original>
